<compile_context>
chip_gen: v6e
topology: v6e:2x2x1
jax: 0.10.0
libtpu: 0.0.40
codegen_flags: <defaults>
</compile_context>

<pallas_src>
import functools
import math

import jax
import jax.numpy as jnp
from jax import lax
from jax.experimental import pallas as pl
from jax.experimental.pallas import tpu as pltpu


def _attention_kernel(x_ref, wq_ref, wk_ref, wv_ref, bqkv_ref, wp_ref, bp_ref,
                      out_ref, k_cache, v_cache, out_acc,
                      *, scale, q_tile, kv_tile, heads_per_group, head_dim):
    # x_ref:    (1, T, C)      full sequence for this batch (resident per b)
    # wq/wk/wv: (HG, C, G*D)   resident grouped projection slabs
    # bqkv_ref: (HG, 3, G*D)   resident grouped q/k/v biases
    # wp_ref:   (HG, G*D, C)   resident grouped c_proj rows
    # bp_ref:   (1, C)         resident c_proj bias
    # out_ref:  (1, tq, C)
    # k_cache/v_cache: (H, T, D) VMEM scratch (per-batch K/V, all heads)
    # out_acc:  (tq, C) f32 VMEM accumulator (resident across the hg axis)
    qi = pl.program_id(1)
    hg = pl.program_id(2)
    n_hg = pl.num_programs(2)

    D = head_dim
    G = heads_per_group
    cdt = x_ref.dtype  # MXU input dtype (bf16 callers -> bf16 matmuls)

    b_grp = bqkv_ref[hg]          # (3, G*D) f32
    bq = b_grp[0:1, :]
    bk = b_grp[1:2, :]
    bv = b_grp[2:3, :]

    # ---- Build this head-group's K/V cache once per batch (first q-tile). ----
    @pl.when(qi == 0)
    def _():
        x_all = x_ref[0]                                            # (T, C)
        k_g = jnp.dot(x_all, wk_ref[hg],
                      preferred_element_type=jnp.float32) + bk      # (T, G*D)
        v_g = jnp.dot(x_all, wv_ref[hg],
                      preferred_element_type=jnp.float32) + bv
        k_g = k_g.astype(k_cache.dtype)
        v_g = v_g.astype(v_cache.dtype)
        for g in range(G):
            h = hg * G + g
            k_cache[h] = k_g[:, g * D:(g + 1) * D]
            v_cache[h] = v_g[:, g * D:(g + 1) * D]

    # ---- Q projection for this (q-tile, head-group): G*D-wide matmul. ----
    q_start = pl.multiple_of(qi * q_tile, q_tile)
    x_q = x_ref[0, pl.ds(q_start, q_tile), :]                       # (tq, C)
    q_grp = jnp.dot(x_q, wq_ref[hg],
                    preferred_element_type=jnp.float32) + bq        # (tq, G*D)
    if scale:
        q_grp = q_grp * (1.0 / math.sqrt(D))   # hoisted score scaling

    # Hoisted static causal mask for the single diagonal KV tile.
    row_l = lax.broadcasted_iota(jnp.int32, (q_tile, kv_tile), 0)
    col_l = lax.broadcasted_iota(jnp.int32, (q_tile, kv_tile), 1)
    tri = col_l <= row_l
    neg_bias = jnp.float32(-10000.0)

    # ---- Per-head online-softmax flash attention over the K/V cache. ----
    ctx_parts = []
    for g in range(G):
        h = hg * G + g
        q_h = q_grp[:, g * D:(g + 1) * D].astype(cdt)               # (tq, D)

        def kv_step(kt, carry, q_h=q_h, h=h):
            m_i, l_i, acc = carry
            k_start = pl.multiple_of(kt * kv_tile, kv_tile)
            k_t = k_cache[h, pl.ds(k_start, kv_tile), :]            # (tkv, D)
            v_t = v_cache[h, pl.ds(k_start, kv_tile), :]
            s = jnp.einsum('qd,kd->qk', q_h, k_t,
                           preferred_element_type=jnp.float32)      # (tq, tkv)
            m_new = jnp.maximum(m_i, jnp.max(s, axis=-1, keepdims=True))
            alpha = jnp.exp(m_i - m_new)
            p = jnp.exp(s - m_new)
            l_new = alpha * l_i + jnp.sum(p, axis=-1, keepdims=True)
            acc_new = alpha * acc + jnp.dot(p.astype(cdt), v_t,
                                            preferred_element_type=jnp.float32)
            return m_new, l_new, acc_new

        m0 = jnp.full((q_tile, 1), -jnp.inf, dtype=jnp.float32)
        l0 = jnp.zeros((q_tile, 1), dtype=jnp.float32)
        a0 = jnp.zeros((q_tile, D), dtype=jnp.float32)

        # (a) fully-unmasked KV tiles strictly below the diagonal (kt < qi).
        m_i, l_i, acc = lax.fori_loop(0, qi, kv_step, (m0, l0, a0))

        # (b) the single diagonal KV tile (kt == qi), with the causal mask.
        k_t = k_cache[h, pl.ds(q_start, kv_tile), :]
        v_t = v_cache[h, pl.ds(q_start, kv_tile), :]
        s = jnp.einsum('qd,kd->qk', q_h, k_t,
                       preferred_element_type=jnp.float32)
        s = jnp.where(tri, s, neg_bias)
        m_new = jnp.maximum(m_i, jnp.max(s, axis=-1, keepdims=True))
        alpha = jnp.exp(m_i - m_new)
        p = jnp.exp(s - m_new)
        l_i = alpha * l_i + jnp.sum(p, axis=-1, keepdims=True)
        acc = alpha * acc + jnp.dot(p.astype(cdt), v_t,
                                    preferred_element_type=jnp.float32)

        ctx_parts.append(acc * pl.reciprocal(l_i, approx=True))     # (tq, D)

    ctx = ctx_parts[0] if G == 1 else jnp.concatenate(ctx_parts, axis=-1)
    ctx = ctx.astype(cdt)                                           # (tq, G*D)

    # ---- Fold this head-group's c_proj rows (contraction depth G*D). ----
    @pl.when(hg == 0)
    def _():
        out_acc[...] = jnp.zeros_like(out_acc)

    out_acc[...] += jnp.dot(ctx, wp_ref[hg],
                            preferred_element_type=jnp.float32)

    @pl.when(hg == n_hg - 1)
    def _():
        out_ref[0] = (out_acc[...] + bp_ref[...]).astype(out_ref.dtype)


def _pick_q_tile(T):
    for t in (128, 256, 64, 32, 16, 8):
        if T % t == 0:
            return t
    return T  # small / irregular T: single full-sequence tile


def _pick_heads_per_group(n_head, head_dim, target_width=256):
    g = max(1, min(n_head, target_width // max(head_dim, 1)))
    while g > 1 and n_head % g != 0:
        g -= 1
    return g


def _pad_block_bytes(shape, itemsize):
    """VMEM footprint of one buffer of `shape`, padded to (8, 128) tiles."""
    *lead_dims, r, c = shape
    lead = 1
    for d in lead_dims:
        lead *= d
    r_pad = -(-r // 8) * 8
    c_pad = -(-c // 128) * 128
    return lead * r_pad * c_pad * itemsize


def gpt2_attention_pallas(x, w_attn, b_attn, w_proj, b_proj, *, n_head,
                          scale=True, q_tile=None, heads_per_group=None,
                          vmem_limit_bytes=None):
    """x: (B, T, C); w_attn: (C, 3C); b_attn: (1, 3C) or (3C,);
    w_proj: (C, C); b_proj: (1, C) or (C,).  Returns (B, T, C)."""
    B, T, C = x.shape
    H = n_head
    assert C % H == 0
    D = C // H

    if q_tile is None:
        q_tile = _pick_q_tile(T)
    assert T % q_tile == 0
    assert q_tile == T or q_tile % 8 == 0
    kv_tile = q_tile                       # causal block logic assumes equal tiles
    n_qt = T // q_tile

    if heads_per_group is None:
        heads_per_group = _pick_heads_per_group(H, D)
    G = heads_per_group
    assert H % G == 0
    HG = H // G
    GD = G * D

    cdt = x.dtype
    w_attn = jnp.asarray(w_attn).astype(cdt)
    w_proj = jnp.asarray(w_proj).astype(cdt)
    b_attn = jnp.asarray(b_attn).reshape(3 * C).astype(jnp.float32)
    b_p = jnp.asarray(b_proj).reshape(1, C).astype(jnp.float32)

    # Host-side one-time weight re-layout into per-head-group, lane-dense slabs.
    w_q = w_attn[:, 0 * C:1 * C].reshape(C, HG, GD).transpose(1, 0, 2)  # (HG,C,GD)
    w_k = w_attn[:, 1 * C:2 * C].reshape(C, HG, GD).transpose(1, 0, 2)
    w_v = w_attn[:, 2 * C:3 * C].reshape(C, HG, GD).transpose(1, 0, 2)
    w_p = w_proj.reshape(HG, GD, C)                                     # (HG,GD,C)
    b_qkv = jnp.stack([b_attn[0 * C:1 * C].reshape(HG, GD),
                       b_attn[1 * C:2 * C].reshape(HG, GD),
                       b_attn[2 * C:3 * C].reshape(HG, GD)], axis=1)    # (HG,3,GD)

    # Explicit VMEM budget (resident weights + pipeline buffers + scratch).
    if vmem_limit_bytes is None:
        isz = jnp.dtype(cdt).itemsize
        est = 0
        est += 2 * _pad_block_bytes((1, T, C), isz)                  # x block
        est += 2 * (3 * _pad_block_bytes((HG, C, GD), isz)
                    + _pad_block_bytes((HG, GD, C), isz)
                    + _pad_block_bytes((HG, 3, GD), 4)
                    + _pad_block_bytes((1, C), 4))                   # weights
        est += 2 * _pad_block_bytes((1, q_tile, C), isz)             # out block
        est += 2 * _pad_block_bytes((H, T, D), isz)                  # K/V caches
        est += _pad_block_bytes((q_tile, C), 4)                      # out_acc
        vmem_limit_bytes = int(min(128 * 1024 * 1024,
                                   max(32 * 1024 * 1024, int(1.5 * est))))

    kernel = functools.partial(_attention_kernel, scale=scale, q_tile=q_tile,
                               kv_tile=kv_tile, heads_per_group=G, head_dim=D)

    resident = lambda b, qi, hg: (0, 0, 0)   # fetched once, stays in VMEM
    grid_spec = pltpu.PrefetchScalarGridSpec(
        num_scalar_prefetch=0,
        grid=(B, n_qt, HG),
        in_specs=[
            pl.BlockSpec((1, T, C), lambda b, qi, hg: (b, 0, 0)),    # x (per batch)
            pl.BlockSpec((HG, C, GD), resident),                     # W_q
            pl.BlockSpec((HG, C, GD), resident),                     # W_k
            pl.BlockSpec((HG, C, GD), resident),                     # W_v
            pl.BlockSpec((HG, 3, GD), resident),                     # b_q/b_k/b_v
            pl.BlockSpec((HG, GD, C), resident),                     # W_proj
            pl.BlockSpec((1, C), lambda b, qi, hg: (0, 0)),          # b_proj
        ],
        out_specs=pl.BlockSpec((1, q_tile, C), lambda b, qi, hg: (b, qi, 0)),
        scratch_shapes=[
            pltpu.VMEM((H, T, D), cdt),        # K cache (per batch)
            pltpu.VMEM((H, T, D), cdt),        # V cache (per batch)
            pltpu.VMEM((q_tile, C), jnp.float32),  # c_proj accumulator
        ],
    )

    return pl.pallas_call(
        kernel,
        out_shape=jax.ShapeDtypeStruct((B, T, C), cdt),
        grid_spec=grid_spec,
        compiler_params=pltpu.CompilerParams(
            dimension_semantics=("parallel", "arbitrary", "arbitrary"),
            vmem_limit_bytes=vmem_limit_bytes),
    )(x, w_q, w_k, w_v, b_qkv, w_p, b_p)


def gpt2_attention_ref(x, w_attn, b_attn, w_proj, b_proj, *, n_head, scale=True):
    """Pure-JAX reference mirroring the PyTorch forward (eval mode)."""
    B, T, C = x.shape
    D = C // n_head
    qkv = x @ w_attn + b_attn.reshape(-1)
    q, k, v = jnp.split(qkv, 3, axis=-1)

    def split_heads(t):
        return t.reshape(B, T, n_head, D).transpose(0, 2, 1, 3)  # (B, H, T, D)

    q, k, v = split_heads(q), split_heads(k), split_heads(v)
    w = jnp.einsum('bhtd,bhsd->bhts', q, k)
    if scale:
        w = w / jnp.sqrt(jnp.float32(D))
    mask = jnp.tril(jnp.ones((T, T), dtype=bool))
    w = jnp.where(mask[None, None], w, jnp.float32(-10000.0))
    w = jax.nn.softmax(w, axis=-1)
    a = jnp.einsum('bhts,bhsd->bhtd', w, v)
    a = a.transpose(0, 2, 1, 3).reshape(B, T, C)
    return a @ w_proj + b_proj.reshape(-1)


def _run_case(key, B, T, C, n_head, atol=1e-3, rtol=5e-3):
    kx, kwa, kwp, kba, kbp = jax.random.split(key, 5)
    x = jax.random.normal(kx, (B, T, C), dtype=jnp.float32)
    w_attn = 0.02 * jax.random.normal(kwa, (C, 3 * C), dtype=jnp.float32)
    b_attn = 0.02 * jax.random.normal(kba, (1, 3 * C), dtype=jnp.float32)
    w_proj = 0.02 * jax.random.normal(kwp, (C, C), dtype=jnp.float32)
    b_proj = 0.02 * jax.random.normal(kbp, (1, C), dtype=jnp.float32)

    out = gpt2_attention_pallas(x, w_attn, b_attn, w_proj, b_proj,
                                n_head=n_head, scale=True)
    out = jax.block_until_ready(out)
    ref = gpt2_attention_ref(x, w_attn, b_attn, w_proj, b_proj,
                             n_head=n_head, scale=True)
    assert out.shape == (B, T, C)
    err = float(jnp.max(jnp.abs(out - ref)))
    assert jnp.allclose(out, ref, atol=atol, rtol=rtol), (
        f"mismatch vs reference (max abs err {err:.3e}) at "
        f"B={B} T={T} C={C} H={n_head}")
    return err


if __name__ == "__main__":
    key = jax.random.PRNGKey(0)
    k1, k2, k3 = jax.random.split(key, 3)

    # Toy GPT-2-like config from the spec (single q tile, D=8, one head-group).
    _run_case(k1, B=2, T=8, C=32, n_head=4)

    # Multi-q-tile flash loop, causal block skipping, grouped projections
    # (D=64, G=4 -> 256-wide matmuls, tq=128).
    _run_case(k2, B=2, T=256, C=256, n_head=4)

    # Multiple head-groups (HG=2): exercises the resident-weight indexing and
    # the c_proj accumulation across the hg grid axis.
    _run_case(k3, B=1, T=256, C=512, n_head=8)

    print("KERNEL_OK")
</pallas_src>

<mosaic_0001>
module attributes {stable_mosaic.version = 11 : i64} {
  func.func @_attention_kernel(%arg0: i32, %arg1: i32, %arg2: i32, %arg3: memref<1x8x32xf32, #tpu.memory_space<vmem>>, %arg4: memref<1x32x32xf32, #tpu.memory_space<vmem>>, %arg5: memref<1x32x32xf32, #tpu.memory_space<vmem>>, %arg6: memref<1x32x32xf32, #tpu.memory_space<vmem>>, %arg7: memref<1x3x32xf32, #tpu.memory_space<vmem>>, %arg8: memref<1x32x32xf32, #tpu.memory_space<vmem>>, %arg9: memref<1x32xf32, #tpu.memory_space<vmem>>, %arg10: memref<1x8x32xf32, #tpu.memory_space<vmem>>, %arg11: memref<4x8x8xf32, #tpu.memory_space<vmem>>, %arg12: memref<4x8x8xf32, #tpu.memory_space<vmem>>, %arg13: memref<8x32xf32, #tpu.memory_space<vmem>>) attributes {dimension_semantics = [#tpu.dimension_semantics<parallel>, #tpu.dimension_semantics<arbitrary>, #tpu.dimension_semantics<arbitrary>], iteration_bounds = array<i64: 2, 1, 1>, scalar_prefetch = 0 : i64, scratch_operands = 3 : i64, tpu.core_type = #tpu.core_type<tc>, window_params = [{transform_indices = @transform_0, window_bounds = array<i64: 1, 8, 32>}, {pipeline_mode = #tpu.pipeline_mode<synchronous>, transform_indices = @transform_1, window_bounds = array<i64: 1, 32, 32>}, {pipeline_mode = #tpu.pipeline_mode<synchronous>, transform_indices = @transform_2, window_bounds = array<i64: 1, 32, 32>}, {pipeline_mode = #tpu.pipeline_mode<synchronous>, transform_indices = @transform_3, window_bounds = array<i64: 1, 32, 32>}, {pipeline_mode = #tpu.pipeline_mode<synchronous>, transform_indices = @transform_4, window_bounds = array<i64: 1, 3, 32>}, {pipeline_mode = #tpu.pipeline_mode<synchronous>, transform_indices = @transform_5, window_bounds = array<i64: 1, 32, 32>}, {pipeline_mode = #tpu.pipeline_mode<synchronous>, transform_indices = @transform_6, window_bounds = array<i64: 1, 32>}, {transform_indices = @transform_7, window_bounds = array<i64: 1, 8, 32>}]} {
    %0 = arith.index_cast %arg2 : i32 to index
    %c0 = arith.constant 0 : index
    %c0_0 = arith.constant 0 : index
    %1 = vector.load %arg7[%0, %c0, %c0_0] : memref<1x3x32xf32, #tpu.memory_space<vmem>>, vector<1x3x32xf32>
    %2 = vector.shape_cast %1 : vector<1x3x32xf32> to vector<3x32xf32>
    %3 = vector.extract_strided_slice %2 {offsets = [0, 0], sizes = [1, 32], strides = [1, 1]} : vector<3x32xf32> to vector<1x32xf32>
    %4 = vector.extract_strided_slice %2 {offsets = [1, 0], sizes = [1, 32], strides = [1, 1]} : vector<3x32xf32> to vector<1x32xf32>
    %5 = vector.extract_strided_slice %2 {offsets = [2, 0], sizes = [1, 32], strides = [1, 1]} : vector<3x32xf32> to vector<1x32xf32>
    %c0_i32 = arith.constant 0 : i32
    %6 = arith.cmpi eq, %arg1, %c0_i32 : i32
    %7 = arith.extui %6 : i1 to i32
    %c0_i32_1 = arith.constant 0 : i32
    %8 = arith.cmpi ne, %7, %c0_i32_1 : i32
    scf.if %8 {
      %c0_70 = arith.constant 0 : index
      %c0_71 = arith.constant 0 : index
      %c0_72 = arith.constant 0 : index
      %195 = vector.load %arg3[%c0_70, %c0_71, %c0_72] : memref<1x8x32xf32, #tpu.memory_space<vmem>>, vector<1x8x32xf32>
      %196 = vector.shape_cast %195 : vector<1x8x32xf32> to vector<8x32xf32>
      %197 = arith.index_cast %arg2 : i32 to index
      %c0_73 = arith.constant 0 : index
      %c0_74 = arith.constant 0 : index
      %198 = vector.load %arg5[%197, %c0_73, %c0_74] : memref<1x32x32xf32, #tpu.memory_space<vmem>>, vector<1x32x32xf32>
      %199 = vector.shape_cast %198 : vector<1x32x32xf32> to vector<32x32xf32>
      %cst_75 = arith.constant dense<0.000000e+00> : vector<8x32xf32>
      %200 = tpu.matmul %196, %199, %cst_75 {dimension_numbers = #tpu.dot_dimension_numbers<[1], [0], [0], [1], [0, 0, 1, 1], [], []>} : vector<8x32xf32>, vector<32x32xf32>, vector<8x32xf32> -> vector<8x32xf32>
      %201 = vector.broadcast %4 : vector<1x32xf32> to vector<8x32xf32>
      %202 = arith.addf %200, %201 : vector<8x32xf32>
      %203 = arith.index_cast %arg2 : i32 to index
      %c0_76 = arith.constant 0 : index
      %c0_77 = arith.constant 0 : index
      %204 = vector.load %arg6[%203, %c0_76, %c0_77] : memref<1x32x32xf32, #tpu.memory_space<vmem>>, vector<1x32x32xf32>
      %205 = vector.shape_cast %204 : vector<1x32x32xf32> to vector<32x32xf32>
      %cst_78 = arith.constant dense<0.000000e+00> : vector<8x32xf32>
      %206 = tpu.matmul %196, %205, %cst_78 {dimension_numbers = #tpu.dot_dimension_numbers<[1], [0], [0], [1], [0, 0, 1, 1], [], []>} : vector<8x32xf32>, vector<32x32xf32>, vector<8x32xf32> -> vector<8x32xf32>
      %207 = vector.broadcast %5 : vector<1x32xf32> to vector<8x32xf32>
      %208 = arith.addf %206, %207 : vector<8x32xf32>
      %c4_i32_79 = arith.constant 4 : i32
      %209 = arith.muli %arg2, %c4_i32_79 : i32
      %c0_i32_80 = arith.constant 0 : i32
      %210 = arith.addi %209, %c0_i32_80 : i32
      %211 = vector.extract_strided_slice %202 {offsets = [0, 0], sizes = [8, 8], strides = [1, 1]} : vector<8x32xf32> to vector<8x8xf32>
      %212 = arith.index_cast %210 : i32 to index
      %c0_81 = arith.constant 0 : index
      %c0_82 = arith.constant 0 : index
      %213 = vector.load %arg11[%212, %c0_81, %c0_82] : memref<4x8x8xf32, #tpu.memory_space<vmem>>, vector<1x8x8xf32>
      %214 = vector.shape_cast %213 : vector<1x8x8xf32> to vector<8x8xf32>
      %215 = vector.shape_cast %211 : vector<8x8xf32> to vector<1x8x8xf32>
      tpu.vector_store %arg11[%212, %c0_81, %c0_82], %215 {strides = array<i32>} : memref<4x8x8xf32, #tpu.memory_space<vmem>>, vector<1x8x8xf32>,
      %216 = vector.extract_strided_slice %208 {offsets = [0, 0], sizes = [8, 8], strides = [1, 1]} : vector<8x32xf32> to vector<8x8xf32>
      %217 = arith.index_cast %210 : i32 to index
      %c0_83 = arith.constant 0 : index
      %c0_84 = arith.constant 0 : index
      %218 = vector.load %arg12[%217, %c0_83, %c0_84] : memref<4x8x8xf32, #tpu.memory_space<vmem>>, vector<1x8x8xf32>
      %219 = vector.shape_cast %218 : vector<1x8x8xf32> to vector<8x8xf32>
      %220 = vector.shape_cast %216 : vector<8x8xf32> to vector<1x8x8xf32>
      tpu.vector_store %arg12[%217, %c0_83, %c0_84], %220 {strides = array<i32>} : memref<4x8x8xf32, #tpu.memory_space<vmem>>, vector<1x8x8xf32>,
      %c4_i32_85 = arith.constant 4 : i32
      %221 = arith.muli %arg2, %c4_i32_85 : i32
      %c1_i32_86 = arith.constant 1 : i32
      %222 = arith.addi %221, %c1_i32_86 : i32
      %223 = vector.extract_strided_slice %202 {offsets = [0, 8], sizes = [8, 8], strides = [1, 1]} : vector<8x32xf32> to vector<8x8xf32>
      %224 = arith.index_cast %222 : i32 to index
      %c0_87 = arith.constant 0 : index
      %c0_88 = arith.constant 0 : index
      %225 = vector.load %arg11[%224, %c0_87, %c0_88] : memref<4x8x8xf32, #tpu.memory_space<vmem>>, vector<1x8x8xf32>
      %226 = vector.shape_cast %225 : vector<1x8x8xf32> to vector<8x8xf32>
      %227 = vector.shape_cast %223 : vector<8x8xf32> to vector<1x8x8xf32>
      tpu.vector_store %arg11[%224, %c0_87, %c0_88], %227 {strides = array<i32>} : memref<4x8x8xf32, #tpu.memory_space<vmem>>, vector<1x8x8xf32>,
      %228 = vector.extract_strided_slice %208 {offsets = [0, 8], sizes = [8, 8], strides = [1, 1]} : vector<8x32xf32> to vector<8x8xf32>
      %229 = arith.index_cast %222 : i32 to index
      %c0_89 = arith.constant 0 : index
      %c0_90 = arith.constant 0 : index
      %230 = vector.load %arg12[%229, %c0_89, %c0_90] : memref<4x8x8xf32, #tpu.memory_space<vmem>>, vector<1x8x8xf32>
      %231 = vector.shape_cast %230 : vector<1x8x8xf32> to vector<8x8xf32>
      %232 = vector.shape_cast %228 : vector<8x8xf32> to vector<1x8x8xf32>
      tpu.vector_store %arg12[%229, %c0_89, %c0_90], %232 {strides = array<i32>} : memref<4x8x8xf32, #tpu.memory_space<vmem>>, vector<1x8x8xf32>,
      %c4_i32_91 = arith.constant 4 : i32
      %233 = arith.muli %arg2, %c4_i32_91 : i32
      %c2_i32_92 = arith.constant 2 : i32
      %234 = arith.addi %233, %c2_i32_92 : i32
      %235 = vector.extract_strided_slice %202 {offsets = [0, 16], sizes = [8, 8], strides = [1, 1]} : vector<8x32xf32> to vector<8x8xf32>
      %236 = arith.index_cast %234 : i32 to index
      %c0_93 = arith.constant 0 : index
      %c0_94 = arith.constant 0 : index
      %237 = vector.load %arg11[%236, %c0_93, %c0_94] : memref<4x8x8xf32, #tpu.memory_space<vmem>>, vector<1x8x8xf32>
      %238 = vector.shape_cast %237 : vector<1x8x8xf32> to vector<8x8xf32>
      %239 = vector.shape_cast %235 : vector<8x8xf32> to vector<1x8x8xf32>
      tpu.vector_store %arg11[%236, %c0_93, %c0_94], %239 {strides = array<i32>} : memref<4x8x8xf32, #tpu.memory_space<vmem>>, vector<1x8x8xf32>,
      %240 = vector.extract_strided_slice %208 {offsets = [0, 16], sizes = [8, 8], strides = [1, 1]} : vector<8x32xf32> to vector<8x8xf32>
      %241 = arith.index_cast %234 : i32 to index
      %c0_95 = arith.constant 0 : index
      %c0_96 = arith.constant 0 : index
      %242 = vector.load %arg12[%241, %c0_95, %c0_96] : memref<4x8x8xf32, #tpu.memory_space<vmem>>, vector<1x8x8xf32>
      %243 = vector.shape_cast %242 : vector<1x8x8xf32> to vector<8x8xf32>
      %244 = vector.shape_cast %240 : vector<8x8xf32> to vector<1x8x8xf32>
      tpu.vector_store %arg12[%241, %c0_95, %c0_96], %244 {strides = array<i32>} : memref<4x8x8xf32, #tpu.memory_space<vmem>>, vector<1x8x8xf32>,
      %c4_i32_97 = arith.constant 4 : i32
      %245 = arith.muli %arg2, %c4_i32_97 : i32
      %c3_i32_98 = arith.constant 3 : i32
      %246 = arith.addi %245, %c3_i32_98 : i32
      %247 = vector.extract_strided_slice %202 {offsets = [0, 24], sizes = [8, 8], strides = [1, 1]} : vector<8x32xf32> to vector<8x8xf32>
      %248 = arith.index_cast %246 : i32 to index
      %c0_99 = arith.constant 0 : index
      %c0_100 = arith.constant 0 : index
      %249 = vector.load %arg11[%248, %c0_99, %c0_100] : memref<4x8x8xf32, #tpu.memory_space<vmem>>, vector<1x8x8xf32>
      %250 = vector.shape_cast %249 : vector<1x8x8xf32> to vector<8x8xf32>
      %251 = vector.shape_cast %247 : vector<8x8xf32> to vector<1x8x8xf32>
      tpu.vector_store %arg11[%248, %c0_99, %c0_100], %251 {strides = array<i32>} : memref<4x8x8xf32, #tpu.memory_space<vmem>>, vector<1x8x8xf32>,
      %252 = vector.extract_strided_slice %208 {offsets = [0, 24], sizes = [8, 8], strides = [1, 1]} : vector<8x32xf32> to vector<8x8xf32>
      %253 = arith.index_cast %246 : i32 to index
      %c0_101 = arith.constant 0 : index
      %c0_102 = arith.constant 0 : index
      %254 = vector.load %arg12[%253, %c0_101, %c0_102] : memref<4x8x8xf32, #tpu.memory_space<vmem>>, vector<1x8x8xf32>
      %255 = vector.shape_cast %254 : vector<1x8x8xf32> to vector<8x8xf32>
      %256 = vector.shape_cast %252 : vector<8x8xf32> to vector<1x8x8xf32>
      tpu.vector_store %arg12[%253, %c0_101, %c0_102], %256 {strides = array<i32>} : memref<4x8x8xf32, #tpu.memory_space<vmem>>, vector<1x8x8xf32>,
    } else {
    }
    %c8_i32 = arith.constant 8 : i32
    %9 = arith.muli %arg1, %c8_i32 : i32
    %10 = tpu.assume_multiple %9, 8 : i32
    %c0_2 = arith.constant 0 : index
    %11 = arith.index_cast %10 : i32 to index
    %c0_3 = arith.constant 0 : index
    %12 = vector.load %arg3[%c0_2, %11, %c0_3] : memref<1x8x32xf32, #tpu.memory_space<vmem>>, vector<1x8x32xf32>
    %13 = vector.shape_cast %12 : vector<1x8x32xf32> to vector<8x32xf32>
    %14 = arith.index_cast %arg2 : i32 to index
    %c0_4 = arith.constant 0 : index
    %c0_5 = arith.constant 0 : index
    %15 = vector.load %arg4[%14, %c0_4, %c0_5] : memref<1x32x32xf32, #tpu.memory_space<vmem>>, vector<1x32x32xf32>
    %16 = vector.shape_cast %15 : vector<1x32x32xf32> to vector<32x32xf32>
    %cst = arith.constant dense<0.000000e+00> : vector<8x32xf32>
    %17 = tpu.matmul %13, %16, %cst {dimension_numbers = #tpu.dot_dimension_numbers<[1], [0], [0], [1], [0, 0, 1, 1], [], []>} : vector<8x32xf32>, vector<32x32xf32>, vector<8x32xf32> -> vector<8x32xf32>
    %18 = vector.broadcast %3 : vector<1x32xf32> to vector<8x32xf32>
    %19 = arith.addf %17, %18 : vector<8x32xf32>
    %cst_6 = arith.constant 0.353553385 : f32
    %20 = vector.broadcast %cst_6 : f32 to vector<8x32xf32>
    %21 = arith.mulf %19, %20 : vector<8x32xf32>
    %22 = tpu.iota {dimensions = array<i32: 0>} : vector<8x8xi32>
    %23 = tpu.iota {dimensions = array<i32: 1>} : vector<8x8xi32>
    %24 = arith.cmpi sle, %23, %22 : vector<8x8xi32>
    %c4_i32 = arith.constant 4 : i32
    %25 = arith.muli %arg2, %c4_i32 : i32
    %c0_i32_7 = arith.constant 0 : i32
    %26 = arith.addi %25, %c0_i32_7 : i32
    %27 = vector.extract_strided_slice %21 {offsets = [0, 0], sizes = [8, 8], strides = [1, 1]} : vector<8x32xf32> to vector<8x8xf32>
    %cst_8 = arith.constant 0xFF800000 : f32
    %28 = vector.broadcast %cst_8 : f32 to vector<8x1xf32>
    %cst_9 = arith.constant 0.000000e+00 : f32
    %29 = vector.broadcast %cst_9 : f32 to vector<8x1xf32>
    %cst_10 = arith.constant 0.000000e+00 : f32
    %30 = vector.broadcast %cst_10 : f32 to vector<8x8xf32>
    %c0_i32_11 = arith.constant 0 : i32
    %31 = arith.subi %arg1, %c0_i32_11 : i32
    %32 = arith.addi %c0_i32_11, %31 : i32
    %c1_i32 = arith.constant 1 : i32
    %33:3 = scf.for %arg14 = %c0_i32_11 to %32 step %c1_i32 iter_args(%arg15 = %28, %arg16 = %29, %arg17 = %30) -> (vector<8x1xf32>, vector<8x1xf32>, vector<8x8xf32>)  : i32 {
      %c8_i32_70 = arith.constant 8 : i32
      %195 = arith.muli %arg14, %c8_i32_70 : i32
      %196 = tpu.assume_multiple %195, 8 : i32
      %197 = arith.index_cast %26 : i32 to index
      %198 = arith.index_cast %196 : i32 to index
      %c0_71 = arith.constant 0 : index
      %199 = vector.load %arg11[%197, %198, %c0_71] : memref<4x8x8xf32, #tpu.memory_space<vmem>>, vector<1x8x8xf32>
      %200 = vector.shape_cast %199 : vector<1x8x8xf32> to vector<8x8xf32>
      %201 = arith.index_cast %26 : i32 to index
      %202 = arith.index_cast %196 : i32 to index
      %c0_72 = arith.constant 0 : index
      %203 = vector.load %arg12[%201, %202, %c0_72] : memref<4x8x8xf32, #tpu.memory_space<vmem>>, vector<1x8x8xf32>
      %204 = vector.shape_cast %203 : vector<1x8x8xf32> to vector<8x8xf32>
      "tpu.trace_start"() <{level = 10 : i32, message = "qd,kd->qk"}> : () -> ()
      %cst_73 = arith.constant dense<0.000000e+00> : vector<8x8xf32>
      %205 = tpu.matmul %27, %200, %cst_73 {dimension_numbers = #tpu.dot_dimension_numbers<[1], [1], [0], [0], [0, 0, 1, 0], [], []>} : vector<8x8xf32>, vector<8x8xf32>, vector<8x8xf32> -> vector<8x8xf32>
      "tpu.trace_stop"() : () -> ()
      %cst_74 = arith.constant dense<0xFF800000> : vector<8xf32>
      %206 = vector.multi_reduction <maximumf>, %205, %cst_74 [1] : vector<8x8xf32> to vector<8xf32>
      %207 = vector.shape_cast %206 : vector<8xf32> to vector<8x1xf32>
      %208 = arith.maximumf %arg15, %207 : vector<8x1xf32>
      %209 = arith.subf %arg15, %208 : vector<8x1xf32>
      %210 = math.exp %209 : vector<8x1xf32>
      %211 = vector.broadcast %208 : vector<8x1xf32> to vector<8x8xf32>
      %212 = arith.subf %205, %211 : vector<8x8xf32>
      %213 = math.exp %212 : vector<8x8xf32>
      %214 = arith.mulf %210, %arg16 : vector<8x1xf32>
      %cst_75 = arith.constant dense<0.000000e+00> : vector<8xf32>
      %215 = vector.multi_reduction <add>, %213, %cst_75 [1] : vector<8x8xf32> to vector<8xf32>
      %216 = vector.shape_cast %215 : vector<8xf32> to vector<8x1xf32>
      %217 = arith.addf %214, %216 : vector<8x1xf32>
      %218 = vector.broadcast %210 : vector<8x1xf32> to vector<8x8xf32>
      %219 = arith.mulf %218, %arg17 : vector<8x8xf32>
      %cst_76 = arith.constant dense<0.000000e+00> : vector<8x8xf32>
      %220 = tpu.matmul %213, %204, %cst_76 {dimension_numbers = #tpu.dot_dimension_numbers<[1], [0], [0], [1], [0, 0, 1, 1], [], []>} : vector<8x8xf32>, vector<8x8xf32>, vector<8x8xf32> -> vector<8x8xf32>
      %221 = arith.addf %219, %220 : vector<8x8xf32>
      scf.yield %208, %217, %221 : vector<8x1xf32>, vector<8x1xf32>, vector<8x8xf32>
    }
    %34 = arith.index_cast %26 : i32 to index
    %35 = arith.index_cast %10 : i32 to index
    %c0_12 = arith.constant 0 : index
    %36 = vector.load %arg11[%34, %35, %c0_12] : memref<4x8x8xf32, #tpu.memory_space<vmem>>, vector<1x8x8xf32>
    %37 = vector.shape_cast %36 : vector<1x8x8xf32> to vector<8x8xf32>
    %38 = arith.index_cast %26 : i32 to index
    %39 = arith.index_cast %10 : i32 to index
    %c0_13 = arith.constant 0 : index
    %40 = vector.load %arg12[%38, %39, %c0_13] : memref<4x8x8xf32, #tpu.memory_space<vmem>>, vector<1x8x8xf32>
    %41 = vector.shape_cast %40 : vector<1x8x8xf32> to vector<8x8xf32>
    "tpu.trace_start"() <{level = 10 : i32, message = "qd,kd->qk"}> : () -> ()
    %cst_14 = arith.constant dense<0.000000e+00> : vector<8x8xf32>
    %42 = tpu.matmul %27, %37, %cst_14 {dimension_numbers = #tpu.dot_dimension_numbers<[1], [1], [0], [0], [0, 0, 1, 0], [], []>} : vector<8x8xf32>, vector<8x8xf32>, vector<8x8xf32> -> vector<8x8xf32>
    %cst_15 = arith.constant -1.000000e+04 : f32
    "tpu.trace_stop"() : () -> ()
    %43 = vector.broadcast %cst_15 : f32 to vector<8x8xf32>
    %44 = arith.select %24, %42, %43 : vector<8x8xi1>, vector<8x8xf32>
    %cst_16 = arith.constant dense<0xFF800000> : vector<8xf32>
    %45 = vector.multi_reduction <maximumf>, %44, %cst_16 [1] : vector<8x8xf32> to vector<8xf32>
    %46 = vector.shape_cast %45 : vector<8xf32> to vector<8x1xf32>
    %47 = arith.maximumf %33#0, %46 : vector<8x1xf32>
    %48 = arith.subf %33#0, %47 : vector<8x1xf32>
    %49 = math.exp %48 : vector<8x1xf32>
    %50 = vector.broadcast %47 : vector<8x1xf32> to vector<8x8xf32>
    %51 = arith.subf %44, %50 : vector<8x8xf32>
    %52 = math.exp %51 : vector<8x8xf32>
    %53 = arith.mulf %49, %33#1 : vector<8x1xf32>
    %cst_17 = arith.constant dense<0.000000e+00> : vector<8xf32>
    %54 = vector.multi_reduction <add>, %52, %cst_17 [1] : vector<8x8xf32> to vector<8xf32>
    %55 = vector.shape_cast %54 : vector<8xf32> to vector<8x1xf32>
    %56 = arith.addf %53, %55 : vector<8x1xf32>
    %57 = vector.broadcast %49 : vector<8x1xf32> to vector<8x8xf32>
    %58 = arith.mulf %57, %33#2 : vector<8x8xf32>
    %cst_18 = arith.constant dense<0.000000e+00> : vector<8x8xf32>
    %59 = tpu.matmul %52, %41, %cst_18 {dimension_numbers = #tpu.dot_dimension_numbers<[1], [0], [0], [1], [0, 0, 1, 1], [], []>} : vector<8x8xf32>, vector<8x8xf32>, vector<8x8xf32> -> vector<8x8xf32>
    %60 = arith.addf %58, %59 : vector<8x8xf32>
    %61 = tpu.reciprocal %56 {approx = true} : vector<8x1xf32> -> vector<8x1xf32>
    %62 = vector.broadcast %61 : vector<8x1xf32> to vector<8x8xf32>
    %63 = arith.mulf %60, %62 : vector<8x8xf32>
    %c4_i32_19 = arith.constant 4 : i32
    %64 = arith.muli %arg2, %c4_i32_19 : i32
    %c1_i32_20 = arith.constant 1 : i32
    %65 = arith.addi %64, %c1_i32_20 : i32
    %66 = vector.extract_strided_slice %21 {offsets = [0, 8], sizes = [8, 8], strides = [1, 1]} : vector<8x32xf32> to vector<8x8xf32>
    %cst_21 = arith.constant 0xFF800000 : f32
    %67 = vector.broadcast %cst_21 : f32 to vector<8x1xf32>
    %cst_22 = arith.constant 0.000000e+00 : f32
    %68 = vector.broadcast %cst_22 : f32 to vector<8x1xf32>
    %cst_23 = arith.constant 0.000000e+00 : f32
    %69 = vector.broadcast %cst_23 : f32 to vector<8x8xf32>
    %c0_i32_24 = arith.constant 0 : i32
    %70 = arith.subi %arg1, %c0_i32_24 : i32
    %71 = arith.addi %c0_i32_24, %70 : i32
    %c1_i32_25 = arith.constant 1 : i32
    %72:3 = scf.for %arg14 = %c0_i32_24 to %71 step %c1_i32_25 iter_args(%arg15 = %67, %arg16 = %68, %arg17 = %69) -> (vector<8x1xf32>, vector<8x1xf32>, vector<8x8xf32>)  : i32 {
      %c8_i32_70 = arith.constant 8 : i32
      %195 = arith.muli %arg14, %c8_i32_70 : i32
      %196 = tpu.assume_multiple %195, 8 : i32
      %197 = arith.index_cast %65 : i32 to index
      %198 = arith.index_cast %196 : i32 to index
      %c0_71 = arith.constant 0 : index
      %199 = vector.load %arg11[%197, %198, %c0_71] : memref<4x8x8xf32, #tpu.memory_space<vmem>>, vector<1x8x8xf32>
      %200 = vector.shape_cast %199 : vector<1x8x8xf32> to vector<8x8xf32>
      %201 = arith.index_cast %65 : i32 to index
      %202 = arith.index_cast %196 : i32 to index
      %c0_72 = arith.constant 0 : index
      %203 = vector.load %arg12[%201, %202, %c0_72] : memref<4x8x8xf32, #tpu.memory_space<vmem>>, vector<1x8x8xf32>
      %204 = vector.shape_cast %203 : vector<1x8x8xf32> to vector<8x8xf32>
      "tpu.trace_start"() <{level = 10 : i32, message = "qd,kd->qk"}> : () -> ()
      %cst_73 = arith.constant dense<0.000000e+00> : vector<8x8xf32>
      %205 = tpu.matmul %66, %200, %cst_73 {dimension_numbers = #tpu.dot_dimension_numbers<[1], [1], [0], [0], [0, 0, 1, 0], [], []>} : vector<8x8xf32>, vector<8x8xf32>, vector<8x8xf32> -> vector<8x8xf32>
      "tpu.trace_stop"() : () -> ()
      %cst_74 = arith.constant dense<0xFF800000> : vector<8xf32>
      %206 = vector.multi_reduction <maximumf>, %205, %cst_74 [1] : vector<8x8xf32> to vector<8xf32>
      %207 = vector.shape_cast %206 : vector<8xf32> to vector<8x1xf32>
      %208 = arith.maximumf %arg15, %207 : vector<8x1xf32>
      %209 = arith.subf %arg15, %208 : vector<8x1xf32>
      %210 = math.exp %209 : vector<8x1xf32>
      %211 = vector.broadcast %208 : vector<8x1xf32> to vector<8x8xf32>
      %212 = arith.subf %205, %211 : vector<8x8xf32>
      %213 = math.exp %212 : vector<8x8xf32>
      %214 = arith.mulf %210, %arg16 : vector<8x1xf32>
      %cst_75 = arith.constant dense<0.000000e+00> : vector<8xf32>
      %215 = vector.multi_reduction <add>, %213, %cst_75 [1] : vector<8x8xf32> to vector<8xf32>
      %216 = vector.shape_cast %215 : vector<8xf32> to vector<8x1xf32>
      %217 = arith.addf %214, %216 : vector<8x1xf32>
      %218 = vector.broadcast %210 : vector<8x1xf32> to vector<8x8xf32>
      %219 = arith.mulf %218, %arg17 : vector<8x8xf32>
      %cst_76 = arith.constant dense<0.000000e+00> : vector<8x8xf32>
      %220 = tpu.matmul %213, %204, %cst_76 {dimension_numbers = #tpu.dot_dimension_numbers<[1], [0], [0], [1], [0, 0, 1, 1], [], []>} : vector<8x8xf32>, vector<8x8xf32>, vector<8x8xf32> -> vector<8x8xf32>
      %221 = arith.addf %219, %220 : vector<8x8xf32>
      scf.yield %208, %217, %221 : vector<8x1xf32>, vector<8x1xf32>, vector<8x8xf32>
    }
    %73 = arith.index_cast %65 : i32 to index
    %74 = arith.index_cast %10 : i32 to index
    %c0_26 = arith.constant 0 : index
    %75 = vector.load %arg11[%73, %74, %c0_26] : memref<4x8x8xf32, #tpu.memory_space<vmem>>, vector<1x8x8xf32>
    %76 = vector.shape_cast %75 : vector<1x8x8xf32> to vector<8x8xf32>
    %77 = arith.index_cast %65 : i32 to index
    %78 = arith.index_cast %10 : i32 to index
    %c0_27 = arith.constant 0 : index
    %79 = vector.load %arg12[%77, %78, %c0_27] : memref<4x8x8xf32, #tpu.memory_space<vmem>>, vector<1x8x8xf32>
    %80 = vector.shape_cast %79 : vector<1x8x8xf32> to vector<8x8xf32>
    "tpu.trace_start"() <{level = 10 : i32, message = "qd,kd->qk"}> : () -> ()
    %cst_28 = arith.constant dense<0.000000e+00> : vector<8x8xf32>
    %81 = tpu.matmul %66, %76, %cst_28 {dimension_numbers = #tpu.dot_dimension_numbers<[1], [1], [0], [0], [0, 0, 1, 0], [], []>} : vector<8x8xf32>, vector<8x8xf32>, vector<8x8xf32> -> vector<8x8xf32>
    %cst_29 = arith.constant -1.000000e+04 : f32
    "tpu.trace_stop"() : () -> ()
    %82 = vector.broadcast %cst_29 : f32 to vector<8x8xf32>
    %83 = arith.select %24, %81, %82 : vector<8x8xi1>, vector<8x8xf32>
    %cst_30 = arith.constant dense<0xFF800000> : vector<8xf32>
    %84 = vector.multi_reduction <maximumf>, %83, %cst_30 [1] : vector<8x8xf32> to vector<8xf32>
    %85 = vector.shape_cast %84 : vector<8xf32> to vector<8x1xf32>
    %86 = arith.maximumf %72#0, %85 : vector<8x1xf32>
    %87 = arith.subf %72#0, %86 : vector<8x1xf32>
    %88 = math.exp %87 : vector<8x1xf32>
    %89 = vector.broadcast %86 : vector<8x1xf32> to vector<8x8xf32>
    %90 = arith.subf %83, %89 : vector<8x8xf32>
    %91 = math.exp %90 : vector<8x8xf32>
    %92 = arith.mulf %88, %72#1 : vector<8x1xf32>
    %cst_31 = arith.constant dense<0.000000e+00> : vector<8xf32>
    %93 = vector.multi_reduction <add>, %91, %cst_31 [1] : vector<8x8xf32> to vector<8xf32>
    %94 = vector.shape_cast %93 : vector<8xf32> to vector<8x1xf32>
    %95 = arith.addf %92, %94 : vector<8x1xf32>
    %96 = vector.broadcast %88 : vector<8x1xf32> to vector<8x8xf32>
    %97 = arith.mulf %96, %72#2 : vector<8x8xf32>
    %cst_32 = arith.constant dense<0.000000e+00> : vector<8x8xf32>
    %98 = tpu.matmul %91, %80, %cst_32 {dimension_numbers = #tpu.dot_dimension_numbers<[1], [0], [0], [1], [0, 0, 1, 1], [], []>} : vector<8x8xf32>, vector<8x8xf32>, vector<8x8xf32> -> vector<8x8xf32>
    %99 = arith.addf %97, %98 : vector<8x8xf32>
    %100 = tpu.reciprocal %95 {approx = true} : vector<8x1xf32> -> vector<8x1xf32>
    %101 = vector.broadcast %100 : vector<8x1xf32> to vector<8x8xf32>
    %102 = arith.mulf %99, %101 : vector<8x8xf32>
    %c4_i32_33 = arith.constant 4 : i32
    %103 = arith.muli %arg2, %c4_i32_33 : i32
    %c2_i32 = arith.constant 2 : i32
    %104 = arith.addi %103, %c2_i32 : i32
    %105 = vector.extract_strided_slice %21 {offsets = [0, 16], sizes = [8, 8], strides = [1, 1]} : vector<8x32xf32> to vector<8x8xf32>
    %cst_34 = arith.constant 0xFF800000 : f32
    %106 = vector.broadcast %cst_34 : f32 to vector<8x1xf32>
    %cst_35 = arith.constant 0.000000e+00 : f32
    %107 = vector.broadcast %cst_35 : f32 to vector<8x1xf32>
    %cst_36 = arith.constant 0.000000e+00 : f32
    %108 = vector.broadcast %cst_36 : f32 to vector<8x8xf32>
    %c0_i32_37 = arith.constant 0 : i32
    %109 = arith.subi %arg1, %c0_i32_37 : i32
    %110 = arith.addi %c0_i32_37, %109 : i32
    %c1_i32_38 = arith.constant 1 : i32
    %111:3 = scf.for %arg14 = %c0_i32_37 to %110 step %c1_i32_38 iter_args(%arg15 = %106, %arg16 = %107, %arg17 = %108) -> (vector<8x1xf32>, vector<8x1xf32>, vector<8x8xf32>)  : i32 {
      %c8_i32_70 = arith.constant 8 : i32
      %195 = arith.muli %arg14, %c8_i32_70 : i32
      %196 = tpu.assume_multiple %195, 8 : i32
      %197 = arith.index_cast %104 : i32 to index
      %198 = arith.index_cast %196 : i32 to index
      %c0_71 = arith.constant 0 : index
      %199 = vector.load %arg11[%197, %198, %c0_71] : memref<4x8x8xf32, #tpu.memory_space<vmem>>, vector<1x8x8xf32>
      %200 = vector.shape_cast %199 : vector<1x8x8xf32> to vector<8x8xf32>
      %201 = arith.index_cast %104 : i32 to index
      %202 = arith.index_cast %196 : i32 to index
      %c0_72 = arith.constant 0 : index
      %203 = vector.load %arg12[%201, %202, %c0_72] : memref<4x8x8xf32, #tpu.memory_space<vmem>>, vector<1x8x8xf32>
      %204 = vector.shape_cast %203 : vector<1x8x8xf32> to vector<8x8xf32>
      "tpu.trace_start"() <{level = 10 : i32, message = "qd,kd->qk"}> : () -> ()
      %cst_73 = arith.constant dense<0.000000e+00> : vector<8x8xf32>
      %205 = tpu.matmul %105, %200, %cst_73 {dimension_numbers = #tpu.dot_dimension_numbers<[1], [1], [0], [0], [0, 0, 1, 0], [], []>} : vector<8x8xf32>, vector<8x8xf32>, vector<8x8xf32> -> vector<8x8xf32>
      "tpu.trace_stop"() : () -> ()
      %cst_74 = arith.constant dense<0xFF800000> : vector<8xf32>
      %206 = vector.multi_reduction <maximumf>, %205, %cst_74 [1] : vector<8x8xf32> to vector<8xf32>
      %207 = vector.shape_cast %206 : vector<8xf32> to vector<8x1xf32>
      %208 = arith.maximumf %arg15, %207 : vector<8x1xf32>
      %209 = arith.subf %arg15, %208 : vector<8x1xf32>
      %210 = math.exp %209 : vector<8x1xf32>
      %211 = vector.broadcast %208 : vector<8x1xf32> to vector<8x8xf32>
      %212 = arith.subf %205, %211 : vector<8x8xf32>
      %213 = math.exp %212 : vector<8x8xf32>
      %214 = arith.mulf %210, %arg16 : vector<8x1xf32>
      %cst_75 = arith.constant dense<0.000000e+00> : vector<8xf32>
      %215 = vector.multi_reduction <add>, %213, %cst_75 [1] : vector<8x8xf32> to vector<8xf32>
      %216 = vector.shape_cast %215 : vector<8xf32> to vector<8x1xf32>
      %217 = arith.addf %214, %216 : vector<8x1xf32>
      %218 = vector.broadcast %210 : vector<8x1xf32> to vector<8x8xf32>
      %219 = arith.mulf %218, %arg17 : vector<8x8xf32>
      %cst_76 = arith.constant dense<0.000000e+00> : vector<8x8xf32>
      %220 = tpu.matmul %213, %204, %cst_76 {dimension_numbers = #tpu.dot_dimension_numbers<[1], [0], [0], [1], [0, 0, 1, 1], [], []>} : vector<8x8xf32>, vector<8x8xf32>, vector<8x8xf32> -> vector<8x8xf32>
      %221 = arith.addf %219, %220 : vector<8x8xf32>
      scf.yield %208, %217, %221 : vector<8x1xf32>, vector<8x1xf32>, vector<8x8xf32>
    }
    %112 = arith.index_cast %104 : i32 to index
    %113 = arith.index_cast %10 : i32 to index
    %c0_39 = arith.constant 0 : index
    %114 = vector.load %arg11[%112, %113, %c0_39] : memref<4x8x8xf32, #tpu.memory_space<vmem>>, vector<1x8x8xf32>
    %115 = vector.shape_cast %114 : vector<1x8x8xf32> to vector<8x8xf32>
    %116 = arith.index_cast %104 : i32 to index
    %117 = arith.index_cast %10 : i32 to index
    %c0_40 = arith.constant 0 : index
    %118 = vector.load %arg12[%116, %117, %c0_40] : memref<4x8x8xf32, #tpu.memory_space<vmem>>, vector<1x8x8xf32>
    %119 = vector.shape_cast %118 : vector<1x8x8xf32> to vector<8x8xf32>
    "tpu.trace_start"() <{level = 10 : i32, message = "qd,kd->qk"}> : () -> ()
    %cst_41 = arith.constant dense<0.000000e+00> : vector<8x8xf32>
    %120 = tpu.matmul %105, %115, %cst_41 {dimension_numbers = #tpu.dot_dimension_numbers<[1], [1], [0], [0], [0, 0, 1, 0], [], []>} : vector<8x8xf32>, vector<8x8xf32>, vector<8x8xf32> -> vector<8x8xf32>
    %cst_42 = arith.constant -1.000000e+04 : f32
    "tpu.trace_stop"() : () -> ()
    %121 = vector.broadcast %cst_42 : f32 to vector<8x8xf32>
    %122 = arith.select %24, %120, %121 : vector<8x8xi1>, vector<8x8xf32>
    %cst_43 = arith.constant dense<0xFF800000> : vector<8xf32>
    %123 = vector.multi_reduction <maximumf>, %122, %cst_43 [1] : vector<8x8xf32> to vector<8xf32>
    %124 = vector.shape_cast %123 : vector<8xf32> to vector<8x1xf32>
    %125 = arith.maximumf %111#0, %124 : vector<8x1xf32>
    %126 = arith.subf %111#0, %125 : vector<8x1xf32>
    %127 = math.exp %126 : vector<8x1xf32>
    %128 = vector.broadcast %125 : vector<8x1xf32> to vector<8x8xf32>
    %129 = arith.subf %122, %128 : vector<8x8xf32>
    %130 = math.exp %129 : vector<8x8xf32>
    %131 = arith.mulf %127, %111#1 : vector<8x1xf32>
    %cst_44 = arith.constant dense<0.000000e+00> : vector<8xf32>
    %132 = vector.multi_reduction <add>, %130, %cst_44 [1] : vector<8x8xf32> to vector<8xf32>
    %133 = vector.shape_cast %132 : vector<8xf32> to vector<8x1xf32>
    %134 = arith.addf %131, %133 : vector<8x1xf32>
    %135 = vector.broadcast %127 : vector<8x1xf32> to vector<8x8xf32>
    %136 = arith.mulf %135, %111#2 : vector<8x8xf32>
    %cst_45 = arith.constant dense<0.000000e+00> : vector<8x8xf32>
    %137 = tpu.matmul %130, %119, %cst_45 {dimension_numbers = #tpu.dot_dimension_numbers<[1], [0], [0], [1], [0, 0, 1, 1], [], []>} : vector<8x8xf32>, vector<8x8xf32>, vector<8x8xf32> -> vector<8x8xf32>
    %138 = arith.addf %136, %137 : vector<8x8xf32>
    %139 = tpu.reciprocal %134 {approx = true} : vector<8x1xf32> -> vector<8x1xf32>
    %140 = vector.broadcast %139 : vector<8x1xf32> to vector<8x8xf32>
    %141 = arith.mulf %138, %140 : vector<8x8xf32>
    %c4_i32_46 = arith.constant 4 : i32
    %142 = arith.muli %arg2, %c4_i32_46 : i32
    %c3_i32 = arith.constant 3 : i32
    %143 = arith.addi %142, %c3_i32 : i32
    %144 = vector.extract_strided_slice %21 {offsets = [0, 24], sizes = [8, 8], strides = [1, 1]} : vector<8x32xf32> to vector<8x8xf32>
    %cst_47 = arith.constant 0xFF800000 : f32
    %145 = vector.broadcast %cst_47 : f32 to vector<8x1xf32>
    %cst_48 = arith.constant 0.000000e+00 : f32
    %146 = vector.broadcast %cst_48 : f32 to vector<8x1xf32>
    %cst_49 = arith.constant 0.000000e+00 : f32
    %147 = vector.broadcast %cst_49 : f32 to vector<8x8xf32>
    %c0_i32_50 = arith.constant 0 : i32
    %148 = arith.subi %arg1, %c0_i32_50 : i32
    %149 = arith.addi %c0_i32_50, %148 : i32
    %c1_i32_51 = arith.constant 1 : i32
    %150:3 = scf.for %arg14 = %c0_i32_50 to %149 step %c1_i32_51 iter_args(%arg15 = %145, %arg16 = %146, %arg17 = %147) -> (vector<8x1xf32>, vector<8x1xf32>, vector<8x8xf32>)  : i32 {
      %c8_i32_70 = arith.constant 8 : i32
      %195 = arith.muli %arg14, %c8_i32_70 : i32
      %196 = tpu.assume_multiple %195, 8 : i32
      %197 = arith.index_cast %143 : i32 to index
      %198 = arith.index_cast %196 : i32 to index
      %c0_71 = arith.constant 0 : index
      %199 = vector.load %arg11[%197, %198, %c0_71] : memref<4x8x8xf32, #tpu.memory_space<vmem>>, vector<1x8x8xf32>
      %200 = vector.shape_cast %199 : vector<1x8x8xf32> to vector<8x8xf32>
      %201 = arith.index_cast %143 : i32 to index
      %202 = arith.index_cast %196 : i32 to index
      %c0_72 = arith.constant 0 : index
      %203 = vector.load %arg12[%201, %202, %c0_72] : memref<4x8x8xf32, #tpu.memory_space<vmem>>, vector<1x8x8xf32>
      %204 = vector.shape_cast %203 : vector<1x8x8xf32> to vector<8x8xf32>
      "tpu.trace_start"() <{level = 10 : i32, message = "qd,kd->qk"}> : () -> ()
      %cst_73 = arith.constant dense<0.000000e+00> : vector<8x8xf32>
      %205 = tpu.matmul %144, %200, %cst_73 {dimension_numbers = #tpu.dot_dimension_numbers<[1], [1], [0], [0], [0, 0, 1, 0], [], []>} : vector<8x8xf32>, vector<8x8xf32>, vector<8x8xf32> -> vector<8x8xf32>
      "tpu.trace_stop"() : () -> ()
      %cst_74 = arith.constant dense<0xFF800000> : vector<8xf32>
      %206 = vector.multi_reduction <maximumf>, %205, %cst_74 [1] : vector<8x8xf32> to vector<8xf32>
      %207 = vector.shape_cast %206 : vector<8xf32> to vector<8x1xf32>
      %208 = arith.maximumf %arg15, %207 : vector<8x1xf32>
      %209 = arith.subf %arg15, %208 : vector<8x1xf32>
      %210 = math.exp %209 : vector<8x1xf32>
      %211 = vector.broadcast %208 : vector<8x1xf32> to vector<8x8xf32>
      %212 = arith.subf %205, %211 : vector<8x8xf32>
      %213 = math.exp %212 : vector<8x8xf32>
      %214 = arith.mulf %210, %arg16 : vector<8x1xf32>
      %cst_75 = arith.constant dense<0.000000e+00> : vector<8xf32>
      %215 = vector.multi_reduction <add>, %213, %cst_75 [1] : vector<8x8xf32> to vector<8xf32>
      %216 = vector.shape_cast %215 : vector<8xf32> to vector<8x1xf32>
      %217 = arith.addf %214, %216 : vector<8x1xf32>
      %218 = vector.broadcast %210 : vector<8x1xf32> to vector<8x8xf32>
      %219 = arith.mulf %218, %arg17 : vector<8x8xf32>
      %cst_76 = arith.constant dense<0.000000e+00> : vector<8x8xf32>
      %220 = tpu.matmul %213, %204, %cst_76 {dimension_numbers = #tpu.dot_dimension_numbers<[1], [0], [0], [1], [0, 0, 1, 1], [], []>} : vector<8x8xf32>, vector<8x8xf32>, vector<8x8xf32> -> vector<8x8xf32>
      %221 = arith.addf %219, %220 : vector<8x8xf32>
      scf.yield %208, %217, %221 : vector<8x1xf32>, vector<8x1xf32>, vector<8x8xf32>
    }
    %151 = arith.index_cast %143 : i32 to index
    %152 = arith.index_cast %10 : i32 to index
    %c0_52 = arith.constant 0 : index
    %153 = vector.load %arg11[%151, %152, %c0_52] : memref<4x8x8xf32, #tpu.memory_space<vmem>>, vector<1x8x8xf32>
    %154 = vector.shape_cast %153 : vector<1x8x8xf32> to vector<8x8xf32>
    %155 = arith.index_cast %143 : i32 to index
    %156 = arith.index_cast %10 : i32 to index
    %c0_53 = arith.constant 0 : index
    %157 = vector.load %arg12[%155, %156, %c0_53] : memref<4x8x8xf32, #tpu.memory_space<vmem>>, vector<1x8x8xf32>
    %158 = vector.shape_cast %157 : vector<1x8x8xf32> to vector<8x8xf32>
    "tpu.trace_start"() <{level = 10 : i32, message = "qd,kd->qk"}> : () -> ()
    %cst_54 = arith.constant dense<0.000000e+00> : vector<8x8xf32>
    %159 = tpu.matmul %144, %154, %cst_54 {dimension_numbers = #tpu.dot_dimension_numbers<[1], [1], [0], [0], [0, 0, 1, 0], [], []>} : vector<8x8xf32>, vector<8x8xf32>, vector<8x8xf32> -> vector<8x8xf32>
    %cst_55 = arith.constant -1.000000e+04 : f32
    "tpu.trace_stop"() : () -> ()
    %160 = vector.broadcast %cst_55 : f32 to vector<8x8xf32>
    %161 = arith.select %24, %159, %160 : vector<8x8xi1>, vector<8x8xf32>
    %cst_56 = arith.constant dense<0xFF800000> : vector<8xf32>
    %162 = vector.multi_reduction <maximumf>, %161, %cst_56 [1] : vector<8x8xf32> to vector<8xf32>
    %163 = vector.shape_cast %162 : vector<8xf32> to vector<8x1xf32>
    %164 = arith.maximumf %150#0, %163 : vector<8x1xf32>
    %165 = arith.subf %150#0, %164 : vector<8x1xf32>
    %166 = math.exp %165 : vector<8x1xf32>
    %167 = vector.broadcast %164 : vector<8x1xf32> to vector<8x8xf32>
    %168 = arith.subf %161, %167 : vector<8x8xf32>
    %169 = math.exp %168 : vector<8x8xf32>
    %170 = arith.mulf %166, %150#1 : vector<8x1xf32>
    %cst_57 = arith.constant dense<0.000000e+00> : vector<8xf32>
    %171 = vector.multi_reduction <add>, %169, %cst_57 [1] : vector<8x8xf32> to vector<8xf32>
    %172 = vector.shape_cast %171 : vector<8xf32> to vector<8x1xf32>
    %173 = arith.addf %170, %172 : vector<8x1xf32>
    %174 = vector.broadcast %166 : vector<8x1xf32> to vector<8x8xf32>
    %175 = arith.mulf %174, %150#2 : vector<8x8xf32>
    %cst_58 = arith.constant dense<0.000000e+00> : vector<8x8xf32>
    %176 = tpu.matmul %169, %158, %cst_58 {dimension_numbers = #tpu.dot_dimension_numbers<[1], [0], [0], [1], [0, 0, 1, 1], [], []>} : vector<8x8xf32>, vector<8x8xf32>, vector<8x8xf32> -> vector<8x8xf32>
    %177 = arith.addf %175, %176 : vector<8x8xf32>
    %178 = tpu.reciprocal %173 {approx = true} : vector<8x1xf32> -> vector<8x1xf32>
    %179 = vector.broadcast %178 : vector<8x1xf32> to vector<8x8xf32>
    %180 = arith.mulf %177, %179 : vector<8x8xf32>
    %181 = tpu.concatenate %63, %102, %141, %180 in 1 : vector<8x8xf32>, vector<8x8xf32>, vector<8x8xf32>, vector<8x8xf32> -> vector<8x32xf32>
    %c0_i32_59 = arith.constant 0 : i32
    %182 = arith.cmpi eq, %arg2, %c0_i32_59 : i32
    %183 = arith.extui %182 : i1 to i32
    %c0_i32_60 = arith.constant 0 : i32
    %184 = arith.cmpi ne, %183, %c0_i32_60 : i32
    scf.if %184 {
      %cst_70 = arith.constant 0.000000e+00 : f32
      %195 = vector.broadcast %cst_70 : f32 to vector<8x32xf32>
      %c0_71 = arith.constant 0 : index
      %c0_72 = arith.constant 0 : index
      %196 = vector.load %arg13[%c0_71, %c0_72] : memref<8x32xf32, #tpu.memory_space<vmem>>, vector<8x32xf32>
      tpu.vector_store %arg13[%c0_71, %c0_72], %195 {strides = array<i32>} : memref<8x32xf32, #tpu.memory_space<vmem>>, vector<8x32xf32>,
    } else {
    }
    %c0_61 = arith.constant 0 : index
    %c0_62 = arith.constant 0 : index
    %185 = vector.load %arg13[%c0_61, %c0_62] : memref<8x32xf32, #tpu.memory_space<vmem>>, vector<8x32xf32>
    %186 = arith.index_cast %arg2 : i32 to index
    %c0_63 = arith.constant 0 : index
    %c0_64 = arith.constant 0 : index
    %187 = vector.load %arg8[%186, %c0_63, %c0_64] : memref<1x32x32xf32, #tpu.memory_space<vmem>>, vector<1x32x32xf32>
    %188 = vector.shape_cast %187 : vector<1x32x32xf32> to vector<32x32xf32>
    %cst_65 = arith.constant dense<0.000000e+00> : vector<8x32xf32>
    %189 = tpu.matmul %181, %188, %cst_65 {dimension_numbers = #tpu.dot_dimension_numbers<[1], [0], [0], [1], [0, 0, 1, 1], [], []>} : vector<8x32xf32>, vector<32x32xf32>, vector<8x32xf32> -> vector<8x32xf32>
    %190 = arith.addf %185, %189 : vector<8x32xf32>
    %c0_66 = arith.constant 0 : index
    %c0_67 = arith.constant 0 : index
    %191 = vector.load %arg13[%c0_66, %c0_67] : memref<8x32xf32, #tpu.memory_space<vmem>>, vector<8x32xf32>
    tpu.vector_store %arg13[%c0_66, %c0_67], %190 {strides = array<i32>} : memref<8x32xf32, #tpu.memory_space<vmem>>, vector<8x32xf32>,
    %c0_i32_68 = arith.constant 0 : i32
    %192 = arith.cmpi eq, %arg2, %c0_i32_68 : i32
    %193 = arith.extui %192 : i1 to i32
    %c0_i32_69 = arith.constant 0 : i32
    %194 = arith.cmpi ne, %193, %c0_i32_69 : i32
    scf.if %194 {
      %c0_70 = arith.constant 0 : index
      %c0_71 = arith.constant 0 : index
      %195 = vector.load %arg13[%c0_70, %c0_71] : memref<8x32xf32, #tpu.memory_space<vmem>>, vector<8x32xf32>
      %c0_72 = arith.constant 0 : index
      %c0_73 = arith.constant 0 : index
      %196 = vector.load %arg9[%c0_72, %c0_73] : memref<1x32xf32, #tpu.memory_space<vmem>>, vector<1x32xf32>
      %197 = vector.broadcast %196 : vector<1x32xf32> to vector<8x32xf32>
      %198 = arith.addf %195, %197 : vector<8x32xf32>
      %c0_74 = arith.constant 0 : index
      %c0_75 = arith.constant 0 : index
      %c0_76 = arith.constant 0 : index
      %199 = vector.load %arg10[%c0_74, %c0_75, %c0_76] : memref<1x8x32xf32, #tpu.memory_space<vmem>>, vector<1x8x32xf32>
      %200 = vector.shape_cast %199 : vector<1x8x32xf32> to vector<8x32xf32>
      %201 = vector.shape_cast %198 : vector<8x32xf32> to vector<1x8x32xf32>
      tpu.vector_store %arg10[%c0_74, %c0_75, %c0_76], %201 {strides = array<i32>} : memref<1x8x32xf32, #tpu.memory_space<vmem>>, vector<1x8x32xf32>,
    } else {
    }
    return
  }
  func.func @transform_0(%arg0: i32, %arg1: i32, %arg2: i32) -> (i32, i32, i32) {
    %c0_i32 = arith.constant 0 : i32
    %c0_i32_0 = arith.constant 0 : i32
    %c0_i32_1 = arith.constant 0 : i32
    return %arg0, %c0_i32, %c0_i32_0 : i32, i32, i32
  }
  func.func @transform_1(%arg0: i32, %arg1: i32, %arg2: i32) -> (i32, i32, i32) {
    %c0_i32 = arith.constant 0 : i32
    %c0_i32_0 = arith.constant 0 : i32
    %c0_i32_1 = arith.constant 0 : i32
    %c0_i32_2 = arith.constant 0 : i32
    return %c0_i32, %c0_i32_0, %c0_i32_1 : i32, i32, i32
  }
  func.func @transform_2(%arg0: i32, %arg1: i32, %arg2: i32) -> (i32, i32, i32) {
    %c0_i32 = arith.constant 0 : i32
    %c0_i32_0 = arith.constant 0 : i32
    %c0_i32_1 = arith.constant 0 : i32
    %c0_i32_2 = arith.constant 0 : i32
    return %c0_i32, %c0_i32_0, %c0_i32_1 : i32, i32, i32
  }
  func.func @transform_3(%arg0: i32, %arg1: i32, %arg2: i32) -> (i32, i32, i32) {
    %c0_i32 = arith.constant 0 : i32
    %c0_i32_0 = arith.constant 0 : i32
    %c0_i32_1 = arith.constant 0 : i32
    %c0_i32_2 = arith.constant 0 : i32
    return %c0_i32, %c0_i32_0, %c0_i32_1 : i32, i32, i32
  }
  func.func @transform_4(%arg0: i32, %arg1: i32, %arg2: i32) -> (i32, i32, i32) {
    %c0_i32 = arith.constant 0 : i32
    %c0_i32_0 = arith.constant 0 : i32
    %c0_i32_1 = arith.constant 0 : i32
    %c0_i32_2 = arith.constant 0 : i32
    return %c0_i32, %c0_i32_0, %c0_i32_1 : i32, i32, i32
  }
  func.func @transform_5(%arg0: i32, %arg1: i32, %arg2: i32) -> (i32, i32, i32) {
    %c0_i32 = arith.constant 0 : i32
    %c0_i32_0 = arith.constant 0 : i32
    %c0_i32_1 = arith.constant 0 : i32
    %c0_i32_2 = arith.constant 0 : i32
    return %c0_i32, %c0_i32_0, %c0_i32_1 : i32, i32, i32
  }
  func.func @transform_6(%arg0: i32, %arg1: i32, %arg2: i32) -> (i32, i32) {
    %c0_i32 = arith.constant 0 : i32
    %c0_i32_0 = arith.constant 0 : i32
    %c0_i32_1 = arith.constant 0 : i32
    return %c0_i32, %c0_i32_0 : i32, i32
  }
  func.func @transform_7(%arg0: i32, %arg1: i32, %arg2: i32) -> (i32, i32, i32) {
    %c0_i32 = arith.constant 0 : i32
    %c0_i32_0 = arith.constant 0 : i32
    return %arg0, %arg1, %c0_i32 : i32, i32, i32
  }
}

</mosaic_0001>

<llo_original>
// kernel: tpu_custom_call.1
$region0: #{tpu_custom_call.1}
  #allocation0 [shape = 'u32[]', space=smem, size = 0x4, offset = 0x4, fixed_abs, tag = 'smem constant byte address 0x4 - core index']
  #allocation1 [shape = 'u32[144,128]{1,0:T(1,128)}', space=vmem, size = 0x12000, scoped, tag = 'internal scratch']
  #allocation2 [shape = 'f32[4,8,8]{2,1,0:T(8,128)}', space=vmem, size = 0x4000, scoped, tag = 'scratch operand']
  #allocation3 [shape = 'f32[4,8,8]{2,1,0:T(8,128)}', space=vmem, size = 0x4000, scoped, tag = 'scratch operand']
  #allocation4 [shape = 'f32[8,32]{1,0:T(8,128)}', space=vmem, size = 0x1000, scoped, tag = 'scratch operand']
  %s0 = inlined_call_operand.hbm [shape: f32[2,8,32], index: 0, kind: input, shape index: {}]
  %s1 = inlined_call_operand.hbm [shape: f32[1,32,32], index: 1, kind: input, shape index: {}]
  %s2 = inlined_call_operand.hbm [shape: f32[1,32,32], index: 2, kind: input, shape index: {}]
  %s3 = inlined_call_operand.hbm [shape: f32[1,32,32], index: 3, kind: input, shape index: {}]
  %s4 = inlined_call_operand.vmem [shape: f32[1,3,32], index: 4, kind: input, shape index: {}]
  %s5 = inlined_call_operand.hbm [shape: f32[1,32,32], index: 5, kind: input, shape index: {}]
  %s6 = inlined_call_operand.vmem [shape: f32[1,32], index: 6, kind: input, shape index: {}]
  %s7 = inlined_call_operand.hbm [shape: f32[2,8,32], index: 7, kind: output, shape index: {}]
  %s8 = sld [smem:[#allocation0]]
  $region121: #{tpu_custom_call.1} parent=0
    _
  %s10 = ssub.s32 1, %s8
  %s11 = scalar_select 0, %s10, %s8
  $region1: #{tpu_custom_call.1} parent=0
    #allocation5 [shape = 'u8[8192]{0}', space=vmem, size = 0x2000, scoped, tag = 'input window, operand 0']
    #allocation6 [shape = 's32[2]{0}', space=sflag, size = 0x8, scoped, tag = 'scoped memory for tpu_custom_call.1']
    #allocation7 [shape = 's32[2]{0}', space=sflag, size = 0x8, scoped, tag = 'scoped memory for tpu_custom_call.1']
    #allocation8 [shape = 'u8[16384]{0}', space=vmem, size = 0x4000, scoped, tag = 'input window, operand 1, single buffered']
    #allocation9 [shape = 's32[1]{0}', space=sflag, size = 0x4, scoped, tag = 'scoped memory for tpu_custom_call.1']
    #allocation10 [shape = 'u8[16384]{0}', space=vmem, size = 0x4000, scoped, tag = 'input window, operand 2, single buffered']
    #allocation11 [shape = 'u8[16384]{0}', space=vmem, size = 0x4000, scoped, tag = 'input window, operand 3, single buffered']
    #allocation12 [shape = 's32[1]{0}', space=sflag, size = 0x4, scoped, tag = 'scoped memory for tpu_custom_call.1']
    #allocation13 [shape = 'u8[16384]{0}', space=vmem, size = 0x4000, scoped, tag = 'input window, operand 5, single buffered']
    #allocation14 [shape = 'u8[8192]{0}', space=vmem, size = 0x2000, scoped, tag = 'output window, operand 0']
    %12 = vsyncpa [#allocation6], 0
    %s13 = scalar_lea.sflag [#allocation6], 1
    %14 = vsyncpa %s13, 0
    %15 = vsyncpa [#allocation9], 0
    %16 = vsyncpa [#allocation12], 0
    %17 = vsyncpa [#allocation7], 0
    %s18 = scalar_lea.sflag [#allocation7], 1
    %19 = vsyncpa %s18, 0
    loop: start=0, step=1, limit=4
    $region2: #{tpu_custom_call.1} parent=1 // loop_pre_header
      _
    $region3: #{tpu_custom_call.1} parent=1 // loop_header
      %s21 = sphi 0, %s25
      %p22 = scmp.ge.s32.totalorder %s21, 4
      %s28 = sphi 0, %s47
      %s29 = sphi 0, %s43
      %s30 = sphi 0, %s39
      %s31 = sphi 0, %s28
      %s32 = sphi 0, %s29
      %s33 = sphi 0, %s30
      %s34 = sphi 0, %s31
      %s35 = sphi 0, %s32
      %s36 = sphi 0, %s33
      %s50 = sphi 0, %s52
      %s53 = sphi 0, %s50
      %s54 = sphi 0, %s53
      %s70 = sphi 0, %s54
      %s74 = sphi 0, %s74
      %s76 = sphi 0, %s74
      %s77 = sphi 0, %s76
      %s91 = sphi 0, %s77
      %s95 = sphi 0, %s95
      %s97 = sphi 0, %s95
      %s98 = sphi 0, %s97
      %s112 = sphi 0, %s98
      %s116 = sphi 0, %s116
      %s118 = sphi 0, %s116
      %s119 = sphi 0, %s118
      %s133 = sphi 0, %s119
      %s137 = sphi 0, %s137
      %s139 = sphi 0, %s137
      %s140 = sphi 0, %s139
      %s154 = sphi 0, %s140
      %s158 = sphi 0, %s158
      %s160 = sphi 0, %s158
      %s161 = sphi 0, %s160
      %s175 = sphi 0, %s161
      %s179 = sphi 0, %s179
      %s181 = sphi 0, %s179
      %s182 = sphi 0, %s181
      %s196 = sphi 0, %s182
      %s204 = sphi 0, %s206
      %s207 = sphi 0, %s204
      %s208 = sphi 0, %s207
      %s224 = sphi 0, %s208
    $region4: #{tpu_custom_call.1} parent=1 // loop_header_branch
      %24 = sbr.rel (%p22) target = $region8
    $region5: #{tpu_custom_call.1} parent=1 // loop_body
      %s26 = ssub.s32 %s21, 1
      %s27 = ssub.s32 %s21, 2
      %s37 = sadd.s32 1, %s30
      %p38 = scmp.ge.s32.totalorder %s37, 1
      %s39 = scalar_select %p38, 0, %s37
      %s40 = sadd.s32 1, %s29
      %s41 = scalar_select %p38, %s40, %s29
      %p42 = scmp.ge.s32.totalorder %s41, 1
      %s43 = scalar_select %p42, 0, %s41
      %s44 = sadd.s32 1, %s28
      %s45 = scalar_select %p42, %s44, %s28
      %p46 = scmp.ge.s32.totalorder %s45, 2
      %s47 = scalar_select %p46, 0, %s45
      %s48 = ssub.s32 %s28, %s47
      %p49 = scmp.eq.s32.totalorder %s48, 0
      %s51 = sadd.s32 %s50, 1
      %s52 = scalar_select %p49, %s50, %s51
      %p55 = pneg %p49
      %p56 = scmp.eq.s32.totalorder %s21, 1
      %p57 = por %p55, %p56
      %p58 = scmp.ne.s32.totalorder %s50, %s53
      %p59 = scmp.eq.s32.totalorder %s21, 0
      %p60 = por %p58, %p59
      %p61 = scmp.ne.s32.totalorder %s50, %s53
      %p62 = scmp.eq.s32.totalorder %s26, 1
      %p63 = por %p61, %p62
      %p64 = scmp.ne.s32.totalorder %s53, %s54
      %p65 = scmp.eq.s32.totalorder %s26, 0
      %p66 = por %p64, %p65
      %p67 = scmp.ne.s32.totalorder %s53, %s54
      %p68 = scmp.eq.s32.totalorder %s27, 1
      %p69 = por %p67, %p68
      %p71 = scmp.ne.s32.totalorder %s54, %s70
      %p72 = scmp.eq.s32.totalorder %s27, 0
      %p73 = por %p71, %p72
      %s75 = sadd.s32 %s74, 1
      %p78 = scmp.eq.s32.totalorder %s21, 1
      %p79 = scmp.ne.s32.totalorder %s74, %s76
      %p80 = scmp.eq.s32.totalorder %s21, 0
      %p81 = por %p79, %p80
      %p82 = scmp.ne.s32.totalorder %s74, %s76
      %p83 = scmp.eq.s32.totalorder %s26, 1
      %p84 = por %p82, %p83
      %p85 = scmp.ne.s32.totalorder %s76, %s77
      %p86 = scmp.eq.s32.totalorder %s26, 0
      %p87 = por %p85, %p86
      %p88 = scmp.ne.s32.totalorder %s76, %s77
      %p89 = scmp.eq.s32.totalorder %s27, 1
      %p90 = por %p88, %p89
      %p92 = scmp.ne.s32.totalorder %s77, %s91
      %p93 = scmp.eq.s32.totalorder %s27, 0
      %p94 = por %p92, %p93
      %s96 = sadd.s32 %s95, 1
      %p99 = scmp.eq.s32.totalorder %s21, 1
      %p100 = scmp.ne.s32.totalorder %s95, %s97
      %p101 = scmp.eq.s32.totalorder %s21, 0
      %p102 = por %p100, %p101
      %p103 = scmp.ne.s32.totalorder %s95, %s97
      %p104 = scmp.eq.s32.totalorder %s26, 1
      %p105 = por %p103, %p104
      %p106 = scmp.ne.s32.totalorder %s97, %s98
      %p107 = scmp.eq.s32.totalorder %s26, 0
      %p108 = por %p106, %p107
      %p109 = scmp.ne.s32.totalorder %s97, %s98
      %p110 = scmp.eq.s32.totalorder %s27, 1
      %p111 = por %p109, %p110
      %p113 = scmp.ne.s32.totalorder %s98, %s112
      %p114 = scmp.eq.s32.totalorder %s27, 0
      %p115 = por %p113, %p114
      %s117 = sadd.s32 %s116, 1
      %p120 = scmp.eq.s32.totalorder %s21, 1
      %p121 = scmp.ne.s32.totalorder %s116, %s118
      %p122 = scmp.eq.s32.totalorder %s21, 0
      %p123 = por %p121, %p122
      %p124 = scmp.ne.s32.totalorder %s116, %s118
      %p125 = scmp.eq.s32.totalorder %s26, 1
      %p126 = por %p124, %p125
      %p127 = scmp.ne.s32.totalorder %s118, %s119
      %p128 = scmp.eq.s32.totalorder %s26, 0
      %p129 = por %p127, %p128
      %p130 = scmp.ne.s32.totalorder %s118, %s119
      %p131 = scmp.eq.s32.totalorder %s27, 1
      %p132 = por %p130, %p131
      %p134 = scmp.ne.s32.totalorder %s119, %s133
      %p135 = scmp.eq.s32.totalorder %s27, 0
      %p136 = por %p134, %p135
      %s138 = sadd.s32 %s137, 1
      %p141 = scmp.eq.s32.totalorder %s21, 1
      %p142 = scmp.ne.s32.totalorder %s137, %s139
      %p143 = scmp.eq.s32.totalorder %s21, 0
      %p144 = por %p142, %p143
      %p145 = scmp.ne.s32.totalorder %s137, %s139
      %p146 = scmp.eq.s32.totalorder %s26, 1
      %p147 = por %p145, %p146
      %p148 = scmp.ne.s32.totalorder %s139, %s140
      %p149 = scmp.eq.s32.totalorder %s26, 0
      %p150 = por %p148, %p149
      %p151 = scmp.ne.s32.totalorder %s139, %s140
      %p152 = scmp.eq.s32.totalorder %s27, 1
      %p153 = por %p151, %p152
      %p155 = scmp.ne.s32.totalorder %s140, %s154
      %p156 = scmp.eq.s32.totalorder %s27, 0
      %p157 = por %p155, %p156
      %s159 = sadd.s32 %s158, 1
      %p162 = scmp.eq.s32.totalorder %s21, 1
      %p163 = scmp.ne.s32.totalorder %s158, %s160
      %p164 = scmp.eq.s32.totalorder %s21, 0
      %p165 = por %p163, %p164
      %p166 = scmp.ne.s32.totalorder %s158, %s160
      %p167 = scmp.eq.s32.totalorder %s26, 1
      %p168 = por %p166, %p167
      %p169 = scmp.ne.s32.totalorder %s160, %s161
      %p170 = scmp.eq.s32.totalorder %s26, 0
      %p171 = por %p169, %p170
      %p172 = scmp.ne.s32.totalorder %s160, %s161
      %p173 = scmp.eq.s32.totalorder %s27, 1
      %p174 = por %p172, %p173
      %p176 = scmp.ne.s32.totalorder %s161, %s175
      %p177 = scmp.eq.s32.totalorder %s27, 0
      %p178 = por %p176, %p177
      %s180 = sadd.s32 %s179, 1
      %p183 = scmp.eq.s32.totalorder %s21, 1
      %p184 = scmp.ne.s32.totalorder %s179, %s181
      %p185 = scmp.eq.s32.totalorder %s21, 0
      %p186 = por %p184, %p185
      %p187 = scmp.ne.s32.totalorder %s179, %s181
      %p188 = scmp.eq.s32.totalorder %s26, 1
      %p189 = por %p187, %p188
      %p190 = scmp.ne.s32.totalorder %s181, %s182
      %p191 = scmp.eq.s32.totalorder %s26, 0
      %p192 = por %p190, %p191
      %p193 = scmp.ne.s32.totalorder %s181, %s182
      %p194 = scmp.eq.s32.totalorder %s27, 1
      %p195 = por %p193, %p194
      %p197 = scmp.ne.s32.totalorder %s182, %s196
      %p198 = scmp.eq.s32.totalorder %s27, 0
      %p199 = por %p197, %p198
      %s200 = ssub.s32 %s28, %s47
      %s201 = ssub.s32 %s29, %s43
      %s202 = sor.u32 %s200, %s201
      %p203 = scmp.eq.s32.totalorder %s202, 0
      %s205 = sadd.s32 %s204, 1
      %s206 = scalar_select %p203, %s204, %s205
      %p209 = pneg %p203
      %p210 = scmp.eq.s32.totalorder %s21, 1
      %p211 = por %p209, %p210
      %p212 = scmp.ne.s32.totalorder %s204, %s207
      %p213 = scmp.eq.s32.totalorder %s21, 0
      %p214 = por %p212, %p213
      %p215 = scmp.ne.s32.totalorder %s204, %s207
      %p216 = scmp.eq.s32.totalorder %s26, 1
      %p217 = por %p215, %p216
      %p218 = scmp.ne.s32.totalorder %s207, %s208
      %p219 = scmp.eq.s32.totalorder %s26, 0
      %p220 = por %p218, %p219
      %p221 = scmp.ne.s32.totalorder %s207, %s208
      %p222 = scmp.eq.s32.totalorder %s27, 1
      %p223 = por %p221, %p222
      %p225 = scmp.ne.s32.totalorder %s208, %s224
      %p226 = scmp.eq.s32.totalorder %s27, 0
      %p227 = por %p225, %p226
      %p228 = scmp.le.s32.totalorder 1, %s21
      %p229 = scmp.lt.s32.totalorder %s21, 3
      %p230 = pnand %p228, %p229
      %p231 = pneg %p230
      // Predicated region
      $region9: #{tpu_custom_call.1} parent=5 // pred_check
        _
      $region10: #{tpu_custom_call.1} parent=5 // pred_check_branch
        %233 = sbr.rel (%p230) target = $region12
      $region11: #{tpu_custom_call.1} parent=5 // pred_region
        %s234 = ssub.s32 %s21, 1
        // Predicated region
        $region13: #{tpu_custom_call.1} parent=11 // pred_check
          %p235 = pneg %p87
        $region14: #{tpu_custom_call.1} parent=11 // pred_check_branch
          %237 = sbr.rel (%p235) target = $region16
        $region15: #{tpu_custom_call.1} parent=11 // pred_region
          %s239 = ssub.s32 512, 512
          %240 = vsyncadd [#allocation9], %s239
          %s241 = sshll.u32 [#allocation8], 4
          %s242 = int_to_ptr.vmem [resolvable:$true] %s241
          %247 = dma.hbm_to_vmem [thread:$0]  %s1, 512, %s242, [#allocation9], 128, 128, 8
        $region16: #{tpu_custom_call.1} parent=11 // pred_fallthru
          _
        // Predicated region
        $region17: #{tpu_custom_call.1} parent=11 // pred_check
          %p248 = pneg %p108
        $region18: #{tpu_custom_call.1} parent=11 // pred_check_branch
          %250 = sbr.rel (%p248) target = $region20
        $region19: #{tpu_custom_call.1} parent=11 // pred_region
          %s252 = ssub.s32 512, 512
          %253 = vsyncadd [#allocation9], %s252
          %s254 = sshll.u32 [#allocation10], 4
          %s255 = int_to_ptr.vmem [resolvable:$true] %s254
          %260 = dma.hbm_to_vmem [thread:$0]  %s2, 512, %s255, [#allocation9], 128, 128, 8
        $region20: #{tpu_custom_call.1} parent=11 // pred_fallthru
          _
        // Predicated region
        $region21: #{tpu_custom_call.1} parent=11 // pred_check
          %p261 = pneg %p129
        $region22: #{tpu_custom_call.1} parent=11 // pred_check_branch
          %263 = sbr.rel (%p261) target = $region24
        $region23: #{tpu_custom_call.1} parent=11 // pred_region
          %s265 = ssub.s32 512, 512
          %266 = vsyncadd [#allocation12], %s265
          %s267 = sshll.u32 [#allocation11], 4
          %s268 = int_to_ptr.vmem [resolvable:$true] %s267
          %273 = dma.hbm_to_vmem [thread:$0]  %s3, 512, %s268, [#allocation12], 128, 128, 8
        $region24: #{tpu_custom_call.1} parent=11 // pred_fallthru
          _
        // Predicated region
        $region25: #{tpu_custom_call.1} parent=11 // pred_check
          %p274 = pneg %p150
        $region26: #{tpu_custom_call.1} parent=11 // pred_check_branch
          %276 = sbr.rel (%p274) target = $region28
        $region27: #{tpu_custom_call.1} parent=11 // pred_region
          _
        $region28: #{tpu_custom_call.1} parent=11 // pred_fallthru
          _
        // Predicated region
        $region29: #{tpu_custom_call.1} parent=11 // pred_check
          %p277 = pneg %p171
        $region30: #{tpu_custom_call.1} parent=11 // pred_check_branch
          %279 = sbr.rel (%p277) target = $region32
        $region31: #{tpu_custom_call.1} parent=11 // pred_region
          %s281 = ssub.s32 512, 512
          %282 = vsyncadd [#allocation12], %s281
          %s283 = sshll.u32 [#allocation13], 4
          %s284 = int_to_ptr.vmem [resolvable:$true] %s283
          %289 = dma.hbm_to_vmem [thread:$0]  %s5, 512, %s284, [#allocation12], 128, 128, 8
        $region32: #{tpu_custom_call.1} parent=11 // pred_fallthru
          _
        // Predicated region
        $region33: #{tpu_custom_call.1} parent=11 // pred_check
          %p290 = pneg %p192
        $region34: #{tpu_custom_call.1} parent=11 // pred_check_branch
          %292 = sbr.rel (%p290) target = $region36
        $region35: #{tpu_custom_call.1} parent=11 // pred_region
          _
        $region36: #{tpu_custom_call.1} parent=11 // pred_fallthru
          _
      $region12: #{tpu_custom_call.1} parent=5 // pred_fallthru
        _
      %p293 = scmp.lt.s32.totalorder %s21, 2
      // Predicated region
      $region37: #{tpu_custom_call.1} parent=5 // pred_check
        %p294 = pneg %p293
      $region38: #{tpu_custom_call.1} parent=5 // pred_check_branch
        %296 = sbr.rel (%p294) target = $region40
      $region39: #{tpu_custom_call.1} parent=5 // pred_region
        // Predicated region
        $region41: #{tpu_custom_call.1} parent=39 // pred_check
          %p297 = pneg %p60
        $region42: #{tpu_custom_call.1} parent=39 // pred_check_branch
          %299 = sbr.rel (%p297) target = $region44
        $region43: #{tpu_custom_call.1} parent=39 // pred_region
          %s300 = sand.u32 %s50, 1
          %s301 = scalar_lea.sflag [#allocation6], %s300
          %s302 = sand.u32 %s50, 1
          %s303 = smul.addr %s302, 8
          %s304 = scalar_lea.vmem [#allocation5], %s303
          %s306 = ssub.s32 128, 128
          %307 = vsyncadd %s301, %s306
          %s308 = smul.addr %s28, 128
          %s309 = scalar_lea.hbm %s0, %s308
          %s311 = sshll.u32 %s304, 4
          %s312 = int_to_ptr.vmem [resolvable:$true] %s311
          %314 = dma.hbm_to_vmem [thread:$0]  %s309, 128, %s312, %s301
        $region44: #{tpu_custom_call.1} parent=39 // pred_fallthru
          _
      $region40: #{tpu_custom_call.1} parent=5 // pred_fallthru
        _
      %p315 = scmp.le.s32.totalorder 1, %s21
      %p316 = scmp.lt.s32.totalorder %s21, 3
      %p317 = pnand %p315, %p316
      %p318 = pneg %p317
      // Predicated region
      $region45: #{tpu_custom_call.1} parent=5 // pred_check
        _
      $region46: #{tpu_custom_call.1} parent=5 // pred_check_branch
        %320 = sbr.rel (%p317) target = $region48
      $region47: #{tpu_custom_call.1} parent=5 // pred_region
        %s321 = ssub.s32 %s21, 1
        %s322 = sand.u32 %s53, 1
        %s323 = scalar_lea.sflag [#allocation6], %s322
        %s324 = sand.u32 %s53, 1
        %s325 = smul.addr %s324, 8
        %s326 = scalar_lea.vmem [#allocation5], %s325
        // Predicated region
        $region49: #{tpu_custom_call.1} parent=47 // pred_check
          %p327 = pneg %p66
        $region50: #{tpu_custom_call.1} parent=47 // pred_check_branch
          %329 = sbr.rel (%p327) target = $region52
        $region51: #{tpu_custom_call.1} parent=47 // pred_region
          %330 = dma.done %s323, 128
        $region52: #{tpu_custom_call.1} parent=47 // pred_fallthru
          _
        // Predicated region
        $region53: #{tpu_custom_call.1} parent=47 // pred_check
          %p331 = pneg %p87
        $region54: #{tpu_custom_call.1} parent=47 // pred_check_branch
          %333 = sbr.rel (%p331) target = $region56
        $region55: #{tpu_custom_call.1} parent=47 // pred_region
          %334 = dma.done [#allocation9], 512
        $region56: #{tpu_custom_call.1} parent=47 // pred_fallthru
          _
        // Predicated region
        $region57: #{tpu_custom_call.1} parent=47 // pred_check
          %p335 = pneg %p108
        $region58: #{tpu_custom_call.1} parent=47 // pred_check_branch
          %337 = sbr.rel (%p335) target = $region60
        $region59: #{tpu_custom_call.1} parent=47 // pred_region
          %338 = dma.done [#allocation9], 512
        $region60: #{tpu_custom_call.1} parent=47 // pred_fallthru
          _
        // Predicated region
        $region61: #{tpu_custom_call.1} parent=47 // pred_check
          %p339 = pneg %p129
        $region62: #{tpu_custom_call.1} parent=47 // pred_check_branch
          %341 = sbr.rel (%p339) target = $region64
        $region63: #{tpu_custom_call.1} parent=47 // pred_region
          %342 = dma.done [#allocation12], 512
        $region64: #{tpu_custom_call.1} parent=47 // pred_fallthru
          _
        // Predicated region
        $region65: #{tpu_custom_call.1} parent=47 // pred_check
          %p343 = pneg %p171
        $region66: #{tpu_custom_call.1} parent=47 // pred_check_branch
          %345 = sbr.rel (%p343) target = $region68
        $region67: #{tpu_custom_call.1} parent=47 // pred_region
          %346 = dma.done [#allocation12], 512
        $region68: #{tpu_custom_call.1} parent=47 // pred_fallthru
          _
        %s347 = sand.u32 %s53, 1
        %s348 = scalar_lea.sflag [#allocation6], %s347
        %s349 = sand.u32 %s53, 1
        %s350 = smul.addr %s349, 8
        %s351 = scalar_lea.vmem [#allocation5], %s350
        %p352 = pneg %p66
        %p353 = pneg %p63
        %p354 = pneg %p87
        %p355 = pneg %p84
        %p356 = pneg %p108
        %p357 = pneg %p105
        %p358 = pneg %p129
        %p359 = pneg %p126
        %p360 = pneg %p150
        %p361 = pneg %p147
        %p362 = pneg %p171
        %p363 = pneg %p168
        %p364 = pneg %p192
        %p365 = pneg %p189
        %p366 = pneg %p220
        %p367 = pneg %p217
        %s368 = sand.u32 %s207, 1
        %s369 = scalar_lea.sflag [#allocation7], %s368
        %s370 = sand.u32 %s207, 1
        %s371 = smul.addr %s370, 8
        %s372 = scalar_lea.vmem [#allocation14], %s371
        %s373 = smul.u32 %s33, 4
        %s374 = scalar_lea.vmem %s4, %s373
        %v375 = vld [vmem:[%s374] sm:$0x7]
        %p376 = scmp.eq.s32.totalorder %s32, 0
        // Predicated region
        $region69: #{tpu_custom_call.1} parent=47 // pred_check
          %p377 = pneg %p376
        $region70: #{tpu_custom_call.1} parent=47 // pred_check_branch
          %379 = sbr.rel (%p377) target = $region72
        $region71: #{tpu_custom_call.1} parent=47 // pred_region
          %v380 = vld [vmem:[%s326] sm:$0xff]
          %s381 = smul.u32 %s33, 32
          %s382 = scalar_lea.vmem [#allocation10], %s381
          %v383 = vld [vmem:[%s382] sm:$0xff]
          %v384 = vld [vmem:[%s382 + $0x8] sm:$0xff]
          %v385 = vld [vmem:[%s382 + $0x10] sm:$0xff]
          %v386 = vld [vmem:[%s382 + $0x18] sm:$0xff]
          %v387 = vlaneseq
          %v388 = vshrl.u32 %v387, 7
          %v389 = vsub.s32 1, %v388
          %v390 = vrot.slane %v375, %v389
          %vm391 = vcmask 261120
          %v393 = vsel %vm391, %v380, 0
          %395 = vmatprep.subr.mxu0 0.0
          %396 = vmatpush1.msra.mxu0 0.0
          %397 = vmatprep.subr.mxu0 0.0
          %398 = vmatpush1.msra.mxu0 0.0
          %399 = vmatprep.subr.mxu0 0.0
          %400 = vmatpush1.msra.mxu0 0.0
          %401 = vmatprep.subr.mxu0 0.0
          %402 = vmatpush1.msra.mxu0 0.0
          %403 = vmatprep.subr.mxu0 0.0
          %404 = vmatpush1.msra.mxu0 0.0
          %405 = vmatprep.subr.mxu0 0.0
          %406 = vmatpush1.msra.mxu0 0.0
          %407 = vmatprep.subr.mxu0 0.0
          %408 = vmatpush1.msra.mxu0 0.0
          %409 = vmatprep.subr.mxu0 0.0
          %410 = vmatpush1.msra.mxu0 0.0
          %411 = vmatprep.subr.mxu0 0.0
          %412 = vmatpush1.msra.mxu0 0.0
          %413 = vmatprep.subr.mxu0 0.0
          %414 = vmatpush1.msra.mxu0 0.0
          %415 = vmatprep.subr.mxu0 0.0
          %416 = vmatpush1.msra.mxu0 0.0
          %417 = vmatprep.subr.mxu0 0.0
          %418 = vmatpush1.msra.mxu0 0.0
          %419 = vmatprep.subr.mxu0 0.0
          %420 = vmatpush1.msra.mxu0 %v386
          %421 = vmatprep.subr.mxu0 0.0
          %422 = vmatpush1.msra.mxu0 %v385
          %423 = vmatprep.subr.mxu0 0.0
          %424 = vmatpush1.msra.mxu0 %v384
          %425 = vmatprep.subr.mxu0 0.0
          %426 = vmatpush1.msra.mxu0 %v383
          %427 = vmatprep.subr.mxu0 0.0
          %428 = vmatpush2.msra.mxu0 0.0
          %429 = vmatprep.subr.mxu0 0.0
          %430 = vmatpush2.msra.mxu0 0.0
          %431 = vmatprep.subr.mxu0 0.0
          %432 = vmatpush2.msra.mxu0 0.0
          %433 = vmatprep.subr.mxu0 0.0
          %434 = vmatpush2.msra.mxu0 0.0
          %435 = vmatprep.subr.mxu0 0.0
          %436 = vmatpush2.msra.mxu0 0.0
          %437 = vmatprep.subr.mxu0 0.0
          %438 = vmatpush2.msra.mxu0 0.0
          %439 = vmatprep.subr.mxu0 0.0
          %440 = vmatpush2.msra.mxu0 0.0
          %441 = vmatprep.subr.mxu0 0.0
          %442 = vmatpush2.msra.mxu0 0.0
          %443 = vmatprep.subr.mxu0 0.0
          %444 = vmatpush2.msra.mxu0 0.0
          %445 = vmatprep.subr.mxu0 0.0
          %446 = vmatpush2.msra.mxu0 0.0
          %447 = vmatprep.subr.mxu0 0.0
          %448 = vmatpush2.msra.mxu0 0.0
          %449 = vmatprep.subr.mxu0 0.0
          %450 = vmatpush2.msra.mxu0 0.0
          %451 = vmatprep.subr.mxu0 0.0
          %452 = vmatpush2.msra.mxu0 0.0
          %453 = vmatprep.subr.mxu0 0.0
          %454 = vmatpush2.msra.mxu0 0.0
          %455 = vmatprep.subr.mxu0 0.0
          %456 = vmatpush2.msra.mxu0 0.0
          %457 = vmatprep.subr.mxu0 0.0
          %458 = vmatpush2.msra.mxu0 0.0
          %459 = vmatprep.mubr.f32.mxu0 0.0
          %460 = vmatmul.mubr.f32.gmra.mxu0 %v393
          %v461 = vpop.f32.mrf.mxu0
          %v462 = vadd.f32 %v390, %v461
          %v463 = vpop.f32.mrf.mxu0
          %464 = vdwg.mxu0
          %s465 = scalar_lea.vmem [#allocation11], %s381
          %v466 = vld [vmem:[%s465] sm:$0xff]
          %v467 = vld [vmem:[%s465 + $0x8] sm:$0xff]
          %v468 = vld [vmem:[%s465 + $0x10] sm:$0xff]
          %v469 = vld [vmem:[%s465 + $0x18] sm:$0xff]
          %v470 = vlaneseq
          %v471 = vshrl.u32 %v470, 7
          %v472 = vsub.s32 2, %v471
          %v473 = vrot.slane %v375, %v472
          %474 = vmatprep.subr.mxu0 0.0
          %475 = vmatpush1.msra.mxu0 0.0
          %476 = vmatprep.subr.mxu0 0.0
          %477 = vmatpush1.msra.mxu0 0.0
          %478 = vmatprep.subr.mxu0 0.0
          %479 = vmatpush1.msra.mxu0 0.0
          %480 = vmatprep.subr.mxu0 0.0
          %481 = vmatpush1.msra.mxu0 0.0
          %482 = vmatprep.subr.mxu0 0.0
          %483 = vmatpush1.msra.mxu0 0.0
          %484 = vmatprep.subr.mxu0 0.0
          %485 = vmatpush1.msra.mxu0 0.0
          %486 = vmatprep.subr.mxu0 0.0
          %487 = vmatpush1.msra.mxu0 0.0
          %488 = vmatprep.subr.mxu0 0.0
          %489 = vmatpush1.msra.mxu0 0.0
          %490 = vmatprep.subr.mxu0 0.0
          %491 = vmatpush1.msra.mxu0 0.0
          %492 = vmatprep.subr.mxu0 0.0
          %493 = vmatpush1.msra.mxu0 0.0
          %494 = vmatprep.subr.mxu0 0.0
          %495 = vmatpush1.msra.mxu0 0.0
          %496 = vmatprep.subr.mxu0 0.0
          %497 = vmatpush1.msra.mxu0 0.0
          %498 = vmatprep.subr.mxu0 0.0
          %499 = vmatpush1.msra.mxu0 %v469
          %500 = vmatprep.subr.mxu0 0.0
          %501 = vmatpush1.msra.mxu0 %v468
          %502 = vmatprep.subr.mxu0 0.0
          %503 = vmatpush1.msra.mxu0 %v467
          %504 = vmatprep.subr.mxu0 0.0
          %505 = vmatpush1.msra.mxu0 %v466
          %506 = vmatprep.subr.mxu0 0.0
          %507 = vmatpush2.msra.mxu0 0.0
          %508 = vmatprep.subr.mxu0 0.0
          %509 = vmatpush2.msra.mxu0 0.0
          %510 = vmatprep.subr.mxu0 0.0
          %511 = vmatpush2.msra.mxu0 0.0
          %512 = vmatprep.subr.mxu0 0.0
          %513 = vmatpush2.msra.mxu0 0.0
          %514 = vmatprep.subr.mxu0 0.0
          %515 = vmatpush2.msra.mxu0 0.0
          %516 = vmatprep.subr.mxu0 0.0
          %517 = vmatpush2.msra.mxu0 0.0
          %518 = vmatprep.subr.mxu0 0.0
          %519 = vmatpush2.msra.mxu0 0.0
          %520 = vmatprep.subr.mxu0 0.0
          %521 = vmatpush2.msra.mxu0 0.0
          %522 = vmatprep.subr.mxu0 0.0
          %523 = vmatpush2.msra.mxu0 0.0
          %524 = vmatprep.subr.mxu0 0.0
          %525 = vmatpush2.msra.mxu0 0.0
          %526 = vmatprep.subr.mxu0 0.0
          %527 = vmatpush2.msra.mxu0 0.0
          %528 = vmatprep.subr.mxu0 0.0
          %529 = vmatpush2.msra.mxu0 0.0
          %530 = vmatprep.subr.mxu0 0.0
          %531 = vmatpush2.msra.mxu0 0.0
          %532 = vmatprep.subr.mxu0 0.0
          %533 = vmatpush2.msra.mxu0 0.0
          %534 = vmatprep.subr.mxu0 0.0
          %535 = vmatpush2.msra.mxu0 0.0
          %536 = vmatprep.subr.mxu0 0.0
          %537 = vmatpush2.msra.mxu0 0.0
          %538 = vmatprep.mubr.f32.mxu0 0.0
          %539 = vmatmul.mubr.f32.gmra.mxu0 %v393
          %v540 = vpop.f32.mrf.mxu0
          %v541 = vadd.f32 %v473, %v540
          %v542 = vpop.f32.mrf.mxu0
          %543 = vdwg.mxu0
          %s544 = smul.u32 %s373, 8
          %s545 = scalar_lea.vmem [#allocation2], %s544
          %vm546 = vcmask 64512
          %547 = vst.msk [vmem:[%s545] sm:$0xff] %vm546, %v462
          %s548 = scalar_lea.vmem [#allocation3], %s544
          %549 = vst.msk [vmem:[%s548] sm:$0xff] %vm546, %v541
          %s550 = sadd.s32 %s373, 1
          %552 = vrot.lane.b32.xlu0 %v462, 120
          %v553 = vpop.permute.xlu0 %552
          %s555 = smul.u32 %s550, 8
          %s556 = scalar_lea.vmem [#allocation2], %s555
          %557 = vst.msk [vmem:[%s556] sm:$0xff] %vm546, %v553
          %559 = vrot.lane.b32.xlu0 %v541, 120
          %v560 = vpop.permute.xlu0 %559
          %s562 = scalar_lea.vmem [#allocation3], %s555
          %563 = vst.msk [vmem:[%s562] sm:$0xff] %vm546, %v560
          %s564 = sadd.s32 %s373, 2
          %565 = vrot.lane.b32.xlu0 %v462, 112
          %v566 = vpop.permute.xlu0 %565
          %s568 = smul.u32 %s564, 8
          %s569 = scalar_lea.vmem [#allocation2], %s568
          %570 = vst.msk [vmem:[%s569] sm:$0xff] %vm546, %v566
          %571 = vrot.lane.b32.xlu0 %v541, 112
          %v572 = vpop.permute.xlu0 %571
          %s574 = scalar_lea.vmem [#allocation3], %s568
          %575 = vst.msk [vmem:[%s574] sm:$0xff] %vm546, %v572
          %s576 = sadd.s32 %s373, 3
          %577 = vrot.lane.b32.xlu0 %v462, 104
          %v578 = vpop.permute.xlu0 %577
          %s580 = smul.u32 %s576, 8
          %s581 = scalar_lea.vmem [#allocation2], %s580
          %582 = vst.msk [vmem:[%s581] sm:$0xff] %vm546, %v578
          %583 = vrot.lane.b32.xlu0 %v541, 104
          %v584 = vpop.permute.xlu0 %583
          %s586 = scalar_lea.vmem [#allocation3], %s580
          %587 = vst.msk [vmem:[%s586] sm:$0xff] %vm546, %v584
        $region72: #{tpu_custom_call.1} parent=47 // pred_fallthru
          _
        %s588 = smul.u32 %s32, 8
        %s589 = scalar_lea.vmem %s326, %s588 [#allocation5]
        %v590 = vld [vmem:[%s589] sm:$0xff]
        %s591 = smul.u32 %s33, 32
        %s592 = scalar_lea.vmem [#allocation8], %s591
        %v593 = vld [vmem:[%s592] sm:$0xff]
        %v594 = vld [vmem:[%s592 + $0x8] sm:$0xff]
        %v595 = vld [vmem:[%s592 + $0x10] sm:$0xff]
        %v596 = vld [vmem:[%s592 + $0x18] sm:$0xff]
        %v597 = vlaneseq
        %v598 = vshrl.u32 %v597, 7
        %v599 = vsub.s32 0, %v598
        %v600 = vrot.slane %v375, %v599
        %vm601 = vcmask 261120
        %v603 = vsel %vm601, %v590, 0
        %605 = vmatprep.subr.mxu0 0.0
        %606 = vmatpush1.msra.mxu0 0.0
        %607 = vmatprep.subr.mxu0 0.0
        %608 = vmatpush1.msra.mxu0 0.0
        %609 = vmatprep.subr.mxu0 0.0
        %610 = vmatpush1.msra.mxu0 0.0
        %611 = vmatprep.subr.mxu0 0.0
        %612 = vmatpush1.msra.mxu0 0.0
        %613 = vmatprep.subr.mxu0 0.0
        %614 = vmatpush1.msra.mxu0 0.0
        %615 = vmatprep.subr.mxu0 0.0
        %616 = vmatpush1.msra.mxu0 0.0
        %617 = vmatprep.subr.mxu0 0.0
        %618 = vmatpush1.msra.mxu0 0.0
        %619 = vmatprep.subr.mxu0 0.0
        %620 = vmatpush1.msra.mxu0 0.0
        %621 = vmatprep.subr.mxu0 0.0
        %622 = vmatpush1.msra.mxu0 0.0
        %623 = vmatprep.subr.mxu0 0.0
        %624 = vmatpush1.msra.mxu0 0.0
        %625 = vmatprep.subr.mxu0 0.0
        %626 = vmatpush1.msra.mxu0 0.0
        %627 = vmatprep.subr.mxu0 0.0
        %628 = vmatpush1.msra.mxu0 0.0
        %629 = vmatprep.subr.mxu0 0.0
        %630 = vmatpush1.msra.mxu0 %v596
        %631 = vmatprep.subr.mxu0 0.0
        %632 = vmatpush1.msra.mxu0 %v595
        %633 = vmatprep.subr.mxu0 0.0
        %634 = vmatpush1.msra.mxu0 %v594
        %635 = vmatprep.subr.mxu0 0.0
        %636 = vmatpush1.msra.mxu0 %v593
        %637 = vmatprep.subr.mxu0 0.0
        %638 = vmatpush2.msra.mxu0 0.0
        %639 = vmatprep.subr.mxu0 0.0
        %640 = vmatpush2.msra.mxu0 0.0
        %641 = vmatprep.subr.mxu0 0.0
        %642 = vmatpush2.msra.mxu0 0.0
        %643 = vmatprep.subr.mxu0 0.0
        %644 = vmatpush2.msra.mxu0 0.0
        %645 = vmatprep.subr.mxu0 0.0
        %646 = vmatpush2.msra.mxu0 0.0
        %647 = vmatprep.subr.mxu0 0.0
        %648 = vmatpush2.msra.mxu0 0.0
        %649 = vmatprep.subr.mxu0 0.0
        %650 = vmatpush2.msra.mxu0 0.0
        %651 = vmatprep.subr.mxu0 0.0
        %652 = vmatpush2.msra.mxu0 0.0
        %653 = vmatprep.subr.mxu0 0.0
        %654 = vmatpush2.msra.mxu0 0.0
        %655 = vmatprep.subr.mxu0 0.0
        %656 = vmatpush2.msra.mxu0 0.0
        %657 = vmatprep.subr.mxu0 0.0
        %658 = vmatpush2.msra.mxu0 0.0
        %659 = vmatprep.subr.mxu0 0.0
        %660 = vmatpush2.msra.mxu0 0.0
        %661 = vmatprep.subr.mxu0 0.0
        %662 = vmatpush2.msra.mxu0 0.0
        %663 = vmatprep.subr.mxu0 0.0
        %664 = vmatpush2.msra.mxu0 0.0
        %665 = vmatprep.subr.mxu0 0.0
        %666 = vmatpush2.msra.mxu0 0.0
        %667 = vmatprep.subr.mxu0 0.0
        %668 = vmatpush2.msra.mxu0 0.0
        %669 = vmatprep.mubr.f32.mxu0 0.0
        %670 = vmatmul.mubr.f32.gmra.mxu0 %v603
        %v671 = vpop.f32.mrf.mxu0
        %v672 = vadd.f32 %v600, %v671
        %v673 = vpop.f32.mrf.mxu0
        %674 = vdwg.mxu0
        %v675 = vmul.f32 %v672, 0.35355338
        %v676 = vlaneseq
        %v677 = vshrl.u32 %v676, 7
        %v678 = vlaneseq
        %v679 = vand.u32 %v678, 127
        %vm680 = vcmp.le.s32.totalorder %v679, %v677
        // While loop
        $region73: #{tpu_custom_call.1} parent=47 // loop_pre_header
          _
        $region74: #{tpu_custom_call.1} parent=47 // loop_header
          %s682 = sphi 0, %s684
          %p683 = scmp.ge.s32.totalorder %s682, %s32
          %v687 = vphi -inf, %v777
          %v688 = vphi 0.0, %v788
          %v689 = vphi 0.0, %v863
        $region75: #{tpu_custom_call.1} parent=47 // loop_header_branch
          %686 = sbr.rel (%p683) target = $region79
        $region76: #{tpu_custom_call.1} parent=47 // loop_body
          %s690 = smul.u32 %s682, 8
          %s691 = smul.u32 %s373, 8
          %s692 = sadd.s32 %s690, %s691
          %s693 = scalar_lea.vmem [#allocation2], %s692
          %v694 = vld [vmem:[%s693] sm:$0xff]
          %s695 = scalar_lea.vmem [#allocation3], %s692
          %v696 = vld [vmem:[%s695] sm:$0xff]
          %vm697 = vcmask 64512
          %v699 = vsel %vm697, %v675, 0
          %v702 = vsel %vm697, %v694, 0
          %704 = vmatprep.subr.mxu0 0.0
          %705 = vmatpush1.xpose.msra.mxu0 0.0
          %706 = vmatprep.subr.mxu0 0.0
          %707 = vmatpush1.xpose.msra.mxu0 0.0
          %708 = vmatprep.subr.mxu0 0.0
          %709 = vmatpush1.xpose.msra.mxu0 0.0
          %710 = vmatprep.subr.mxu0 0.0
          %711 = vmatpush1.xpose.msra.mxu0 0.0
          %712 = vmatprep.subr.mxu0 0.0
          %713 = vmatpush1.xpose.msra.mxu0 0.0
          %714 = vmatprep.subr.mxu0 0.0
          %715 = vmatpush1.xpose.msra.mxu0 0.0
          %716 = vmatprep.subr.mxu0 0.0
          %717 = vmatpush1.xpose.msra.mxu0 0.0
          %718 = vmatprep.subr.mxu0 0.0
          %719 = vmatpush1.xpose.msra.mxu0 0.0
          %720 = vmatprep.subr.mxu0 0.0
          %721 = vmatpush1.xpose.msra.mxu0 0.0
          %722 = vmatprep.subr.mxu0 0.0
          %723 = vmatpush1.xpose.msra.mxu0 0.0
          %724 = vmatprep.subr.mxu0 0.0
          %725 = vmatpush1.xpose.msra.mxu0 0.0
          %726 = vmatprep.subr.mxu0 0.0
          %727 = vmatpush1.xpose.msra.mxu0 0.0
          %728 = vmatprep.subr.mxu0 0.0
          %729 = vmatpush1.xpose.msra.mxu0 0.0
          %730 = vmatprep.subr.mxu0 0.0
          %731 = vmatpush1.xpose.msra.mxu0 0.0
          %732 = vmatprep.subr.mxu0 0.0
          %733 = vmatpush1.xpose.msra.mxu0 0.0
          %734 = vmatprep.subr.mxu0 0.0
          %735 = vmatpush1.xpose.msra.mxu0 %v702
          %736 = vmatprep.subr.mxu0 0.0
          %737 = vmatpush2.xpose.msra.mxu0 0.0
          %738 = vmatprep.subr.mxu0 0.0
          %739 = vmatpush2.xpose.msra.mxu0 0.0
          %740 = vmatprep.subr.mxu0 0.0
          %741 = vmatpush2.xpose.msra.mxu0 0.0
          %742 = vmatprep.subr.mxu0 0.0
          %743 = vmatpush2.xpose.msra.mxu0 0.0
          %744 = vmatprep.subr.mxu0 0.0
          %745 = vmatpush2.xpose.msra.mxu0 0.0
          %746 = vmatprep.subr.mxu0 0.0
          %747 = vmatpush2.xpose.msra.mxu0 0.0
          %748 = vmatprep.subr.mxu0 0.0
          %749 = vmatpush2.xpose.msra.mxu0 0.0
          %750 = vmatprep.subr.mxu0 0.0
          %751 = vmatpush2.xpose.msra.mxu0 0.0
          %752 = vmatprep.subr.mxu0 0.0
          %753 = vmatpush2.xpose.msra.mxu0 0.0
          %754 = vmatprep.subr.mxu0 0.0
          %755 = vmatpush2.xpose.msra.mxu0 0.0
          %756 = vmatprep.subr.mxu0 0.0
          %757 = vmatpush2.xpose.msra.mxu0 0.0
          %758 = vmatprep.subr.mxu0 0.0
          %759 = vmatpush2.xpose.msra.mxu0 0.0
          %760 = vmatprep.subr.mxu0 0.0
          %761 = vmatpush2.xpose.msra.mxu0 0.0
          %762 = vmatprep.subr.mxu0 0.0
          %763 = vmatpush2.xpose.msra.mxu0 0.0
          %764 = vmatprep.subr.mxu0 0.0
          %765 = vmatpush2.xpose.msra.mxu0 0.0
          %766 = vmatprep.subr.mxu0 0.0
          %767 = vmatpush2.xpose.msra.mxu0 0.0
          %768 = vmatprep.mubr.f32.mxu0 0.0
          %769 = vmatmul.mubr.f32.gmra.mxu0 %v699
          %v770 = vpop.f32.mrf.mxu0
          %v771 = vadd.f32 0.0, %v770
          %v772 = vpop.f32.mrf.mxu0
          %773 = vdwg.mxu0
          %v774 = vsel %vm697, %v771, -inf
          %775 = vmax.xlane.f32.xlu0 %v774
          %v776 = vpop.xlane.xlu0 %775
          %v777 = vmax.f32 %v687, %v776
          %v778 = vsub.f32 %v687, %v777
          %v779 = vmul.f32 %v778, 1.442695
          %v780 = vpow.pop %v779
          %v781 = vsub.f32 %v771, %v777
          %v782 = vmul.f32 %v781, 1.442695
          %v783 = vpow.pop %v782
          %v784 = vmul.f32 %v780, %v688
          %v785 = vsel %vm697, %v783, 0.0
          %786 = vadd.xlane.f32.xlu0 %v785
          %v787 = vpop.xlane.xlu0 %786
          %v788 = vadd.f32 %v784, %v787
          %v789 = vmul.f32 %v780, %v689
          %v791 = vsel %vm697, %v783, 0
          %793 = vmatprep.subr.mxu0 0.0
          %794 = vmatpush1.msra.mxu0 0.0
          %795 = vmatprep.subr.mxu0 0.0
          %796 = vmatpush1.msra.mxu0 0.0
          %797 = vmatprep.subr.mxu0 0.0
          %798 = vmatpush1.msra.mxu0 0.0
          %799 = vmatprep.subr.mxu0 0.0
          %800 = vmatpush1.msra.mxu0 0.0
          %801 = vmatprep.subr.mxu0 0.0
          %802 = vmatpush1.msra.mxu0 0.0
          %803 = vmatprep.subr.mxu0 0.0
          %804 = vmatpush1.msra.mxu0 0.0
          %805 = vmatprep.subr.mxu0 0.0
          %806 = vmatpush1.msra.mxu0 0.0
          %807 = vmatprep.subr.mxu0 0.0
          %808 = vmatpush1.msra.mxu0 0.0
          %809 = vmatprep.subr.mxu0 0.0
          %810 = vmatpush1.msra.mxu0 0.0
          %811 = vmatprep.subr.mxu0 0.0
          %812 = vmatpush1.msra.mxu0 0.0
          %813 = vmatprep.subr.mxu0 0.0
          %814 = vmatpush1.msra.mxu0 0.0
          %815 = vmatprep.subr.mxu0 0.0
          %816 = vmatpush1.msra.mxu0 0.0
          %817 = vmatprep.subr.mxu0 0.0
          %818 = vmatpush1.msra.mxu0 0.0
          %819 = vmatprep.subr.mxu0 0.0
          %820 = vmatpush1.msra.mxu0 0.0
          %821 = vmatprep.subr.mxu0 0.0
          %822 = vmatpush1.msra.mxu0 0.0
          %823 = vmatprep.subr.mxu0 0.0
          %824 = vmatpush1.msra.mxu0 %v696
          %825 = vmatprep.subr.mxu0 0.0
          %826 = vmatpush2.msra.mxu0 0.0
          %827 = vmatprep.subr.mxu0 0.0
          %828 = vmatpush2.msra.mxu0 0.0
          %829 = vmatprep.subr.mxu0 0.0
          %830 = vmatpush2.msra.mxu0 0.0
          %831 = vmatprep.subr.mxu0 0.0
          %832 = vmatpush2.msra.mxu0 0.0
          %833 = vmatprep.subr.mxu0 0.0
          %834 = vmatpush2.msra.mxu0 0.0
          %835 = vmatprep.subr.mxu0 0.0
          %836 = vmatpush2.msra.mxu0 0.0
          %837 = vmatprep.subr.mxu0 0.0
          %838 = vmatpush2.msra.mxu0 0.0
          %839 = vmatprep.subr.mxu0 0.0
          %840 = vmatpush2.msra.mxu0 0.0
          %841 = vmatprep.subr.mxu0 0.0
          %842 = vmatpush2.msra.mxu0 0.0
          %843 = vmatprep.subr.mxu0 0.0
          %844 = vmatpush2.msra.mxu0 0.0
          %845 = vmatprep.subr.mxu0 0.0
          %846 = vmatpush2.msra.mxu0 0.0
          %847 = vmatprep.subr.mxu0 0.0
          %848 = vmatpush2.msra.mxu0 0.0
          %849 = vmatprep.subr.mxu0 0.0
          %850 = vmatpush2.msra.mxu0 0.0
          %851 = vmatprep.subr.mxu0 0.0
          %852 = vmatpush2.msra.mxu0 0.0
          %853 = vmatprep.subr.mxu0 0.0
          %854 = vmatpush2.msra.mxu0 0.0
          %855 = vmatprep.subr.mxu0 0.0
          %856 = vmatpush2.msra.mxu0 0.0
          %857 = vmatprep.mubr.f32.mxu0 0.0
          %858 = vmatmul.mubr.f32.gmra.mxu0 %v791
          %v859 = vpop.f32.mrf.mxu0
          %v860 = vadd.f32 0.0, %v859
          %v861 = vpop.f32.mrf.mxu0
          %862 = vdwg.mxu0
          %v863 = vadd.f32 %v789, %v860
        $region77: #{tpu_custom_call.1} parent=47 // loop_footer
          %s684 = sadd.s32 %s682, 1
        $region78: #{tpu_custom_call.1} parent=47 // loop_footer_branch
          %681 = sbr.rel target = $region74
        $region79: #{tpu_custom_call.1} parent=47 // loop_exit
          _
        %s864 = smul.u32 %s373, 8
        %s865 = sadd.s32 %s588, %s864
        %s866 = scalar_lea.vmem [#allocation2], %s865
        %v867 = vld [vmem:[%s866] sm:$0xff]
        %s868 = scalar_lea.vmem [#allocation3], %s865
        %v869 = vld [vmem:[%s868] sm:$0xff]
        %vm870 = vcmask 64512
        %v872 = vsel %vm870, %v675, 0
        %v875 = vsel %vm870, %v867, 0
        %877 = vmatprep.subr.mxu0 0.0
        %878 = vmatpush1.xpose.msra.mxu0 0.0
        %879 = vmatprep.subr.mxu0 0.0
        %880 = vmatpush1.xpose.msra.mxu0 0.0
        %881 = vmatprep.subr.mxu0 0.0
        %882 = vmatpush1.xpose.msra.mxu0 0.0
        %883 = vmatprep.subr.mxu0 0.0
        %884 = vmatpush1.xpose.msra.mxu0 0.0
        %885 = vmatprep.subr.mxu0 0.0
        %886 = vmatpush1.xpose.msra.mxu0 0.0
        %887 = vmatprep.subr.mxu0 0.0
        %888 = vmatpush1.xpose.msra.mxu0 0.0
        %889 = vmatprep.subr.mxu0 0.0
        %890 = vmatpush1.xpose.msra.mxu0 0.0
        %891 = vmatprep.subr.mxu0 0.0
        %892 = vmatpush1.xpose.msra.mxu0 0.0
        %893 = vmatprep.subr.mxu0 0.0
        %894 = vmatpush1.xpose.msra.mxu0 0.0
        %895 = vmatprep.subr.mxu0 0.0
        %896 = vmatpush1.xpose.msra.mxu0 0.0
        %897 = vmatprep.subr.mxu0 0.0
        %898 = vmatpush1.xpose.msra.mxu0 0.0
        %899 = vmatprep.subr.mxu0 0.0
        %900 = vmatpush1.xpose.msra.mxu0 0.0
        %901 = vmatprep.subr.mxu0 0.0
        %902 = vmatpush1.xpose.msra.mxu0 0.0
        %903 = vmatprep.subr.mxu0 0.0
        %904 = vmatpush1.xpose.msra.mxu0 0.0
        %905 = vmatprep.subr.mxu0 0.0
        %906 = vmatpush1.xpose.msra.mxu0 0.0
        %907 = vmatprep.subr.mxu0 0.0
        %908 = vmatpush1.xpose.msra.mxu0 %v875
        %909 = vmatprep.subr.mxu0 0.0
        %910 = vmatpush2.xpose.msra.mxu0 0.0
        %911 = vmatprep.subr.mxu0 0.0
        %912 = vmatpush2.xpose.msra.mxu0 0.0
        %913 = vmatprep.subr.mxu0 0.0
        %914 = vmatpush2.xpose.msra.mxu0 0.0
        %915 = vmatprep.subr.mxu0 0.0
        %916 = vmatpush2.xpose.msra.mxu0 0.0
        %917 = vmatprep.subr.mxu0 0.0
        %918 = vmatpush2.xpose.msra.mxu0 0.0
        %919 = vmatprep.subr.mxu0 0.0
        %920 = vmatpush2.xpose.msra.mxu0 0.0
        %921 = vmatprep.subr.mxu0 0.0
        %922 = vmatpush2.xpose.msra.mxu0 0.0
        %923 = vmatprep.subr.mxu0 0.0
        %924 = vmatpush2.xpose.msra.mxu0 0.0
        %925 = vmatprep.subr.mxu0 0.0
        %926 = vmatpush2.xpose.msra.mxu0 0.0
        %927 = vmatprep.subr.mxu0 0.0
        %928 = vmatpush2.xpose.msra.mxu0 0.0
        %929 = vmatprep.subr.mxu0 0.0
        %930 = vmatpush2.xpose.msra.mxu0 0.0
        %931 = vmatprep.subr.mxu0 0.0
        %932 = vmatpush2.xpose.msra.mxu0 0.0
        %933 = vmatprep.subr.mxu0 0.0
        %934 = vmatpush2.xpose.msra.mxu0 0.0
        %935 = vmatprep.subr.mxu0 0.0
        %936 = vmatpush2.xpose.msra.mxu0 0.0
        %937 = vmatprep.subr.mxu0 0.0
        %938 = vmatpush2.xpose.msra.mxu0 0.0
        %939 = vmatprep.subr.mxu0 0.0
        %940 = vmatpush2.xpose.msra.mxu0 0.0
        %941 = vmatprep.mubr.f32.mxu0 0.0
        %942 = vmatmul.mubr.f32.gmra.mxu0 %v872
        %v943 = vpop.f32.mrf.mxu0
        %v944 = vadd.f32 0.0, %v943
        %v945 = vpop.f32.mrf.mxu0
        %946 = vdwg.mxu0
        %v947 = vsel %vm680, %v944, -10000.0
        %v948 = vsel %vm870, %v947, -inf
        %949 = vmax.xlane.f32.xlu0 %v948
        %v950 = vpop.xlane.xlu0 %949
        %v951 = vmax.f32 %v687, %v950
        %v952 = vsub.f32 %v687, %v951
        %v953 = vmul.f32 %v952, 1.442695
        %v954 = vpow.pop %v953
        %v955 = vsub.f32 %v947, %v951
        %v956 = vmul.f32 %v955, 1.442695
        %v957 = vpow.pop %v956
        %v958 = vmul.f32 %v954, %v688
        %v959 = vsel %vm870, %v957, 0.0
        %960 = vadd.xlane.f32.xlu0 %v959
        %v961 = vpop.xlane.xlu0 %960
        %v962 = vadd.f32 %v958, %v961
        %v963 = vmul.f32 %v954, %v689
        %v965 = vsel %vm870, %v957, 0
        %967 = vmatprep.subr.mxu0 0.0
        %968 = vmatpush1.msra.mxu0 0.0
        %969 = vmatprep.subr.mxu0 0.0
        %970 = vmatpush1.msra.mxu0 0.0
        %971 = vmatprep.subr.mxu0 0.0
        %972 = vmatpush1.msra.mxu0 0.0
        %973 = vmatprep.subr.mxu0 0.0
        %974 = vmatpush1.msra.mxu0 0.0
        %975 = vmatprep.subr.mxu0 0.0
        %976 = vmatpush1.msra.mxu0 0.0
        %977 = vmatprep.subr.mxu0 0.0
        %978 = vmatpush1.msra.mxu0 0.0
        %979 = vmatprep.subr.mxu0 0.0
        %980 = vmatpush1.msra.mxu0 0.0
        %981 = vmatprep.subr.mxu0 0.0
        %982 = vmatpush1.msra.mxu0 0.0
        %983 = vmatprep.subr.mxu0 0.0
        %984 = vmatpush1.msra.mxu0 0.0
        %985 = vmatprep.subr.mxu0 0.0
        %986 = vmatpush1.msra.mxu0 0.0
        %987 = vmatprep.subr.mxu0 0.0
        %988 = vmatpush1.msra.mxu0 0.0
        %989 = vmatprep.subr.mxu0 0.0
        %990 = vmatpush1.msra.mxu0 0.0
        %991 = vmatprep.subr.mxu0 0.0
        %992 = vmatpush1.msra.mxu0 0.0
        %993 = vmatprep.subr.mxu0 0.0
        %994 = vmatpush1.msra.mxu0 0.0
        %995 = vmatprep.subr.mxu0 0.0
        %996 = vmatpush1.msra.mxu0 0.0
        %997 = vmatprep.subr.mxu0 0.0
        %998 = vmatpush1.msra.mxu0 %v869
        %999 = vmatprep.subr.mxu0 0.0
        %1000 = vmatpush2.msra.mxu0 0.0
        %1001 = vmatprep.subr.mxu0 0.0
        %1002 = vmatpush2.msra.mxu0 0.0
        %1003 = vmatprep.subr.mxu0 0.0
        %1004 = vmatpush2.msra.mxu0 0.0
        %1005 = vmatprep.subr.mxu0 0.0
        %1006 = vmatpush2.msra.mxu0 0.0
        %1007 = vmatprep.subr.mxu0 0.0
        %1008 = vmatpush2.msra.mxu0 0.0
        %1009 = vmatprep.subr.mxu0 0.0
        %1010 = vmatpush2.msra.mxu0 0.0
        %1011 = vmatprep.subr.mxu0 0.0
        %1012 = vmatpush2.msra.mxu0 0.0
        %1013 = vmatprep.subr.mxu0 0.0
        %1014 = vmatpush2.msra.mxu0 0.0
        %1015 = vmatprep.subr.mxu0 0.0
        %1016 = vmatpush2.msra.mxu0 0.0
        %1017 = vmatprep.subr.mxu0 0.0
        %1018 = vmatpush2.msra.mxu0 0.0
        %1019 = vmatprep.subr.mxu0 0.0
        %1020 = vmatpush2.msra.mxu0 0.0
        %1021 = vmatprep.subr.mxu0 0.0
        %1022 = vmatpush2.msra.mxu0 0.0
        %1023 = vmatprep.subr.mxu0 0.0
        %1024 = vmatpush2.msra.mxu0 0.0
        %1025 = vmatprep.subr.mxu0 0.0
        %1026 = vmatpush2.msra.mxu0 0.0
        %1027 = vmatprep.subr.mxu0 0.0
        %1028 = vmatpush2.msra.mxu0 0.0
        %1029 = vmatprep.subr.mxu0 0.0
        %1030 = vmatpush2.msra.mxu0 0.0
        %1031 = vmatprep.mubr.f32.mxu0 0.0
        %1032 = vmatmul.mubr.f32.gmra.mxu0 %v965
        %v1033 = vpop.f32.mrf.mxu0
        %v1034 = vadd.f32 0.0, %v1033
        %v1035 = vpop.f32.mrf.mxu0
        %1036 = vdwg.mxu0
        %v1037 = vadd.f32 %v963, %v1034
        %v1038 = vrcp.pop %v962
        %v1039 = vmul.f32 %v1037, %v1038
        %s1040 = sadd.s32 %s373, 1
        // While loop
        $region80: #{tpu_custom_call.1} parent=47 // loop_pre_header
          _
        $region81: #{tpu_custom_call.1} parent=47 // loop_header
          %s1042 = sphi 0, %s1044
          %p1043 = scmp.ge.s32.totalorder %s1042, %s32
          %v1047 = vphi -inf, %v1137
          %v1048 = vphi 0.0, %v1148
          %v1049 = vphi 0.0, %v1223
        $region82: #{tpu_custom_call.1} parent=47 // loop_header_branch
          %1046 = sbr.rel (%p1043) target = $region86
        $region83: #{tpu_custom_call.1} parent=47 // loop_body
          %s1050 = smul.u32 %s1042, 8
          %s1051 = smul.u32 %s1040, 8
          %s1052 = sadd.s32 %s1050, %s1051
          %s1053 = scalar_lea.vmem [#allocation2], %s1052
          %v1054 = vld [vmem:[%s1053] sm:$0xff]
          %s1055 = scalar_lea.vmem [#allocation3], %s1052
          %v1056 = vld [vmem:[%s1055] sm:$0xff]
          %1057 = vrot.lane.b32.xlu0 %v675, 120
          %v1058 = vpop.permute.xlu0 %1057
          %v1059 = vsel %vm870, %v1058, 0
          %v1062 = vsel %vm870, %v1054, 0
          %1064 = vmatprep.subr.mxu0 0.0
          %1065 = vmatpush1.xpose.msra.mxu0 0.0
          %1066 = vmatprep.subr.mxu0 0.0
          %1067 = vmatpush1.xpose.msra.mxu0 0.0
          %1068 = vmatprep.subr.mxu0 0.0
          %1069 = vmatpush1.xpose.msra.mxu0 0.0
          %1070 = vmatprep.subr.mxu0 0.0
          %1071 = vmatpush1.xpose.msra.mxu0 0.0
          %1072 = vmatprep.subr.mxu0 0.0
          %1073 = vmatpush1.xpose.msra.mxu0 0.0
          %1074 = vmatprep.subr.mxu0 0.0
          %1075 = vmatpush1.xpose.msra.mxu0 0.0
          %1076 = vmatprep.subr.mxu0 0.0
          %1077 = vmatpush1.xpose.msra.mxu0 0.0
          %1078 = vmatprep.subr.mxu0 0.0
          %1079 = vmatpush1.xpose.msra.mxu0 0.0
          %1080 = vmatprep.subr.mxu0 0.0
          %1081 = vmatpush1.xpose.msra.mxu0 0.0
          %1082 = vmatprep.subr.mxu0 0.0
          %1083 = vmatpush1.xpose.msra.mxu0 0.0
          %1084 = vmatprep.subr.mxu0 0.0
          %1085 = vmatpush1.xpose.msra.mxu0 0.0
          %1086 = vmatprep.subr.mxu0 0.0
          %1087 = vmatpush1.xpose.msra.mxu0 0.0
          %1088 = vmatprep.subr.mxu0 0.0
          %1089 = vmatpush1.xpose.msra.mxu0 0.0
          %1090 = vmatprep.subr.mxu0 0.0
          %1091 = vmatpush1.xpose.msra.mxu0 0.0
          %1092 = vmatprep.subr.mxu0 0.0
          %1093 = vmatpush1.xpose.msra.mxu0 0.0
          %1094 = vmatprep.subr.mxu0 0.0
          %1095 = vmatpush1.xpose.msra.mxu0 %v1062
          %1096 = vmatprep.subr.mxu0 0.0
          %1097 = vmatpush2.xpose.msra.mxu0 0.0
          %1098 = vmatprep.subr.mxu0 0.0
          %1099 = vmatpush2.xpose.msra.mxu0 0.0
          %1100 = vmatprep.subr.mxu0 0.0
          %1101 = vmatpush2.xpose.msra.mxu0 0.0
          %1102 = vmatprep.subr.mxu0 0.0
          %1103 = vmatpush2.xpose.msra.mxu0 0.0
          %1104 = vmatprep.subr.mxu0 0.0
          %1105 = vmatpush2.xpose.msra.mxu0 0.0
          %1106 = vmatprep.subr.mxu0 0.0
          %1107 = vmatpush2.xpose.msra.mxu0 0.0
          %1108 = vmatprep.subr.mxu0 0.0
          %1109 = vmatpush2.xpose.msra.mxu0 0.0
          %1110 = vmatprep.subr.mxu0 0.0
          %1111 = vmatpush2.xpose.msra.mxu0 0.0
          %1112 = vmatprep.subr.mxu0 0.0
          %1113 = vmatpush2.xpose.msra.mxu0 0.0
          %1114 = vmatprep.subr.mxu0 0.0
          %1115 = vmatpush2.xpose.msra.mxu0 0.0
          %1116 = vmatprep.subr.mxu0 0.0
          %1117 = vmatpush2.xpose.msra.mxu0 0.0
          %1118 = vmatprep.subr.mxu0 0.0
          %1119 = vmatpush2.xpose.msra.mxu0 0.0
          %1120 = vmatprep.subr.mxu0 0.0
          %1121 = vmatpush2.xpose.msra.mxu0 0.0
          %1122 = vmatprep.subr.mxu0 0.0
          %1123 = vmatpush2.xpose.msra.mxu0 0.0
          %1124 = vmatprep.subr.mxu0 0.0
          %1125 = vmatpush2.xpose.msra.mxu0 0.0
          %1126 = vmatprep.subr.mxu0 0.0
          %1127 = vmatpush2.xpose.msra.mxu0 0.0
          %1128 = vmatprep.mubr.f32.mxu0 0.0
          %1129 = vmatmul.mubr.f32.gmra.mxu0 %v1059
          %v1130 = vpop.f32.mrf.mxu0
          %v1131 = vadd.f32 0.0, %v1130
          %v1132 = vpop.f32.mrf.mxu0
          %1133 = vdwg.mxu0
          %v1134 = vsel %vm870, %v1131, -inf
          %1135 = vmax.xlane.f32.xlu0 %v1134
          %v1136 = vpop.xlane.xlu0 %1135
          %v1137 = vmax.f32 %v1047, %v1136
          %v1138 = vsub.f32 %v1047, %v1137
          %v1139 = vmul.f32 %v1138, 1.442695
          %v1140 = vpow.pop %v1139
          %v1141 = vsub.f32 %v1131, %v1137
          %v1142 = vmul.f32 %v1141, 1.442695
          %v1143 = vpow.pop %v1142
          %v1144 = vmul.f32 %v1140, %v1048
          %v1145 = vsel %vm870, %v1143, 0.0
          %1146 = vadd.xlane.f32.xlu0 %v1145
          %v1147 = vpop.xlane.xlu0 %1146
          %v1148 = vadd.f32 %v1144, %v1147
          %v1149 = vmul.f32 %v1140, %v1049
          %v1151 = vsel %vm870, %v1143, 0
          %1153 = vmatprep.subr.mxu0 0.0
          %1154 = vmatpush1.msra.mxu0 0.0
          %1155 = vmatprep.subr.mxu0 0.0
          %1156 = vmatpush1.msra.mxu0 0.0
          %1157 = vmatprep.subr.mxu0 0.0
          %1158 = vmatpush1.msra.mxu0 0.0
          %1159 = vmatprep.subr.mxu0 0.0
          %1160 = vmatpush1.msra.mxu0 0.0
          %1161 = vmatprep.subr.mxu0 0.0
          %1162 = vmatpush1.msra.mxu0 0.0
          %1163 = vmatprep.subr.mxu0 0.0
          %1164 = vmatpush1.msra.mxu0 0.0
          %1165 = vmatprep.subr.mxu0 0.0
          %1166 = vmatpush1.msra.mxu0 0.0
          %1167 = vmatprep.subr.mxu0 0.0
          %1168 = vmatpush1.msra.mxu0 0.0
          %1169 = vmatprep.subr.mxu0 0.0
          %1170 = vmatpush1.msra.mxu0 0.0
          %1171 = vmatprep.subr.mxu0 0.0
          %1172 = vmatpush1.msra.mxu0 0.0
          %1173 = vmatprep.subr.mxu0 0.0
          %1174 = vmatpush1.msra.mxu0 0.0
          %1175 = vmatprep.subr.mxu0 0.0
          %1176 = vmatpush1.msra.mxu0 0.0
          %1177 = vmatprep.subr.mxu0 0.0
          %1178 = vmatpush1.msra.mxu0 0.0
          %1179 = vmatprep.subr.mxu0 0.0
          %1180 = vmatpush1.msra.mxu0 0.0
          %1181 = vmatprep.subr.mxu0 0.0
          %1182 = vmatpush1.msra.mxu0 0.0
          %1183 = vmatprep.subr.mxu0 0.0
          %1184 = vmatpush1.msra.mxu0 %v1056
          %1185 = vmatprep.subr.mxu0 0.0
          %1186 = vmatpush2.msra.mxu0 0.0
          %1187 = vmatprep.subr.mxu0 0.0
          %1188 = vmatpush2.msra.mxu0 0.0
          %1189 = vmatprep.subr.mxu0 0.0
          %1190 = vmatpush2.msra.mxu0 0.0
          %1191 = vmatprep.subr.mxu0 0.0
          %1192 = vmatpush2.msra.mxu0 0.0
          %1193 = vmatprep.subr.mxu0 0.0
          %1194 = vmatpush2.msra.mxu0 0.0
          %1195 = vmatprep.subr.mxu0 0.0
          %1196 = vmatpush2.msra.mxu0 0.0
          %1197 = vmatprep.subr.mxu0 0.0
          %1198 = vmatpush2.msra.mxu0 0.0
          %1199 = vmatprep.subr.mxu0 0.0
          %1200 = vmatpush2.msra.mxu0 0.0
          %1201 = vmatprep.subr.mxu0 0.0
          %1202 = vmatpush2.msra.mxu0 0.0
          %1203 = vmatprep.subr.mxu0 0.0
          %1204 = vmatpush2.msra.mxu0 0.0
          %1205 = vmatprep.subr.mxu0 0.0
          %1206 = vmatpush2.msra.mxu0 0.0
          %1207 = vmatprep.subr.mxu0 0.0
          %1208 = vmatpush2.msra.mxu0 0.0
          %1209 = vmatprep.subr.mxu0 0.0
          %1210 = vmatpush2.msra.mxu0 0.0
          %1211 = vmatprep.subr.mxu0 0.0
          %1212 = vmatpush2.msra.mxu0 0.0
          %1213 = vmatprep.subr.mxu0 0.0
          %1214 = vmatpush2.msra.mxu0 0.0
          %1215 = vmatprep.subr.mxu0 0.0
          %1216 = vmatpush2.msra.mxu0 0.0
          %1217 = vmatprep.mubr.f32.mxu0 0.0
          %1218 = vmatmul.mubr.f32.gmra.mxu0 %v1151
          %v1219 = vpop.f32.mrf.mxu0
          %v1220 = vadd.f32 0.0, %v1219
          %v1221 = vpop.f32.mrf.mxu0
          %1222 = vdwg.mxu0
          %v1223 = vadd.f32 %v1149, %v1220
        $region84: #{tpu_custom_call.1} parent=47 // loop_footer
          %s1044 = sadd.s32 %s1042, 1
        $region85: #{tpu_custom_call.1} parent=47 // loop_footer_branch
          %1041 = sbr.rel target = $region81
        $region86: #{tpu_custom_call.1} parent=47 // loop_exit
          _
        %s1224 = smul.u32 %s1040, 8
        %s1225 = sadd.s32 %s588, %s1224
        %s1226 = scalar_lea.vmem [#allocation2], %s1225
        %v1227 = vld [vmem:[%s1226] sm:$0xff]
        %s1228 = scalar_lea.vmem [#allocation3], %s1225
        %v1229 = vld [vmem:[%s1228] sm:$0xff]
        %1230 = vrot.lane.b32.xlu0 %v675, 120
        %v1231 = vpop.permute.xlu0 %1230
        %v1232 = vsel %vm870, %v1231, 0
        %v1235 = vsel %vm870, %v1227, 0
        %1237 = vmatprep.subr.mxu0 0.0
        %1238 = vmatpush1.xpose.msra.mxu0 0.0
        %1239 = vmatprep.subr.mxu0 0.0
        %1240 = vmatpush1.xpose.msra.mxu0 0.0
        %1241 = vmatprep.subr.mxu0 0.0
        %1242 = vmatpush1.xpose.msra.mxu0 0.0
        %1243 = vmatprep.subr.mxu0 0.0
        %1244 = vmatpush1.xpose.msra.mxu0 0.0
        %1245 = vmatprep.subr.mxu0 0.0
        %1246 = vmatpush1.xpose.msra.mxu0 0.0
        %1247 = vmatprep.subr.mxu0 0.0
        %1248 = vmatpush1.xpose.msra.mxu0 0.0
        %1249 = vmatprep.subr.mxu0 0.0
        %1250 = vmatpush1.xpose.msra.mxu0 0.0
        %1251 = vmatprep.subr.mxu0 0.0
        %1252 = vmatpush1.xpose.msra.mxu0 0.0
        %1253 = vmatprep.subr.mxu0 0.0
        %1254 = vmatpush1.xpose.msra.mxu0 0.0
        %1255 = vmatprep.subr.mxu0 0.0
        %1256 = vmatpush1.xpose.msra.mxu0 0.0
        %1257 = vmatprep.subr.mxu0 0.0
        %1258 = vmatpush1.xpose.msra.mxu0 0.0
        %1259 = vmatprep.subr.mxu0 0.0
        %1260 = vmatpush1.xpose.msra.mxu0 0.0
        %1261 = vmatprep.subr.mxu0 0.0
        %1262 = vmatpush1.xpose.msra.mxu0 0.0
        %1263 = vmatprep.subr.mxu0 0.0
        %1264 = vmatpush1.xpose.msra.mxu0 0.0
        %1265 = vmatprep.subr.mxu0 0.0
        %1266 = vmatpush1.xpose.msra.mxu0 0.0
        %1267 = vmatprep.subr.mxu0 0.0
        %1268 = vmatpush1.xpose.msra.mxu0 %v1235
        %1269 = vmatprep.subr.mxu0 0.0
        %1270 = vmatpush2.xpose.msra.mxu0 0.0
        %1271 = vmatprep.subr.mxu0 0.0
        %1272 = vmatpush2.xpose.msra.mxu0 0.0
        %1273 = vmatprep.subr.mxu0 0.0
        %1274 = vmatpush2.xpose.msra.mxu0 0.0
        %1275 = vmatprep.subr.mxu0 0.0
        %1276 = vmatpush2.xpose.msra.mxu0 0.0
        %1277 = vmatprep.subr.mxu0 0.0
        %1278 = vmatpush2.xpose.msra.mxu0 0.0
        %1279 = vmatprep.subr.mxu0 0.0
        %1280 = vmatpush2.xpose.msra.mxu0 0.0
        %1281 = vmatprep.subr.mxu0 0.0
        %1282 = vmatpush2.xpose.msra.mxu0 0.0
        %1283 = vmatprep.subr.mxu0 0.0
        %1284 = vmatpush2.xpose.msra.mxu0 0.0
        %1285 = vmatprep.subr.mxu0 0.0
        %1286 = vmatpush2.xpose.msra.mxu0 0.0
        %1287 = vmatprep.subr.mxu0 0.0
        %1288 = vmatpush2.xpose.msra.mxu0 0.0
        %1289 = vmatprep.subr.mxu0 0.0
        %1290 = vmatpush2.xpose.msra.mxu0 0.0
        %1291 = vmatprep.subr.mxu0 0.0
        %1292 = vmatpush2.xpose.msra.mxu0 0.0
        %1293 = vmatprep.subr.mxu0 0.0
        %1294 = vmatpush2.xpose.msra.mxu0 0.0
        %1295 = vmatprep.subr.mxu0 0.0
        %1296 = vmatpush2.xpose.msra.mxu0 0.0
        %1297 = vmatprep.subr.mxu0 0.0
        %1298 = vmatpush2.xpose.msra.mxu0 0.0
        %1299 = vmatprep.subr.mxu0 0.0
        %1300 = vmatpush2.xpose.msra.mxu0 0.0
        %1301 = vmatprep.mubr.f32.mxu0 0.0
        %1302 = vmatmul.mubr.f32.gmra.mxu0 %v1232
        %v1303 = vpop.f32.mrf.mxu0
        %v1304 = vadd.f32 0.0, %v1303
        %v1305 = vpop.f32.mrf.mxu0
        %1306 = vdwg.mxu0
        %v1307 = vsel %vm680, %v1304, -10000.0
        %v1308 = vsel %vm870, %v1307, -inf
        %1309 = vmax.xlane.f32.xlu0 %v1308
        %v1310 = vpop.xlane.xlu0 %1309
        %v1311 = vmax.f32 %v1047, %v1310
        %v1312 = vsub.f32 %v1047, %v1311
        %v1313 = vmul.f32 %v1312, 1.442695
        %v1314 = vpow.pop %v1313
        %v1315 = vsub.f32 %v1307, %v1311
        %v1316 = vmul.f32 %v1315, 1.442695
        %v1317 = vpow.pop %v1316
        %v1318 = vmul.f32 %v1314, %v1048
        %v1319 = vsel %vm870, %v1317, 0.0
        %1320 = vadd.xlane.f32.xlu0 %v1319
        %v1321 = vpop.xlane.xlu0 %1320
        %v1322 = vadd.f32 %v1318, %v1321
        %v1323 = vmul.f32 %v1314, %v1049
        %v1325 = vsel %vm870, %v1317, 0
        %1327 = vmatprep.subr.mxu0 0.0
        %1328 = vmatpush1.msra.mxu0 0.0
        %1329 = vmatprep.subr.mxu0 0.0
        %1330 = vmatpush1.msra.mxu0 0.0
        %1331 = vmatprep.subr.mxu0 0.0
        %1332 = vmatpush1.msra.mxu0 0.0
        %1333 = vmatprep.subr.mxu0 0.0
        %1334 = vmatpush1.msra.mxu0 0.0
        %1335 = vmatprep.subr.mxu0 0.0
        %1336 = vmatpush1.msra.mxu0 0.0
        %1337 = vmatprep.subr.mxu0 0.0
        %1338 = vmatpush1.msra.mxu0 0.0
        %1339 = vmatprep.subr.mxu0 0.0
        %1340 = vmatpush1.msra.mxu0 0.0
        %1341 = vmatprep.subr.mxu0 0.0
        %1342 = vmatpush1.msra.mxu0 0.0
        %1343 = vmatprep.subr.mxu0 0.0
        %1344 = vmatpush1.msra.mxu0 0.0
        %1345 = vmatprep.subr.mxu0 0.0
        %1346 = vmatpush1.msra.mxu0 0.0
        %1347 = vmatprep.subr.mxu0 0.0
        %1348 = vmatpush1.msra.mxu0 0.0
        %1349 = vmatprep.subr.mxu0 0.0
        %1350 = vmatpush1.msra.mxu0 0.0
        %1351 = vmatprep.subr.mxu0 0.0
        %1352 = vmatpush1.msra.mxu0 0.0
        %1353 = vmatprep.subr.mxu0 0.0
        %1354 = vmatpush1.msra.mxu0 0.0
        %1355 = vmatprep.subr.mxu0 0.0
        %1356 = vmatpush1.msra.mxu0 0.0
        %1357 = vmatprep.subr.mxu0 0.0
        %1358 = vmatpush1.msra.mxu0 %v1229
        %1359 = vmatprep.subr.mxu0 0.0
        %1360 = vmatpush2.msra.mxu0 0.0
        %1361 = vmatprep.subr.mxu0 0.0
        %1362 = vmatpush2.msra.mxu0 0.0
        %1363 = vmatprep.subr.mxu0 0.0
        %1364 = vmatpush2.msra.mxu0 0.0
        %1365 = vmatprep.subr.mxu0 0.0
        %1366 = vmatpush2.msra.mxu0 0.0
        %1367 = vmatprep.subr.mxu0 0.0
        %1368 = vmatpush2.msra.mxu0 0.0
        %1369 = vmatprep.subr.mxu0 0.0
        %1370 = vmatpush2.msra.mxu0 0.0
        %1371 = vmatprep.subr.mxu0 0.0
        %1372 = vmatpush2.msra.mxu0 0.0
        %1373 = vmatprep.subr.mxu0 0.0
        %1374 = vmatpush2.msra.mxu0 0.0
        %1375 = vmatprep.subr.mxu0 0.0
        %1376 = vmatpush2.msra.mxu0 0.0
        %1377 = vmatprep.subr.mxu0 0.0
        %1378 = vmatpush2.msra.mxu0 0.0
        %1379 = vmatprep.subr.mxu0 0.0
        %1380 = vmatpush2.msra.mxu0 0.0
        %1381 = vmatprep.subr.mxu0 0.0
        %1382 = vmatpush2.msra.mxu0 0.0
        %1383 = vmatprep.subr.mxu0 0.0
        %1384 = vmatpush2.msra.mxu0 0.0
        %1385 = vmatprep.subr.mxu0 0.0
        %1386 = vmatpush2.msra.mxu0 0.0
        %1387 = vmatprep.subr.mxu0 0.0
        %1388 = vmatpush2.msra.mxu0 0.0
        %1389 = vmatprep.subr.mxu0 0.0
        %1390 = vmatpush2.msra.mxu0 0.0
        %1391 = vmatprep.mubr.f32.mxu0 0.0
        %1392 = vmatmul.mubr.f32.gmra.mxu0 %v1325
        %v1393 = vpop.f32.mrf.mxu0
        %v1394 = vadd.f32 0.0, %v1393
        %v1395 = vpop.f32.mrf.mxu0
        %1396 = vdwg.mxu0
        %v1397 = vadd.f32 %v1323, %v1394
        %v1398 = vrcp.pop %v1322
        %v1399 = vmul.f32 %v1397, %v1398
        %s1400 = sadd.s32 %s373, 2
        // While loop
        $region87: #{tpu_custom_call.1} parent=47 // loop_pre_header
          _
        $region88: #{tpu_custom_call.1} parent=47 // loop_header
          %s1402 = sphi 0, %s1404
          %p1403 = scmp.ge.s32.totalorder %s1402, %s32
          %v1407 = vphi -inf, %v1497
          %v1408 = vphi 0.0, %v1508
          %v1409 = vphi 0.0, %v1583
        $region89: #{tpu_custom_call.1} parent=47 // loop_header_branch
          %1406 = sbr.rel (%p1403) target = $region93
        $region90: #{tpu_custom_call.1} parent=47 // loop_body
          %s1410 = smul.u32 %s1402, 8
          %s1411 = smul.u32 %s1400, 8
          %s1412 = sadd.s32 %s1410, %s1411
          %s1413 = scalar_lea.vmem [#allocation2], %s1412
          %v1414 = vld [vmem:[%s1413] sm:$0xff]
          %s1415 = scalar_lea.vmem [#allocation3], %s1412
          %v1416 = vld [vmem:[%s1415] sm:$0xff]
          %1417 = vrot.lane.b32.xlu0 %v675, 112
          %v1418 = vpop.permute.xlu0 %1417
          %v1419 = vsel %vm870, %v1418, 0
          %v1422 = vsel %vm870, %v1414, 0
          %1424 = vmatprep.subr.mxu0 0.0
          %1425 = vmatpush1.xpose.msra.mxu0 0.0
          %1426 = vmatprep.subr.mxu0 0.0
          %1427 = vmatpush1.xpose.msra.mxu0 0.0
          %1428 = vmatprep.subr.mxu0 0.0
          %1429 = vmatpush1.xpose.msra.mxu0 0.0
          %1430 = vmatprep.subr.mxu0 0.0
          %1431 = vmatpush1.xpose.msra.mxu0 0.0
          %1432 = vmatprep.subr.mxu0 0.0
          %1433 = vmatpush1.xpose.msra.mxu0 0.0
          %1434 = vmatprep.subr.mxu0 0.0
          %1435 = vmatpush1.xpose.msra.mxu0 0.0
          %1436 = vmatprep.subr.mxu0 0.0
          %1437 = vmatpush1.xpose.msra.mxu0 0.0
          %1438 = vmatprep.subr.mxu0 0.0
          %1439 = vmatpush1.xpose.msra.mxu0 0.0
          %1440 = vmatprep.subr.mxu0 0.0
          %1441 = vmatpush1.xpose.msra.mxu0 0.0
          %1442 = vmatprep.subr.mxu0 0.0
          %1443 = vmatpush1.xpose.msra.mxu0 0.0
          %1444 = vmatprep.subr.mxu0 0.0
          %1445 = vmatpush1.xpose.msra.mxu0 0.0
          %1446 = vmatprep.subr.mxu0 0.0
          %1447 = vmatpush1.xpose.msra.mxu0 0.0
          %1448 = vmatprep.subr.mxu0 0.0
          %1449 = vmatpush1.xpose.msra.mxu0 0.0
          %1450 = vmatprep.subr.mxu0 0.0
          %1451 = vmatpush1.xpose.msra.mxu0 0.0
          %1452 = vmatprep.subr.mxu0 0.0
          %1453 = vmatpush1.xpose.msra.mxu0 0.0
          %1454 = vmatprep.subr.mxu0 0.0
          %1455 = vmatpush1.xpose.msra.mxu0 %v1422
          %1456 = vmatprep.subr.mxu0 0.0
          %1457 = vmatpush2.xpose.msra.mxu0 0.0
          %1458 = vmatprep.subr.mxu0 0.0
          %1459 = vmatpush2.xpose.msra.mxu0 0.0
          %1460 = vmatprep.subr.mxu0 0.0
          %1461 = vmatpush2.xpose.msra.mxu0 0.0
          %1462 = vmatprep.subr.mxu0 0.0
          %1463 = vmatpush2.xpose.msra.mxu0 0.0
          %1464 = vmatprep.subr.mxu0 0.0
          %1465 = vmatpush2.xpose.msra.mxu0 0.0
          %1466 = vmatprep.subr.mxu0 0.0
          %1467 = vmatpush2.xpose.msra.mxu0 0.0
          %1468 = vmatprep.subr.mxu0 0.0
          %1469 = vmatpush2.xpose.msra.mxu0 0.0
          %1470 = vmatprep.subr.mxu0 0.0
          %1471 = vmatpush2.xpose.msra.mxu0 0.0
          %1472 = vmatprep.subr.mxu0 0.0
          %1473 = vmatpush2.xpose.msra.mxu0 0.0
          %1474 = vmatprep.subr.mxu0 0.0
          %1475 = vmatpush2.xpose.msra.mxu0 0.0
          %1476 = vmatprep.subr.mxu0 0.0
          %1477 = vmatpush2.xpose.msra.mxu0 0.0
          %1478 = vmatprep.subr.mxu0 0.0
          %1479 = vmatpush2.xpose.msra.mxu0 0.0
          %1480 = vmatprep.subr.mxu0 0.0
          %1481 = vmatpush2.xpose.msra.mxu0 0.0
          %1482 = vmatprep.subr.mxu0 0.0
          %1483 = vmatpush2.xpose.msra.mxu0 0.0
          %1484 = vmatprep.subr.mxu0 0.0
          %1485 = vmatpush2.xpose.msra.mxu0 0.0
          %1486 = vmatprep.subr.mxu0 0.0
          %1487 = vmatpush2.xpose.msra.mxu0 0.0
          %1488 = vmatprep.mubr.f32.mxu0 0.0
          %1489 = vmatmul.mubr.f32.gmra.mxu0 %v1419
          %v1490 = vpop.f32.mrf.mxu0
          %v1491 = vadd.f32 0.0, %v1490
          %v1492 = vpop.f32.mrf.mxu0
          %1493 = vdwg.mxu0
          %v1494 = vsel %vm870, %v1491, -inf
          %1495 = vmax.xlane.f32.xlu0 %v1494
          %v1496 = vpop.xlane.xlu0 %1495
          %v1497 = vmax.f32 %v1407, %v1496
          %v1498 = vsub.f32 %v1407, %v1497
          %v1499 = vmul.f32 %v1498, 1.442695
          %v1500 = vpow.pop %v1499
          %v1501 = vsub.f32 %v1491, %v1497
          %v1502 = vmul.f32 %v1501, 1.442695
          %v1503 = vpow.pop %v1502
          %v1504 = vmul.f32 %v1500, %v1408
          %v1505 = vsel %vm870, %v1503, 0.0
          %1506 = vadd.xlane.f32.xlu0 %v1505
          %v1507 = vpop.xlane.xlu0 %1506
          %v1508 = vadd.f32 %v1504, %v1507
          %v1509 = vmul.f32 %v1500, %v1409
          %v1511 = vsel %vm870, %v1503, 0
          %1513 = vmatprep.subr.mxu0 0.0
          %1514 = vmatpush1.msra.mxu0 0.0
          %1515 = vmatprep.subr.mxu0 0.0
          %1516 = vmatpush1.msra.mxu0 0.0
          %1517 = vmatprep.subr.mxu0 0.0
          %1518 = vmatpush1.msra.mxu0 0.0
          %1519 = vmatprep.subr.mxu0 0.0
          %1520 = vmatpush1.msra.mxu0 0.0
          %1521 = vmatprep.subr.mxu0 0.0
          %1522 = vmatpush1.msra.mxu0 0.0
          %1523 = vmatprep.subr.mxu0 0.0
          %1524 = vmatpush1.msra.mxu0 0.0
          %1525 = vmatprep.subr.mxu0 0.0
          %1526 = vmatpush1.msra.mxu0 0.0
          %1527 = vmatprep.subr.mxu0 0.0
          %1528 = vmatpush1.msra.mxu0 0.0
          %1529 = vmatprep.subr.mxu0 0.0
          %1530 = vmatpush1.msra.mxu0 0.0
          %1531 = vmatprep.subr.mxu0 0.0
          %1532 = vmatpush1.msra.mxu0 0.0
          %1533 = vmatprep.subr.mxu0 0.0
          %1534 = vmatpush1.msra.mxu0 0.0
          %1535 = vmatprep.subr.mxu0 0.0
          %1536 = vmatpush1.msra.mxu0 0.0
          %1537 = vmatprep.subr.mxu0 0.0
          %1538 = vmatpush1.msra.mxu0 0.0
          %1539 = vmatprep.subr.mxu0 0.0
          %1540 = vmatpush1.msra.mxu0 0.0
          %1541 = vmatprep.subr.mxu0 0.0
          %1542 = vmatpush1.msra.mxu0 0.0
          %1543 = vmatprep.subr.mxu0 0.0
          %1544 = vmatpush1.msra.mxu0 %v1416
          %1545 = vmatprep.subr.mxu0 0.0
          %1546 = vmatpush2.msra.mxu0 0.0
          %1547 = vmatprep.subr.mxu0 0.0
          %1548 = vmatpush2.msra.mxu0 0.0
          %1549 = vmatprep.subr.mxu0 0.0
          %1550 = vmatpush2.msra.mxu0 0.0
          %1551 = vmatprep.subr.mxu0 0.0
          %1552 = vmatpush2.msra.mxu0 0.0
          %1553 = vmatprep.subr.mxu0 0.0
          %1554 = vmatpush2.msra.mxu0 0.0
          %1555 = vmatprep.subr.mxu0 0.0
          %1556 = vmatpush2.msra.mxu0 0.0
          %1557 = vmatprep.subr.mxu0 0.0
          %1558 = vmatpush2.msra.mxu0 0.0
          %1559 = vmatprep.subr.mxu0 0.0
          %1560 = vmatpush2.msra.mxu0 0.0
          %1561 = vmatprep.subr.mxu0 0.0
          %1562 = vmatpush2.msra.mxu0 0.0
          %1563 = vmatprep.subr.mxu0 0.0
          %1564 = vmatpush2.msra.mxu0 0.0
          %1565 = vmatprep.subr.mxu0 0.0
          %1566 = vmatpush2.msra.mxu0 0.0
          %1567 = vmatprep.subr.mxu0 0.0
          %1568 = vmatpush2.msra.mxu0 0.0
          %1569 = vmatprep.subr.mxu0 0.0
          %1570 = vmatpush2.msra.mxu0 0.0
          %1571 = vmatprep.subr.mxu0 0.0
          %1572 = vmatpush2.msra.mxu0 0.0
          %1573 = vmatprep.subr.mxu0 0.0
          %1574 = vmatpush2.msra.mxu0 0.0
          %1575 = vmatprep.subr.mxu0 0.0
          %1576 = vmatpush2.msra.mxu0 0.0
          %1577 = vmatprep.mubr.f32.mxu0 0.0
          %1578 = vmatmul.mubr.f32.gmra.mxu0 %v1511
          %v1579 = vpop.f32.mrf.mxu0
          %v1580 = vadd.f32 0.0, %v1579
          %v1581 = vpop.f32.mrf.mxu0
          %1582 = vdwg.mxu0
          %v1583 = vadd.f32 %v1509, %v1580
        $region91: #{tpu_custom_call.1} parent=47 // loop_footer
          %s1404 = sadd.s32 %s1402, 1
        $region92: #{tpu_custom_call.1} parent=47 // loop_footer_branch
          %1401 = sbr.rel target = $region88
        $region93: #{tpu_custom_call.1} parent=47 // loop_exit
          _
        %s1584 = smul.u32 %s1400, 8
        %s1585 = sadd.s32 %s588, %s1584
        %s1586 = scalar_lea.vmem [#allocation2], %s1585
        %v1587 = vld [vmem:[%s1586] sm:$0xff]
        %s1588 = scalar_lea.vmem [#allocation3], %s1585
        %v1589 = vld [vmem:[%s1588] sm:$0xff]
        %1590 = vrot.lane.b32.xlu0 %v675, 112
        %v1591 = vpop.permute.xlu0 %1590
        %v1592 = vsel %vm870, %v1591, 0
        %v1595 = vsel %vm870, %v1587, 0
        %1597 = vmatprep.subr.mxu0 0.0
        %1598 = vmatpush1.xpose.msra.mxu0 0.0
        %1599 = vmatprep.subr.mxu0 0.0
        %1600 = vmatpush1.xpose.msra.mxu0 0.0
        %1601 = vmatprep.subr.mxu0 0.0
        %1602 = vmatpush1.xpose.msra.mxu0 0.0
        %1603 = vmatprep.subr.mxu0 0.0
        %1604 = vmatpush1.xpose.msra.mxu0 0.0
        %1605 = vmatprep.subr.mxu0 0.0
        %1606 = vmatpush1.xpose.msra.mxu0 0.0
        %1607 = vmatprep.subr.mxu0 0.0
        %1608 = vmatpush1.xpose.msra.mxu0 0.0
        %1609 = vmatprep.subr.mxu0 0.0
        %1610 = vmatpush1.xpose.msra.mxu0 0.0
        %1611 = vmatprep.subr.mxu0 0.0
        %1612 = vmatpush1.xpose.msra.mxu0 0.0
        %1613 = vmatprep.subr.mxu0 0.0
        %1614 = vmatpush1.xpose.msra.mxu0 0.0
        %1615 = vmatprep.subr.mxu0 0.0
        %1616 = vmatpush1.xpose.msra.mxu0 0.0
        %1617 = vmatprep.subr.mxu0 0.0
        %1618 = vmatpush1.xpose.msra.mxu0 0.0
        %1619 = vmatprep.subr.mxu0 0.0
        %1620 = vmatpush1.xpose.msra.mxu0 0.0
        %1621 = vmatprep.subr.mxu0 0.0
        %1622 = vmatpush1.xpose.msra.mxu0 0.0
        %1623 = vmatprep.subr.mxu0 0.0
        %1624 = vmatpush1.xpose.msra.mxu0 0.0
        %1625 = vmatprep.subr.mxu0 0.0
        %1626 = vmatpush1.xpose.msra.mxu0 0.0
        %1627 = vmatprep.subr.mxu0 0.0
        %1628 = vmatpush1.xpose.msra.mxu0 %v1595
        %1629 = vmatprep.subr.mxu0 0.0
        %1630 = vmatpush2.xpose.msra.mxu0 0.0
        %1631 = vmatprep.subr.mxu0 0.0
        %1632 = vmatpush2.xpose.msra.mxu0 0.0
        %1633 = vmatprep.subr.mxu0 0.0
        %1634 = vmatpush2.xpose.msra.mxu0 0.0
        %1635 = vmatprep.subr.mxu0 0.0
        %1636 = vmatpush2.xpose.msra.mxu0 0.0
        %1637 = vmatprep.subr.mxu0 0.0
        %1638 = vmatpush2.xpose.msra.mxu0 0.0
        %1639 = vmatprep.subr.mxu0 0.0
        %1640 = vmatpush2.xpose.msra.mxu0 0.0
        %1641 = vmatprep.subr.mxu0 0.0
        %1642 = vmatpush2.xpose.msra.mxu0 0.0
        %1643 = vmatprep.subr.mxu0 0.0
        %1644 = vmatpush2.xpose.msra.mxu0 0.0
        %1645 = vmatprep.subr.mxu0 0.0
        %1646 = vmatpush2.xpose.msra.mxu0 0.0
        %1647 = vmatprep.subr.mxu0 0.0
        %1648 = vmatpush2.xpose.msra.mxu0 0.0
        %1649 = vmatprep.subr.mxu0 0.0
        %1650 = vmatpush2.xpose.msra.mxu0 0.0
        %1651 = vmatprep.subr.mxu0 0.0
        %1652 = vmatpush2.xpose.msra.mxu0 0.0
        %1653 = vmatprep.subr.mxu0 0.0
        %1654 = vmatpush2.xpose.msra.mxu0 0.0
        %1655 = vmatprep.subr.mxu0 0.0
        %1656 = vmatpush2.xpose.msra.mxu0 0.0
        %1657 = vmatprep.subr.mxu0 0.0
        %1658 = vmatpush2.xpose.msra.mxu0 0.0
        %1659 = vmatprep.subr.mxu0 0.0
        %1660 = vmatpush2.xpose.msra.mxu0 0.0
        %1661 = vmatprep.mubr.f32.mxu0 0.0
        %1662 = vmatmul.mubr.f32.gmra.mxu0 %v1592
        %v1663 = vpop.f32.mrf.mxu0
        %v1664 = vadd.f32 0.0, %v1663
        %v1665 = vpop.f32.mrf.mxu0
        %1666 = vdwg.mxu0
        %v1667 = vsel %vm680, %v1664, -10000.0
        %v1668 = vsel %vm870, %v1667, -inf
        %1669 = vmax.xlane.f32.xlu0 %v1668
        %v1670 = vpop.xlane.xlu0 %1669
        %v1671 = vmax.f32 %v1407, %v1670
        %v1672 = vsub.f32 %v1407, %v1671
        %v1673 = vmul.f32 %v1672, 1.442695
        %v1674 = vpow.pop %v1673
        %v1675 = vsub.f32 %v1667, %v1671
        %v1676 = vmul.f32 %v1675, 1.442695
        %v1677 = vpow.pop %v1676
        %v1678 = vmul.f32 %v1674, %v1408
        %v1679 = vsel %vm870, %v1677, 0.0
        %1680 = vadd.xlane.f32.xlu0 %v1679
        %v1681 = vpop.xlane.xlu0 %1680
        %v1682 = vadd.f32 %v1678, %v1681
        %v1683 = vmul.f32 %v1674, %v1409
        %v1685 = vsel %vm870, %v1677, 0
        %1687 = vmatprep.subr.mxu0 0.0
        %1688 = vmatpush1.msra.mxu0 0.0
        %1689 = vmatprep.subr.mxu0 0.0
        %1690 = vmatpush1.msra.mxu0 0.0
        %1691 = vmatprep.subr.mxu0 0.0
        %1692 = vmatpush1.msra.mxu0 0.0
        %1693 = vmatprep.subr.mxu0 0.0
        %1694 = vmatpush1.msra.mxu0 0.0
        %1695 = vmatprep.subr.mxu0 0.0
        %1696 = vmatpush1.msra.mxu0 0.0
        %1697 = vmatprep.subr.mxu0 0.0
        %1698 = vmatpush1.msra.mxu0 0.0
        %1699 = vmatprep.subr.mxu0 0.0
        %1700 = vmatpush1.msra.mxu0 0.0
        %1701 = vmatprep.subr.mxu0 0.0
        %1702 = vmatpush1.msra.mxu0 0.0
        %1703 = vmatprep.subr.mxu0 0.0
        %1704 = vmatpush1.msra.mxu0 0.0
        %1705 = vmatprep.subr.mxu0 0.0
        %1706 = vmatpush1.msra.mxu0 0.0
        %1707 = vmatprep.subr.mxu0 0.0
        %1708 = vmatpush1.msra.mxu0 0.0
        %1709 = vmatprep.subr.mxu0 0.0
        %1710 = vmatpush1.msra.mxu0 0.0
        %1711 = vmatprep.subr.mxu0 0.0
        %1712 = vmatpush1.msra.mxu0 0.0
        %1713 = vmatprep.subr.mxu0 0.0
        %1714 = vmatpush1.msra.mxu0 0.0
        %1715 = vmatprep.subr.mxu0 0.0
        %1716 = vmatpush1.msra.mxu0 0.0
        %1717 = vmatprep.subr.mxu0 0.0
        %1718 = vmatpush1.msra.mxu0 %v1589
        %1719 = vmatprep.subr.mxu0 0.0
        %1720 = vmatpush2.msra.mxu0 0.0
        %1721 = vmatprep.subr.mxu0 0.0
        %1722 = vmatpush2.msra.mxu0 0.0
        %1723 = vmatprep.subr.mxu0 0.0
        %1724 = vmatpush2.msra.mxu0 0.0
        %1725 = vmatprep.subr.mxu0 0.0
        %1726 = vmatpush2.msra.mxu0 0.0
        %1727 = vmatprep.subr.mxu0 0.0
        %1728 = vmatpush2.msra.mxu0 0.0
        %1729 = vmatprep.subr.mxu0 0.0
        %1730 = vmatpush2.msra.mxu0 0.0
        %1731 = vmatprep.subr.mxu0 0.0
        %1732 = vmatpush2.msra.mxu0 0.0
        %1733 = vmatprep.subr.mxu0 0.0
        %1734 = vmatpush2.msra.mxu0 0.0
        %1735 = vmatprep.subr.mxu0 0.0
        %1736 = vmatpush2.msra.mxu0 0.0
        %1737 = vmatprep.subr.mxu0 0.0
        %1738 = vmatpush2.msra.mxu0 0.0
        %1739 = vmatprep.subr.mxu0 0.0
        %1740 = vmatpush2.msra.mxu0 0.0
        %1741 = vmatprep.subr.mxu0 0.0
        %1742 = vmatpush2.msra.mxu0 0.0
        %1743 = vmatprep.subr.mxu0 0.0
        %1744 = vmatpush2.msra.mxu0 0.0
        %1745 = vmatprep.subr.mxu0 0.0
        %1746 = vmatpush2.msra.mxu0 0.0
        %1747 = vmatprep.subr.mxu0 0.0
        %1748 = vmatpush2.msra.mxu0 0.0
        %1749 = vmatprep.subr.mxu0 0.0
        %1750 = vmatpush2.msra.mxu0 0.0
        %1751 = vmatprep.mubr.f32.mxu0 0.0
        %1752 = vmatmul.mubr.f32.gmra.mxu0 %v1685
        %v1753 = vpop.f32.mrf.mxu0
        %v1754 = vadd.f32 0.0, %v1753
        %v1755 = vpop.f32.mrf.mxu0
        %1756 = vdwg.mxu0
        %v1757 = vadd.f32 %v1683, %v1754
        %v1758 = vrcp.pop %v1682
        %v1759 = vmul.f32 %v1757, %v1758
        %s1760 = sadd.s32 %s373, 3
        // While loop
        $region94: #{tpu_custom_call.1} parent=47 // loop_pre_header
          _
        $region95: #{tpu_custom_call.1} parent=47 // loop_header
          %s1762 = sphi 0, %s1764
          %p1763 = scmp.ge.s32.totalorder %s1762, %s32
          %v1767 = vphi -inf, %v1857
          %v1768 = vphi 0.0, %v1868
          %v1769 = vphi 0.0, %v1943
        $region96: #{tpu_custom_call.1} parent=47 // loop_header_branch
          %1766 = sbr.rel (%p1763) target = $region100
        $region97: #{tpu_custom_call.1} parent=47 // loop_body
          %s1770 = smul.u32 %s1762, 8
          %s1771 = smul.u32 %s1760, 8
          %s1772 = sadd.s32 %s1770, %s1771
          %s1773 = scalar_lea.vmem [#allocation2], %s1772
          %v1774 = vld [vmem:[%s1773] sm:$0xff]
          %s1775 = scalar_lea.vmem [#allocation3], %s1772
          %v1776 = vld [vmem:[%s1775] sm:$0xff]
          %1777 = vrot.lane.b32.xlu0 %v675, 104
          %v1778 = vpop.permute.xlu0 %1777
          %v1779 = vsel %vm870, %v1778, 0
          %v1782 = vsel %vm870, %v1774, 0
          %1784 = vmatprep.subr.mxu0 0.0
          %1785 = vmatpush1.xpose.msra.mxu0 0.0
          %1786 = vmatprep.subr.mxu0 0.0
          %1787 = vmatpush1.xpose.msra.mxu0 0.0
          %1788 = vmatprep.subr.mxu0 0.0
          %1789 = vmatpush1.xpose.msra.mxu0 0.0
          %1790 = vmatprep.subr.mxu0 0.0
          %1791 = vmatpush1.xpose.msra.mxu0 0.0
          %1792 = vmatprep.subr.mxu0 0.0
          %1793 = vmatpush1.xpose.msra.mxu0 0.0
          %1794 = vmatprep.subr.mxu0 0.0
          %1795 = vmatpush1.xpose.msra.mxu0 0.0
          %1796 = vmatprep.subr.mxu0 0.0
          %1797 = vmatpush1.xpose.msra.mxu0 0.0
          %1798 = vmatprep.subr.mxu0 0.0
          %1799 = vmatpush1.xpose.msra.mxu0 0.0
          %1800 = vmatprep.subr.mxu0 0.0
          %1801 = vmatpush1.xpose.msra.mxu0 0.0
          %1802 = vmatprep.subr.mxu0 0.0
          %1803 = vmatpush1.xpose.msra.mxu0 0.0
          %1804 = vmatprep.subr.mxu0 0.0
          %1805 = vmatpush1.xpose.msra.mxu0 0.0
          %1806 = vmatprep.subr.mxu0 0.0
          %1807 = vmatpush1.xpose.msra.mxu0 0.0
          %1808 = vmatprep.subr.mxu0 0.0
          %1809 = vmatpush1.xpose.msra.mxu0 0.0
          %1810 = vmatprep.subr.mxu0 0.0
          %1811 = vmatpush1.xpose.msra.mxu0 0.0
          %1812 = vmatprep.subr.mxu0 0.0
          %1813 = vmatpush1.xpose.msra.mxu0 0.0
          %1814 = vmatprep.subr.mxu0 0.0
          %1815 = vmatpush1.xpose.msra.mxu0 %v1782
          %1816 = vmatprep.subr.mxu0 0.0
          %1817 = vmatpush2.xpose.msra.mxu0 0.0
          %1818 = vmatprep.subr.mxu0 0.0
          %1819 = vmatpush2.xpose.msra.mxu0 0.0
          %1820 = vmatprep.subr.mxu0 0.0
          %1821 = vmatpush2.xpose.msra.mxu0 0.0
          %1822 = vmatprep.subr.mxu0 0.0
          %1823 = vmatpush2.xpose.msra.mxu0 0.0
          %1824 = vmatprep.subr.mxu0 0.0
          %1825 = vmatpush2.xpose.msra.mxu0 0.0
          %1826 = vmatprep.subr.mxu0 0.0
          %1827 = vmatpush2.xpose.msra.mxu0 0.0
          %1828 = vmatprep.subr.mxu0 0.0
          %1829 = vmatpush2.xpose.msra.mxu0 0.0
          %1830 = vmatprep.subr.mxu0 0.0
          %1831 = vmatpush2.xpose.msra.mxu0 0.0
          %1832 = vmatprep.subr.mxu0 0.0
          %1833 = vmatpush2.xpose.msra.mxu0 0.0
          %1834 = vmatprep.subr.mxu0 0.0
          %1835 = vmatpush2.xpose.msra.mxu0 0.0
          %1836 = vmatprep.subr.mxu0 0.0
          %1837 = vmatpush2.xpose.msra.mxu0 0.0
          %1838 = vmatprep.subr.mxu0 0.0
          %1839 = vmatpush2.xpose.msra.mxu0 0.0
          %1840 = vmatprep.subr.mxu0 0.0
          %1841 = vmatpush2.xpose.msra.mxu0 0.0
          %1842 = vmatprep.subr.mxu0 0.0
          %1843 = vmatpush2.xpose.msra.mxu0 0.0
          %1844 = vmatprep.subr.mxu0 0.0
          %1845 = vmatpush2.xpose.msra.mxu0 0.0
          %1846 = vmatprep.subr.mxu0 0.0
          %1847 = vmatpush2.xpose.msra.mxu0 0.0
          %1848 = vmatprep.mubr.f32.mxu0 0.0
          %1849 = vmatmul.mubr.f32.gmra.mxu0 %v1779
          %v1850 = vpop.f32.mrf.mxu0
          %v1851 = vadd.f32 0.0, %v1850
          %v1852 = vpop.f32.mrf.mxu0
          %1853 = vdwg.mxu0
          %v1854 = vsel %vm870, %v1851, -inf
          %1855 = vmax.xlane.f32.xlu0 %v1854
          %v1856 = vpop.xlane.xlu0 %1855
          %v1857 = vmax.f32 %v1767, %v1856
          %v1858 = vsub.f32 %v1767, %v1857
          %v1859 = vmul.f32 %v1858, 1.442695
          %v1860 = vpow.pop %v1859
          %v1861 = vsub.f32 %v1851, %v1857
          %v1862 = vmul.f32 %v1861, 1.442695
          %v1863 = vpow.pop %v1862
          %v1864 = vmul.f32 %v1860, %v1768
          %v1865 = vsel %vm870, %v1863, 0.0
          %1866 = vadd.xlane.f32.xlu0 %v1865
          %v1867 = vpop.xlane.xlu0 %1866
          %v1868 = vadd.f32 %v1864, %v1867
          %v1869 = vmul.f32 %v1860, %v1769
          %v1871 = vsel %vm870, %v1863, 0
          %1873 = vmatprep.subr.mxu0 0.0
          %1874 = vmatpush1.msra.mxu0 0.0
          %1875 = vmatprep.subr.mxu0 0.0
          %1876 = vmatpush1.msra.mxu0 0.0
          %1877 = vmatprep.subr.mxu0 0.0
          %1878 = vmatpush1.msra.mxu0 0.0
          %1879 = vmatprep.subr.mxu0 0.0
          %1880 = vmatpush1.msra.mxu0 0.0
          %1881 = vmatprep.subr.mxu0 0.0
          %1882 = vmatpush1.msra.mxu0 0.0
          %1883 = vmatprep.subr.mxu0 0.0
          %1884 = vmatpush1.msra.mxu0 0.0
          %1885 = vmatprep.subr.mxu0 0.0
          %1886 = vmatpush1.msra.mxu0 0.0
          %1887 = vmatprep.subr.mxu0 0.0
          %1888 = vmatpush1.msra.mxu0 0.0
          %1889 = vmatprep.subr.mxu0 0.0
          %1890 = vmatpush1.msra.mxu0 0.0
          %1891 = vmatprep.subr.mxu0 0.0
          %1892 = vmatpush1.msra.mxu0 0.0
          %1893 = vmatprep.subr.mxu0 0.0
          %1894 = vmatpush1.msra.mxu0 0.0
          %1895 = vmatprep.subr.mxu0 0.0
          %1896 = vmatpush1.msra.mxu0 0.0
          %1897 = vmatprep.subr.mxu0 0.0
          %1898 = vmatpush1.msra.mxu0 0.0
          %1899 = vmatprep.subr.mxu0 0.0
          %1900 = vmatpush1.msra.mxu0 0.0
          %1901 = vmatprep.subr.mxu0 0.0
          %1902 = vmatpush1.msra.mxu0 0.0
          %1903 = vmatprep.subr.mxu0 0.0
          %1904 = vmatpush1.msra.mxu0 %v1776
          %1905 = vmatprep.subr.mxu0 0.0
          %1906 = vmatpush2.msra.mxu0 0.0
          %1907 = vmatprep.subr.mxu0 0.0
          %1908 = vmatpush2.msra.mxu0 0.0
          %1909 = vmatprep.subr.mxu0 0.0
          %1910 = vmatpush2.msra.mxu0 0.0
          %1911 = vmatprep.subr.mxu0 0.0
          %1912 = vmatpush2.msra.mxu0 0.0
          %1913 = vmatprep.subr.mxu0 0.0
          %1914 = vmatpush2.msra.mxu0 0.0
          %1915 = vmatprep.subr.mxu0 0.0
          %1916 = vmatpush2.msra.mxu0 0.0
          %1917 = vmatprep.subr.mxu0 0.0
          %1918 = vmatpush2.msra.mxu0 0.0
          %1919 = vmatprep.subr.mxu0 0.0
          %1920 = vmatpush2.msra.mxu0 0.0
          %1921 = vmatprep.subr.mxu0 0.0
          %1922 = vmatpush2.msra.mxu0 0.0
          %1923 = vmatprep.subr.mxu0 0.0
          %1924 = vmatpush2.msra.mxu0 0.0
          %1925 = vmatprep.subr.mxu0 0.0
          %1926 = vmatpush2.msra.mxu0 0.0
          %1927 = vmatprep.subr.mxu0 0.0
          %1928 = vmatpush2.msra.mxu0 0.0
          %1929 = vmatprep.subr.mxu0 0.0
          %1930 = vmatpush2.msra.mxu0 0.0
          %1931 = vmatprep.subr.mxu0 0.0
          %1932 = vmatpush2.msra.mxu0 0.0
          %1933 = vmatprep.subr.mxu0 0.0
          %1934 = vmatpush2.msra.mxu0 0.0
          %1935 = vmatprep.subr.mxu0 0.0
          %1936 = vmatpush2.msra.mxu0 0.0
          %1937 = vmatprep.mubr.f32.mxu0 0.0
          %1938 = vmatmul.mubr.f32.gmra.mxu0 %v1871
          %v1939 = vpop.f32.mrf.mxu0
          %v1940 = vadd.f32 0.0, %v1939
          %v1941 = vpop.f32.mrf.mxu0
          %1942 = vdwg.mxu0
          %v1943 = vadd.f32 %v1869, %v1940
        $region98: #{tpu_custom_call.1} parent=47 // loop_footer
          %s1764 = sadd.s32 %s1762, 1
        $region99: #{tpu_custom_call.1} parent=47 // loop_footer_branch
          %1761 = sbr.rel target = $region95
        $region100: #{tpu_custom_call.1} parent=47 // loop_exit
          _
        %s1944 = smul.u32 %s1760, 8
        %s1945 = sadd.s32 %s588, %s1944
        %s1946 = scalar_lea.vmem [#allocation2], %s1945
        %v1947 = vld [vmem:[%s1946] sm:$0xff]
        %s1948 = scalar_lea.vmem [#allocation3], %s1945
        %v1949 = vld [vmem:[%s1948] sm:$0xff]
        %1950 = vrot.lane.b32.xlu0 %v675, 104
        %v1951 = vpop.permute.xlu0 %1950
        %v1952 = vsel %vm870, %v1951, 0
        %v1955 = vsel %vm870, %v1947, 0
        %1957 = vmatprep.subr.mxu0 0.0
        %1958 = vmatpush1.xpose.msra.mxu0 0.0
        %1959 = vmatprep.subr.mxu0 0.0
        %1960 = vmatpush1.xpose.msra.mxu0 0.0
        %1961 = vmatprep.subr.mxu0 0.0
        %1962 = vmatpush1.xpose.msra.mxu0 0.0
        %1963 = vmatprep.subr.mxu0 0.0
        %1964 = vmatpush1.xpose.msra.mxu0 0.0
        %1965 = vmatprep.subr.mxu0 0.0
        %1966 = vmatpush1.xpose.msra.mxu0 0.0
        %1967 = vmatprep.subr.mxu0 0.0
        %1968 = vmatpush1.xpose.msra.mxu0 0.0
        %1969 = vmatprep.subr.mxu0 0.0
        %1970 = vmatpush1.xpose.msra.mxu0 0.0
        %1971 = vmatprep.subr.mxu0 0.0
        %1972 = vmatpush1.xpose.msra.mxu0 0.0
        %1973 = vmatprep.subr.mxu0 0.0
        %1974 = vmatpush1.xpose.msra.mxu0 0.0
        %1975 = vmatprep.subr.mxu0 0.0
        %1976 = vmatpush1.xpose.msra.mxu0 0.0
        %1977 = vmatprep.subr.mxu0 0.0
        %1978 = vmatpush1.xpose.msra.mxu0 0.0
        %1979 = vmatprep.subr.mxu0 0.0
        %1980 = vmatpush1.xpose.msra.mxu0 0.0
        %1981 = vmatprep.subr.mxu0 0.0
        %1982 = vmatpush1.xpose.msra.mxu0 0.0
        %1983 = vmatprep.subr.mxu0 0.0
        %1984 = vmatpush1.xpose.msra.mxu0 0.0
        %1985 = vmatprep.subr.mxu0 0.0
        %1986 = vmatpush1.xpose.msra.mxu0 0.0
        %1987 = vmatprep.subr.mxu0 0.0
        %1988 = vmatpush1.xpose.msra.mxu0 %v1955
        %1989 = vmatprep.subr.mxu0 0.0
        %1990 = vmatpush2.xpose.msra.mxu0 0.0
        %1991 = vmatprep.subr.mxu0 0.0
        %1992 = vmatpush2.xpose.msra.mxu0 0.0
        %1993 = vmatprep.subr.mxu0 0.0
        %1994 = vmatpush2.xpose.msra.mxu0 0.0
        %1995 = vmatprep.subr.mxu0 0.0
        %1996 = vmatpush2.xpose.msra.mxu0 0.0
        %1997 = vmatprep.subr.mxu0 0.0
        %1998 = vmatpush2.xpose.msra.mxu0 0.0
        %1999 = vmatprep.subr.mxu0 0.0
        %2000 = vmatpush2.xpose.msra.mxu0 0.0
        %2001 = vmatprep.subr.mxu0 0.0
        %2002 = vmatpush2.xpose.msra.mxu0 0.0
        %2003 = vmatprep.subr.mxu0 0.0
        %2004 = vmatpush2.xpose.msra.mxu0 0.0
        %2005 = vmatprep.subr.mxu0 0.0
        %2006 = vmatpush2.xpose.msra.mxu0 0.0
        %2007 = vmatprep.subr.mxu0 0.0
        %2008 = vmatpush2.xpose.msra.mxu0 0.0
        %2009 = vmatprep.subr.mxu0 0.0
        %2010 = vmatpush2.xpose.msra.mxu0 0.0
        %2011 = vmatprep.subr.mxu0 0.0
        %2012 = vmatpush2.xpose.msra.mxu0 0.0
        %2013 = vmatprep.subr.mxu0 0.0
        %2014 = vmatpush2.xpose.msra.mxu0 0.0
        %2015 = vmatprep.subr.mxu0 0.0
        %2016 = vmatpush2.xpose.msra.mxu0 0.0
        %2017 = vmatprep.subr.mxu0 0.0
        %2018 = vmatpush2.xpose.msra.mxu0 0.0
        %2019 = vmatprep.subr.mxu0 0.0
        %2020 = vmatpush2.xpose.msra.mxu0 0.0
        %2021 = vmatprep.mubr.f32.mxu0 0.0
        %2022 = vmatmul.mubr.f32.gmra.mxu0 %v1952
        %v2023 = vpop.f32.mrf.mxu0
        %v2024 = vadd.f32 0.0, %v2023
        %v2025 = vpop.f32.mrf.mxu0
        %2026 = vdwg.mxu0
        %v2027 = vsel %vm680, %v2024, -10000.0
        %v2028 = vsel %vm870, %v2027, -inf
        %2029 = vmax.xlane.f32.xlu0 %v2028
        %v2030 = vpop.xlane.xlu0 %2029
        %v2031 = vmax.f32 %v1767, %v2030
        %v2032 = vsub.f32 %v1767, %v2031
        %v2033 = vmul.f32 %v2032, 1.442695
        %v2034 = vpow.pop %v2033
        %v2035 = vsub.f32 %v2027, %v2031
        %v2036 = vmul.f32 %v2035, 1.442695
        %v2037 = vpow.pop %v2036
        %v2038 = vmul.f32 %v2034, %v1768
        %v2039 = vsel %vm870, %v2037, 0.0
        %2040 = vadd.xlane.f32.xlu0 %v2039
        %v2041 = vpop.xlane.xlu0 %2040
        %v2042 = vadd.f32 %v2038, %v2041
        %v2043 = vmul.f32 %v2034, %v1769
        %v2045 = vsel %vm870, %v2037, 0
        %2047 = vmatprep.subr.mxu0 0.0
        %2048 = vmatpush1.msra.mxu0 0.0
        %2049 = vmatprep.subr.mxu0 0.0
        %2050 = vmatpush1.msra.mxu0 0.0
        %2051 = vmatprep.subr.mxu0 0.0
        %2052 = vmatpush1.msra.mxu0 0.0
        %2053 = vmatprep.subr.mxu0 0.0
        %2054 = vmatpush1.msra.mxu0 0.0
        %2055 = vmatprep.subr.mxu0 0.0
        %2056 = vmatpush1.msra.mxu0 0.0
        %2057 = vmatprep.subr.mxu0 0.0
        %2058 = vmatpush1.msra.mxu0 0.0
        %2059 = vmatprep.subr.mxu0 0.0
        %2060 = vmatpush1.msra.mxu0 0.0
        %2061 = vmatprep.subr.mxu0 0.0
        %2062 = vmatpush1.msra.mxu0 0.0
        %2063 = vmatprep.subr.mxu0 0.0
        %2064 = vmatpush1.msra.mxu0 0.0
        %2065 = vmatprep.subr.mxu0 0.0
        %2066 = vmatpush1.msra.mxu0 0.0
        %2067 = vmatprep.subr.mxu0 0.0
        %2068 = vmatpush1.msra.mxu0 0.0
        %2069 = vmatprep.subr.mxu0 0.0
        %2070 = vmatpush1.msra.mxu0 0.0
        %2071 = vmatprep.subr.mxu0 0.0
        %2072 = vmatpush1.msra.mxu0 0.0
        %2073 = vmatprep.subr.mxu0 0.0
        %2074 = vmatpush1.msra.mxu0 0.0
        %2075 = vmatprep.subr.mxu0 0.0
        %2076 = vmatpush1.msra.mxu0 0.0
        %2077 = vmatprep.subr.mxu0 0.0
        %2078 = vmatpush1.msra.mxu0 %v1949
        %2079 = vmatprep.subr.mxu0 0.0
        %2080 = vmatpush2.msra.mxu0 0.0
        %2081 = vmatprep.subr.mxu0 0.0
        %2082 = vmatpush2.msra.mxu0 0.0
        %2083 = vmatprep.subr.mxu0 0.0
        %2084 = vmatpush2.msra.mxu0 0.0
        %2085 = vmatprep.subr.mxu0 0.0
        %2086 = vmatpush2.msra.mxu0 0.0
        %2087 = vmatprep.subr.mxu0 0.0
        %2088 = vmatpush2.msra.mxu0 0.0
        %2089 = vmatprep.subr.mxu0 0.0
        %2090 = vmatpush2.msra.mxu0 0.0
        %2091 = vmatprep.subr.mxu0 0.0
        %2092 = vmatpush2.msra.mxu0 0.0
        %2093 = vmatprep.subr.mxu0 0.0
        %2094 = vmatpush2.msra.mxu0 0.0
        %2095 = vmatprep.subr.mxu0 0.0
        %2096 = vmatpush2.msra.mxu0 0.0
        %2097 = vmatprep.subr.mxu0 0.0
        %2098 = vmatpush2.msra.mxu0 0.0
        %2099 = vmatprep.subr.mxu0 0.0
        %2100 = vmatpush2.msra.mxu0 0.0
        %2101 = vmatprep.subr.mxu0 0.0
        %2102 = vmatpush2.msra.mxu0 0.0
        %2103 = vmatprep.subr.mxu0 0.0
        %2104 = vmatpush2.msra.mxu0 0.0
        %2105 = vmatprep.subr.mxu0 0.0
        %2106 = vmatpush2.msra.mxu0 0.0
        %2107 = vmatprep.subr.mxu0 0.0
        %2108 = vmatpush2.msra.mxu0 0.0
        %2109 = vmatprep.subr.mxu0 0.0
        %2110 = vmatpush2.msra.mxu0 0.0
        %2111 = vmatprep.mubr.f32.mxu0 0.0
        %2112 = vmatmul.mubr.f32.gmra.mxu0 %v2045
        %v2113 = vpop.f32.mrf.mxu0
        %v2114 = vadd.f32 0.0, %v2113
        %v2115 = vpop.f32.mrf.mxu0
        %2116 = vdwg.mxu0
        %v2117 = vadd.f32 %v2043, %v2114
        %v2118 = vrcp.pop %v2042
        %v2119 = vmul.f32 %v2117, %v2118
        %2121 = vrot.lane.b32.xlu0 %v1399, 8
        %v2122 = vpop.permute.xlu0 %2121
        %2125 = vrot.lane.b32.xlu0 %v1759, 16
        %v2126 = vpop.permute.xlu0 %2125
        %2129 = vrot.lane.b32.xlu0 %v2119, 24
        %v2130 = vpop.permute.xlu0 %2129
        %v2132 = vsel %vm870, %v1039, %v2122
        %vm2133 = vcmask 130048
        %v2134 = vsel %vm2133, %v2132, %v2126
        %vm2135 = vcmask 195584
        %v2136 = vsel %vm2135, %v2134, %v2130
        %p2137 = scmp.eq.s32.totalorder %s33, 0
        // Predicated region
        $region101: #{tpu_custom_call.1} parent=47 // pred_check
          %p2138 = pneg %p2137
        $region102: #{tpu_custom_call.1} parent=47 // pred_check_branch
          %2140 = sbr.rel (%p2138) target = $region104
        $region103: #{tpu_custom_call.1} parent=47 // pred_region
          %2141 = vst.msk [vmem:[#allocation4] sm:$0xff] %vm601, 0.0
        $region104: #{tpu_custom_call.1} parent=47 // pred_fallthru
          _
        %v2142 = vld [vmem:[#allocation4] sm:$0xff]
        %s2143 = scalar_lea.vmem [#allocation13], %s591
        %v2144 = vld [vmem:[%s2143] sm:$0xff]
        %v2145 = vld [vmem:[%s2143 + $0x8] sm:$0xff]
        %v2146 = vld [vmem:[%s2143 + $0x10] sm:$0xff]
        %v2147 = vld [vmem:[%s2143 + $0x18] sm:$0xff]
        %v2149 = vsel %vm601, %v2136, 0
        %2151 = vmatprep.subr.mxu0 0.0
        %2152 = vmatpush1.msra.mxu0 0.0
        %2153 = vmatprep.subr.mxu0 0.0
        %2154 = vmatpush1.msra.mxu0 0.0
        %2155 = vmatprep.subr.mxu0 0.0
        %2156 = vmatpush1.msra.mxu0 0.0
        %2157 = vmatprep.subr.mxu0 0.0
        %2158 = vmatpush1.msra.mxu0 0.0
        %2159 = vmatprep.subr.mxu0 0.0
        %2160 = vmatpush1.msra.mxu0 0.0
        %2161 = vmatprep.subr.mxu0 0.0
        %2162 = vmatpush1.msra.mxu0 0.0
        %2163 = vmatprep.subr.mxu0 0.0
        %2164 = vmatpush1.msra.mxu0 0.0
        %2165 = vmatprep.subr.mxu0 0.0
        %2166 = vmatpush1.msra.mxu0 0.0
        %2167 = vmatprep.subr.mxu0 0.0
        %2168 = vmatpush1.msra.mxu0 0.0
        %2169 = vmatprep.subr.mxu0 0.0
        %2170 = vmatpush1.msra.mxu0 0.0
        %2171 = vmatprep.subr.mxu0 0.0
        %2172 = vmatpush1.msra.mxu0 0.0
        %2173 = vmatprep.subr.mxu0 0.0
        %2174 = vmatpush1.msra.mxu0 0.0
        %2175 = vmatprep.subr.mxu0 0.0
        %2176 = vmatpush1.msra.mxu0 %v2147
        %2177 = vmatprep.subr.mxu0 0.0
        %2178 = vmatpush1.msra.mxu0 %v2146
        %2179 = vmatprep.subr.mxu0 0.0
        %2180 = vmatpush1.msra.mxu0 %v2145
        %2181 = vmatprep.subr.mxu0 0.0
        %2182 = vmatpush1.msra.mxu0 %v2144
        %2183 = vmatprep.subr.mxu0 0.0
        %2184 = vmatpush2.msra.mxu0 0.0
        %2185 = vmatprep.subr.mxu0 0.0
        %2186 = vmatpush2.msra.mxu0 0.0
        %2187 = vmatprep.subr.mxu0 0.0
        %2188 = vmatpush2.msra.mxu0 0.0
        %2189 = vmatprep.subr.mxu0 0.0
        %2190 = vmatpush2.msra.mxu0 0.0
        %2191 = vmatprep.subr.mxu0 0.0
        %2192 = vmatpush2.msra.mxu0 0.0
        %2193 = vmatprep.subr.mxu0 0.0
        %2194 = vmatpush2.msra.mxu0 0.0
        %2195 = vmatprep.subr.mxu0 0.0
        %2196 = vmatpush2.msra.mxu0 0.0
        %2197 = vmatprep.subr.mxu0 0.0
        %2198 = vmatpush2.msra.mxu0 0.0
        %2199 = vmatprep.subr.mxu0 0.0
        %2200 = vmatpush2.msra.mxu0 0.0
        %2201 = vmatprep.subr.mxu0 0.0
        %2202 = vmatpush2.msra.mxu0 0.0
        %2203 = vmatprep.subr.mxu0 0.0
        %2204 = vmatpush2.msra.mxu0 0.0
        %2205 = vmatprep.subr.mxu0 0.0
        %2206 = vmatpush2.msra.mxu0 0.0
        %2207 = vmatprep.subr.mxu0 0.0
        %2208 = vmatpush2.msra.mxu0 0.0
        %2209 = vmatprep.subr.mxu0 0.0
        %2210 = vmatpush2.msra.mxu0 0.0
        %2211 = vmatprep.subr.mxu0 0.0
        %2212 = vmatpush2.msra.mxu0 0.0
        %2213 = vmatprep.subr.mxu0 0.0
        %2214 = vmatpush2.msra.mxu0 0.0
        %2215 = vmatprep.mubr.f32.mxu0 0.0
        %2216 = vmatmul.mubr.f32.gmra.mxu0 %v2149
        %v2217 = vpop.f32.mrf.mxu0
        %v2218 = vadd.f32 0.0, %v2217
        %v2219 = vpop.f32.mrf.mxu0
        %2220 = vdwg.mxu0
        %v2221 = vadd.f32 %v2142, %v2218
        %2222 = vst.msk [vmem:[#allocation4] sm:$0xff] %vm601, %v2221
        // Predicated region
        $region105: #{tpu_custom_call.1} parent=47 // pred_check
          %p2223 = pneg %p2137
        $region106: #{tpu_custom_call.1} parent=47 // pred_check_branch
          %2225 = sbr.rel (%p2223) target = $region108
        $region107: #{tpu_custom_call.1} parent=47 // pred_region
          %v2226 = vld [vmem:[#allocation4] sm:$0xff]
          %v2227 = vld [vmem:[%s6] sm:$0x1]
          %v2229 = vlaneseq
          %v2230 = vshrl.u32 %v2229, 7
          %v2231 = vsub.s32 0, %v2230
          %v2232 = vrot.slane %v2227, %v2231
          %v2234 = vadd.f32 %v2226, %v2232
          %2235 = vst.msk [vmem:[%s372] sm:$0xff] %vm601, %v2234
        $region108: #{tpu_custom_call.1} parent=47 // pred_fallthru
          _
        %s2236 = sand.u32 %s207, 1
        %s2237 = scalar_lea.sflag [#allocation7], %s2236
        %s2238 = sand.u32 %s207, 1
        %s2239 = smul.addr %s2238, 8
        %s2240 = scalar_lea.vmem [#allocation14], %s2239
        // Predicated region
        $region109: #{tpu_custom_call.1} parent=47 // pred_check
          %p2241 = pneg %p217
        $region110: #{tpu_custom_call.1} parent=47 // pred_check_branch
          %2243 = sbr.rel (%p2241) target = $region112
        $region111: #{tpu_custom_call.1} parent=47 // pred_region
          %s2245 = ssub.s32 128, 128
          %2246 = vsyncadd %s2237, %s2245
          %s2247 = sadd.s32 %s32, %s31
          %s2248 = smul.addr %s2247, 128
          %s2249 = scalar_lea.hbm %s7, %s2248
          %s2251 = sshll.u32 %s2240, 4
          %s2252 = int_to_ptr.vmem [resolvable:$true] %s2251
          %2254 = dma.vmem_to_hbm [thread:$0]  %s2252, 128, %s2249, %s2237
        $region112: #{tpu_custom_call.1} parent=47 // pred_fallthru
          _
      $region48: #{tpu_custom_call.1} parent=5 // pred_fallthru
        _
      %p2255 = scmp.le.s32.totalorder 2, %s21
      // Predicated region
      $region113: #{tpu_custom_call.1} parent=5 // pred_check
        %p2256 = pneg %p2255
      $region114: #{tpu_custom_call.1} parent=5 // pred_check_branch
        %2258 = sbr.rel (%p2256) target = $region116
      $region115: #{tpu_custom_call.1} parent=5 // pred_region
        %s2259 = ssub.s32 %s21, 2
        // Predicated region
        $region117: #{tpu_custom_call.1} parent=115 // pred_check
          %p2260 = pneg %p223
        $region118: #{tpu_custom_call.1} parent=115 // pred_check_branch
          %2262 = sbr.rel (%p2260) target = $region120
        $region119: #{tpu_custom_call.1} parent=115 // pred_region
          %s2263 = sand.u32 %s208, 1
          %s2264 = scalar_lea.sflag [#allocation7], %s2263
          %s2265 = sand.u32 %s208, 1
          %s2266 = smul.addr %s2265, 8
          %s2267 = scalar_lea.vmem [#allocation14], %s2266
          %2268 = dma.done %s2264, 128
        $region120: #{tpu_custom_call.1} parent=115 // pred_fallthru
          _
      $region116: #{tpu_custom_call.1} parent=5 // pred_fallthru
        _
    $region6: #{tpu_custom_call.1} parent=1 // loop_footer
      %s25 = sadd.s32 1, %s21
    $region7: #{tpu_custom_call.1} parent=1 // loop_footer_branch
      %20 = sbr.rel target = $region3
    $region8: #{tpu_custom_call.1} parent=1 // loop_exit
      _
    %2269 = vsyncpa [#allocation6], 1
    %s2270 = scalar_lea.sflag [#allocation6], 1
    %2271 = vsyncpa %s2270, 1
    %2272 = vsyncpa [#allocation9], 1
    %2273 = vsyncpa [#allocation12], 1
    %2274 = vsyncpa [#allocation7], 1
    %s2275 = scalar_lea.sflag [#allocation7], 1
    %2276 = vsyncpa %s2275, 1

</llo_original>
